<compile_context>
chip_gen: v7x
topology: tpu7x:2x2x1
jax: 0.10.0
libtpu: 0.0.40
codegen_flags: <defaults>
</compile_context>

<pallas_src>
import functools

import jax
import jax.numpy as jnp
import numpy as np
from jax.experimental import pallas as pl
from jax.experimental.pallas import tpu as pltpu

LAST_N = 10  # module slices out[:, -10:, :]


def _round_up(x, m):
    return ((x + m - 1) // m) * m


def _sigmoid_via_tanh(x):
    # sigmoid(x) == 0.5 * tanh(0.5 * x) + 0.5 : one EUP push + cheap VPU ops.
    return 0.5 * jnp.tanh(0.5 * x) + 0.5


def _lstm_fc_kernel(x_ref, h0_ref, c0_ref, w_ih_t_ref, w_hh_t_ref, b_ref,
                    w_fc_hbm_ref, b_fc_hbm_ref,
                    out_ref, hn_ref, cn_ref,
                    gih_ref, hlast_ref, w_fc_vmem, b_fc_vmem, fc_sem):
    # x_ref:      (T*BP, DP)  bf16, time-major, batch padded to BP
    # h0/c0:      (BP, HP)    f32
    # w_ih_t:     (DP, 4*HP)  bf16, each gate in its own 128-lane slab
    # w_hh_t:     (HP, 4*HP)  bf16
    # b:          (1, 4*HP)   f32 (b_ih + b_hh folded)
    # w_fc_hbm:   (HP, OP)    bf16 in HBM (pl.ANY);  b_fc_hbm: (1, OP) f32 in HBM
    # out_ref:    (LAST_N*BP, OP) f32;  hn/cn: (BP, HP) f32
    # gih_ref:    (T*BP, 4*HP) f32 scratch — hoisted input projection
    # hlast_ref:  (LAST_N*BP, HP) f32 scratch — last LAST_N hidden states
    # w_fc_vmem / b_fc_vmem: VMEM landing buffers for the overlapped FC-weight DMA
    BP, HP = hn_ref.shape
    T = x_ref.shape[0] // BP
    last_n = hlast_ref.shape[0] // BP

    # (3) Kick off the FC-weight DMA now; it is not needed until after the
    #     16-step recurrence, so its latency is fully hidden.
    w_fc_cp = pltpu.make_async_copy(w_fc_hbm_ref, w_fc_vmem, fc_sem.at[0])
    b_fc_cp = pltpu.make_async_copy(b_fc_hbm_ref, b_fc_vmem, fc_sem.at[1])
    w_fc_cp.start()
    b_fc_cp.start()

    # (4) Hoisted input projection for ALL timesteps: one bf16 MXU matmul with
    #     f32 accumulation, bias folded in once (never re-broadcast per step).
    gih_ref[...] = (
        jnp.dot(x_ref[...], w_ih_t_ref[...], preferred_element_type=jnp.float32)
        + b_ref[...])

    h = h0_ref[...]          # f32 recurrent state
    c = c0_ref[...]

    # Fully-unrolled recurrence (T small & static): the scheduler sees every
    # iteration and overlaps the h @ W_hh MXU pushes with the previous step's
    # EUP/VPU work.  Only the unavoidable recurrence stays in the loop.
    for t in range(T):
        # (1) bf16 operands, f32 accumulation on the serial critical path.
        gates = gih_ref[pl.ds(t * BP, BP), :] + jnp.dot(
            h.astype(jnp.bfloat16), w_hh_t_ref[...],
            preferred_element_type=jnp.float32)                 # (BP, 4*HP) f32

        # 128-lane-aligned gate slabs: whole-vreg slices, no XLU relayouts.
        i_g = _sigmoid_via_tanh(gates[:, 0 * HP:1 * HP])
        f_g = _sigmoid_via_tanh(gates[:, 1 * HP:2 * HP])
        g_g = jnp.tanh(gates[:, 2 * HP:3 * HP])
        o_g = _sigmoid_via_tanh(gates[:, 3 * HP:4 * HP])

        c = f_g * c + i_g * g_g
        h = o_g * jnp.tanh(c)

        # Stash the hidden states needed by fc(out[:, -10:, :]); full (8,128)
        # aligned f32 vreg stores.
        if t >= T - last_n:
            hlast_ref[pl.ds((t - (T - last_n)) * BP, BP), :] = h

    hn_ref[...] = h
    cn_ref[...] = c

    # (3) Wait for the FC weights only now, then (2)-style single lane-dense
    #     bf16 matmul + one unmasked (OP = 128) store for all LAST_N steps.
    w_fc_cp.wait()
    b_fc_cp.wait()
    out_ref[...] = (
        jnp.dot(hlast_ref[...].astype(jnp.bfloat16), w_fc_vmem[...],
                preferred_element_type=jnp.float32)
        + b_fc_vmem[...])


def pack_params(raw, input_size, hidden_size, output_size):
    """Repack PyTorch-layout weights into 128-lane-aligned, pre-transposed bf16 slabs."""
    D, H, O = input_size, hidden_size, output_size
    DP = _round_up(D, 8)
    HP = _round_up(H, 128)
    OP = _round_up(O, 128)

    w_ih = np.asarray(raw["w_ih"], np.float32)          # (4H, D)  torch weight_ih_l0
    w_hh = np.asarray(raw["w_hh"], np.float32)          # (4H, H)  torch weight_hh_l0
    b = np.asarray(raw["b_ih"], np.float32) + np.asarray(raw["b_hh"], np.float32)
    w_fc = np.asarray(raw["w_fc"], np.float32)          # (O, H)   torch fc.weight
    b_fc = np.asarray(raw["b_fc"], np.float32)          # (O,)

    w_ih_tp = np.zeros((DP, 4 * HP), np.float32)
    w_hh_tp = np.zeros((HP, 4 * HP), np.float32)
    b_p = np.zeros((1, 4 * HP), np.float32)
    for k in range(4):  # PyTorch gate order: i, f, g, o
        w_ih_tp[:D, k * HP:k * HP + H] = w_ih[k * H:(k + 1) * H, :].T
        w_hh_tp[:H, k * HP:k * HP + H] = w_hh[k * H:(k + 1) * H, :].T
        b_p[0, k * HP:k * HP + H] = b[k * H:(k + 1) * H]

    w_fc_tp = np.zeros((HP, OP), np.float32)
    w_fc_tp[:H, :O] = w_fc.T
    b_fc_p = np.zeros((1, OP), np.float32)
    b_fc_p[0, :O] = b_fc

    return {
        "w_ih_tp": jnp.asarray(w_ih_tp, jnp.bfloat16),   # (DP, 4*HP) bf16 MXU operand
        "w_hh_tp": jnp.asarray(w_hh_tp, jnp.bfloat16),   # (HP, 4*HP) bf16 MXU operand
        "b_p": jnp.asarray(b_p, jnp.float32),            # (1, 4*HP)  f32 (accumulated in f32)
        "w_fc_tp": jnp.asarray(w_fc_tp, jnp.bfloat16),   # (HP, OP)   bf16 MXU operand
        "b_fc_p": jnp.asarray(b_fc_p, jnp.float32),      # (1, OP)    f32
    }


@functools.partial(jax.jit, static_argnames=("hidden_size", "output_size"))
def lstm_model_forward(x, h_0, c_0, packed, *, hidden_size, output_size):
    """Pallas equivalent of LSTMModel.forward (eval mode).

    x:   (B, T, D) float32 (batch_first, like PyTorch)
    h_0: (1, B, H), c_0: (1, B, H)
    returns: out (B, LAST_N, O), h_n (1, B, H), c_n (1, B, H)
    """
    B, T, D = x.shape
    H, O = hidden_size, output_size
    DP = packed["w_ih_tp"].shape[0]
    HP = packed["w_hh_tp"].shape[0]
    OP = packed["w_fc_tp"].shape[1]
    BP = _round_up(B, 8)
    assert T >= LAST_N

    # Time-major, batch padded to a full sublane tile, flattened, cast to bf16
    # (MXU operand; accumulation stays f32 inside the kernel).
    x_t = jnp.transpose(x, (1, 0, 2))                              # (T, B, D)
    x_t = jnp.pad(x_t, ((0, 0), (0, BP - B), (0, DP - D)))
    x_flat = x_t.reshape(T * BP, DP).astype(jnp.bfloat16)

    h0p = jnp.zeros((BP, HP), jnp.float32).at[:B, :H].set(h_0[0])
    c0p = jnp.zeros((BP, HP), jnp.float32).at[:B, :H].set(c_0[0])

    vmem = pl.BlockSpec(memory_space=pltpu.MemorySpace.VMEM)
    hbm = pl.BlockSpec(memory_space=pl.ANY)   # FC weights: DMA'd manually, overlapped

    out_p, hn_p, cn_p = pl.pallas_call(
        _lstm_fc_kernel,
        out_shape=(
            jax.ShapeDtypeStruct((LAST_N * BP, OP), jnp.float32),
            jax.ShapeDtypeStruct((BP, HP), jnp.float32),
            jax.ShapeDtypeStruct((BP, HP), jnp.float32),
        ),
        in_specs=[vmem, vmem, vmem, vmem, vmem, vmem, hbm, hbm],
        out_specs=(vmem, vmem, vmem),
        scratch_shapes=[
            pltpu.VMEM((T * BP, 4 * HP), jnp.float32),     # hoisted x @ W_ih + b
            pltpu.VMEM((LAST_N * BP, HP), jnp.float32),    # last LAST_N hidden states
            pltpu.VMEM((HP, OP), jnp.bfloat16),            # FC weight landing buffer
            pltpu.VMEM((1, OP), jnp.float32),              # FC bias landing buffer
            pltpu.SemaphoreType.DMA((2,)),                 # FC weight/bias DMA sems
        ],
    )(x_flat, h0p, c0p,
      packed["w_ih_tp"], packed["w_hh_tp"], packed["b_p"],
      packed["w_fc_tp"], packed["b_fc_p"])

    # Lane-dense slab -> (B, LAST_N, O); un-pad batch/lanes in the wrapper.
    out = out_p.reshape(LAST_N, BP, OP)[:, :B, :O].transpose(1, 0, 2)
    h_n = hn_p[:B, :H][None, ...]
    c_n = cn_p[:B, :H][None, ...]
    return out, h_n, c_n


def _reference_forward(x, h_0, c_0, raw):
    """Pure-JAX f32 reference (same math, unpadded PyTorch layout)."""
    B, T, D = x.shape
    H = raw["w_hh"].shape[1]
    w_ih_t = raw["w_ih"].T
    w_hh_t = raw["w_hh"].T
    b = (raw["b_ih"] + raw["b_hh"])[None, :]
    h, c = h_0[0], c_0[0]
    hs = []
    for t in range(T):
        gates = x[:, t, :] @ w_ih_t + h @ w_hh_t + b
        i_g = jax.nn.sigmoid(gates[:, 0 * H:1 * H])
        f_g = jax.nn.sigmoid(gates[:, 1 * H:2 * H])
        g_g = jnp.tanh(gates[:, 2 * H:3 * H])
        o_g = jax.nn.sigmoid(gates[:, 3 * H:4 * H])
        c = f_g * c + i_g * g_g
        h = o_g * jnp.tanh(c)
        hs.append(h)
    out_seq = jnp.stack(hs, axis=1)                                # (B, T, H)
    out = out_seq[:, -LAST_N:, :] @ raw["w_fc"].T + raw["b_fc"][None, :]
    return out, h[None], c[None]


def make_params(key, input_size, hidden_size, output_size):
    """Deterministic init matching PyTorch shapes (uniform(-1/sqrt(H), 1/sqrt(H)))."""
    ks = jax.random.split(key, 6)
    bound = 1.0 / np.sqrt(hidden_size)
    u = lambda k, shape: jax.random.uniform(k, shape, jnp.float32, -bound, bound)
    return {
        "w_ih": u(ks[0], (4 * hidden_size, input_size)),     # torch weight_ih_l0
        "w_hh": u(ks[1], (4 * hidden_size, hidden_size)),    # torch weight_hh_l0
        "b_ih": u(ks[2], (4 * hidden_size,)),
        "b_hh": u(ks[3], (4 * hidden_size,)),
        "w_fc": u(ks[4], (output_size, hidden_size)),         # torch fc.weight
        "b_fc": u(ks[5], (output_size,)),
    }


if __name__ == "__main__":
    input_size = 6        # len(cols)
    hidden_size = 50
    output_size = 6       # fc maps hidden -> len(cols)
    B, T = 2, 16

    key = jax.random.PRNGKey(0)
    k_x, k_h, k_c, k_p = jax.random.split(key, 4)

    x = jax.random.normal(k_x, (B, T, input_size), jnp.float32)
    h_0 = jax.random.normal(k_h, (1, B, hidden_size), jnp.float32)
    c_0 = jax.random.normal(k_c, (1, B, hidden_size), jnp.float32)

    raw_params = make_params(k_p, input_size, hidden_size, output_size)
    packed = pack_params(raw_params, input_size, hidden_size, output_size)

    out, h_n, c_n = jax.block_until_ready(
        lstm_model_forward(x, h_0, c_0, packed,
                           hidden_size=hidden_size, output_size=output_size))

    assert out.shape == (B, LAST_N, output_size)
    assert h_n.shape == (1, B, hidden_size)
    assert c_n.shape == (1, B, hidden_size)

    # bf16 MXU operands (f32 accumulation) vs. the pure-f32 reference: tolerance
    # widened accordingly (gate nonlinearities keep the drift small and bounded).
    ref_out, ref_hn, ref_cn = _reference_forward(x, h_0, c_0, raw_params)
    np.testing.assert_allclose(np.asarray(out), np.asarray(ref_out),
                               rtol=2e-2, atol=2e-2)
    np.testing.assert_allclose(np.asarray(h_n), np.asarray(ref_hn),
                               rtol=2e-2, atol=2e-2)
    np.testing.assert_allclose(np.asarray(c_n), np.asarray(ref_cn),
                               rtol=2e-2, atol=2e-2)

    print("KERNEL_OK")
</pallas_src>

<mosaic_0001>
module attributes {stable_mosaic.version = 11 : i64} {
  func.func @_lstm_fc_kernel(%arg0: memref<128x8xbf16, #tpu.memory_space<vmem>>, %arg1: memref<8x128xf32, #tpu.memory_space<vmem>>, %arg2: memref<8x128xf32, #tpu.memory_space<vmem>>, %arg3: memref<8x512xbf16, #tpu.memory_space<vmem>>, %arg4: memref<128x512xbf16, #tpu.memory_space<vmem>>, %arg5: memref<1x512xf32, #tpu.memory_space<vmem>>, %arg6: memref<128x128xbf16, #tpu.memory_space<any>>, %arg7: memref<1x128xf32, #tpu.memory_space<any>>, %arg8: memref<80x128xf32, #tpu.memory_space<vmem>>, %arg9: memref<8x128xf32, #tpu.memory_space<vmem>>, %arg10: memref<8x128xf32, #tpu.memory_space<vmem>>, %arg11: memref<128x512xf32, #tpu.memory_space<vmem>>, %arg12: memref<80x128xf32, #tpu.memory_space<vmem>>, %arg13: memref<128x128xbf16, #tpu.memory_space<vmem>>, %arg14: memref<1x128xf32, #tpu.memory_space<vmem>>, %arg15: memref<2x!tpu.dma_semaphore, #tpu.memory_space<semaphore_mem>>) attributes {dimension_semantics = [], scalar_prefetch = 0 : i64, scratch_operands = 5 : i64, tpu.core_type = #tpu.core_type<tc>} {
    %c0_i32 = arith.constant 0 : i32
    %0 = tpu.memref_slice %arg15[%c0_i32] : memref<2x!tpu.dma_semaphore, #tpu.memory_space<semaphore_mem>> -> memref<1x!tpu.dma_semaphore, #tpu.memory_space<semaphore_mem>>
    %1 = tpu.memref_squeeze %0 : memref<1x!tpu.dma_semaphore, #tpu.memory_space<semaphore_mem>> -> memref<!tpu.dma_semaphore, #tpu.memory_space<semaphore_mem>>
    tpu.enqueue_dma source(%arg6 : memref<128x128xbf16, #tpu.memory_space<any>>) target(%arg13 : memref<128x128xbf16, #tpu.memory_space<vmem>>) target_semaphore(%1 : memref<!tpu.dma_semaphore, #tpu.memory_space<semaphore_mem>>)
    %c1_i32 = arith.constant 1 : i32
    %2 = tpu.memref_slice %arg15[%c1_i32] : memref<2x!tpu.dma_semaphore, #tpu.memory_space<semaphore_mem>> -> memref<1x!tpu.dma_semaphore, #tpu.memory_space<semaphore_mem>>
    %3 = tpu.memref_squeeze %2 : memref<1x!tpu.dma_semaphore, #tpu.memory_space<semaphore_mem>> -> memref<!tpu.dma_semaphore, #tpu.memory_space<semaphore_mem>>
    tpu.enqueue_dma source(%arg7 : memref<1x128xf32, #tpu.memory_space<any>>) target(%arg14 : memref<1x128xf32, #tpu.memory_space<vmem>>) target_semaphore(%3 : memref<!tpu.dma_semaphore, #tpu.memory_space<semaphore_mem>>)
    %c0 = arith.constant 0 : index
    %c0_0 = arith.constant 0 : index
    %4 = vector.load %arg0[%c0, %c0_0] : memref<128x8xbf16, #tpu.memory_space<vmem>>, vector<128x8xbf16>
    %c0_1 = arith.constant 0 : index
    %c0_2 = arith.constant 0 : index
    %5 = vector.load %arg3[%c0_1, %c0_2] : memref<8x512xbf16, #tpu.memory_space<vmem>>, vector<8x512xbf16>
    %cst = arith.constant dense<0.000000e+00> : vector<128x512xf32>
    %6 = tpu.matmul %4, %5, %cst {dimension_numbers = #tpu.dot_dimension_numbers<[1], [0], [0], [1], [0, 0, 1, 1], [], []>} : vector<128x8xbf16>, vector<8x512xbf16>, vector<128x512xf32> -> vector<128x512xf32>
    %c0_3 = arith.constant 0 : index
    %c0_4 = arith.constant 0 : index
    %7 = vector.load %arg5[%c0_3, %c0_4] : memref<1x512xf32, #tpu.memory_space<vmem>>, vector<1x512xf32>
    %8 = vector.broadcast %7 : vector<1x512xf32> to vector<128x512xf32>
    %9 = arith.addf %6, %8 : vector<128x512xf32>
    %c0_5 = arith.constant 0 : index
    %c0_6 = arith.constant 0 : index
    %10 = vector.load %arg11[%c0_5, %c0_6] : memref<128x512xf32, #tpu.memory_space<vmem>>, vector<128x512xf32>
    tpu.vector_store %arg11[%c0_5, %c0_6], %9 {strides = array<i32>} : memref<128x512xf32, #tpu.memory_space<vmem>>, vector<128x512xf32>,
    %c0_7 = arith.constant 0 : index
    %c0_8 = arith.constant 0 : index
    %11 = vector.load %arg1[%c0_7, %c0_8] : memref<8x128xf32, #tpu.memory_space<vmem>>, vector<8x128xf32>
    %c0_9 = arith.constant 0 : index
    %c0_10 = arith.constant 0 : index
    %12 = vector.load %arg2[%c0_9, %c0_10] : memref<8x128xf32, #tpu.memory_space<vmem>>, vector<8x128xf32>
    %c0_11 = arith.constant 0 : index
    %c0_12 = arith.constant 0 : index
    %13 = vector.load %arg11[%c0_11, %c0_12] : memref<128x512xf32, #tpu.memory_space<vmem>>, vector<8x512xf32>
    %14 = arith.truncf %11 : vector<8x128xf32> to vector<8x128xbf16>
    %c0_13 = arith.constant 0 : index
    %c0_14 = arith.constant 0 : index
    %15 = vector.load %arg4[%c0_13, %c0_14] : memref<128x512xbf16, #tpu.memory_space<vmem>>, vector<128x512xbf16>
    %cst_15 = arith.constant dense<0.000000e+00> : vector<8x512xf32>
    %16 = tpu.matmul %14, %15, %cst_15 {dimension_numbers = #tpu.dot_dimension_numbers<[1], [0], [0], [1], [0, 0, 1, 1], [], []>} : vector<8x128xbf16>, vector<128x512xbf16>, vector<8x512xf32> -> vector<8x512xf32>
    %17 = arith.addf %13, %16 : vector<8x512xf32>
    %18 = vector.extract_strided_slice %17 {offsets = [0, 0], sizes = [8, 128], strides = [1, 1]} : vector<8x512xf32> to vector<8x128xf32>
    %cst_16 = arith.constant 5.000000e-01 : f32
    %19 = vector.broadcast %cst_16 : f32 to vector<8x128xf32>
    %20 = arith.mulf %19, %18 : vector<8x128xf32>
    %21 = math.tanh %20 : vector<8x128xf32>
    %cst_17 = arith.constant 5.000000e-01 : f32
    %22 = vector.broadcast %cst_17 : f32 to vector<8x128xf32>
    %23 = arith.mulf %22, %21 : vector<8x128xf32>
    %cst_18 = arith.constant 5.000000e-01 : f32
    %24 = vector.broadcast %cst_18 : f32 to vector<8x128xf32>
    %25 = arith.addf %23, %24 : vector<8x128xf32>
    %26 = vector.extract_strided_slice %17 {offsets = [0, 128], sizes = [8, 128], strides = [1, 1]} : vector<8x512xf32> to vector<8x128xf32>
    %cst_19 = arith.constant 5.000000e-01 : f32
    %27 = vector.broadcast %cst_19 : f32 to vector<8x128xf32>
    %28 = arith.mulf %27, %26 : vector<8x128xf32>
    %29 = math.tanh %28 : vector<8x128xf32>
    %cst_20 = arith.constant 5.000000e-01 : f32
    %30 = vector.broadcast %cst_20 : f32 to vector<8x128xf32>
    %31 = arith.mulf %30, %29 : vector<8x128xf32>
    %cst_21 = arith.constant 5.000000e-01 : f32
    %32 = vector.broadcast %cst_21 : f32 to vector<8x128xf32>
    %33 = arith.addf %31, %32 : vector<8x128xf32>
    %34 = vector.extract_strided_slice %17 {offsets = [0, 256], sizes = [8, 128], strides = [1, 1]} : vector<8x512xf32> to vector<8x128xf32>
    %35 = math.tanh %34 : vector<8x128xf32>
    %36 = vector.extract_strided_slice %17 {offsets = [0, 384], sizes = [8, 128], strides = [1, 1]} : vector<8x512xf32> to vector<8x128xf32>
    %cst_22 = arith.constant 5.000000e-01 : f32
    %37 = vector.broadcast %cst_22 : f32 to vector<8x128xf32>
    %38 = arith.mulf %37, %36 : vector<8x128xf32>
    %39 = math.tanh %38 : vector<8x128xf32>
    %cst_23 = arith.constant 5.000000e-01 : f32
    %40 = vector.broadcast %cst_23 : f32 to vector<8x128xf32>
    %41 = arith.mulf %40, %39 : vector<8x128xf32>
    %cst_24 = arith.constant 5.000000e-01 : f32
    %42 = vector.broadcast %cst_24 : f32 to vector<8x128xf32>
    %43 = arith.addf %41, %42 : vector<8x128xf32>
    %44 = arith.mulf %33, %12 : vector<8x128xf32>
    %45 = arith.mulf %25, %35 : vector<8x128xf32>
    %46 = arith.addf %44, %45 : vector<8x128xf32>
    %47 = math.tanh %46 : vector<8x128xf32>
    %48 = arith.mulf %43, %47 : vector<8x128xf32>
    %c8 = arith.constant 8 : index
    %c0_25 = arith.constant 0 : index
    %49 = vector.load %arg11[%c8, %c0_25] : memref<128x512xf32, #tpu.memory_space<vmem>>, vector<8x512xf32>
    %50 = arith.truncf %48 : vector<8x128xf32> to vector<8x128xbf16>
    %c0_26 = arith.constant 0 : index
    %c0_27 = arith.constant 0 : index
    %51 = vector.load %arg4[%c0_26, %c0_27] : memref<128x512xbf16, #tpu.memory_space<vmem>>, vector<128x512xbf16>
    %cst_28 = arith.constant dense<0.000000e+00> : vector<8x512xf32>
    %52 = tpu.matmul %50, %51, %cst_28 {dimension_numbers = #tpu.dot_dimension_numbers<[1], [0], [0], [1], [0, 0, 1, 1], [], []>} : vector<8x128xbf16>, vector<128x512xbf16>, vector<8x512xf32> -> vector<8x512xf32>
    %53 = arith.addf %49, %52 : vector<8x512xf32>
    %54 = vector.extract_strided_slice %53 {offsets = [0, 0], sizes = [8, 128], strides = [1, 1]} : vector<8x512xf32> to vector<8x128xf32>
    %cst_29 = arith.constant 5.000000e-01 : f32
    %55 = vector.broadcast %cst_29 : f32 to vector<8x128xf32>
    %56 = arith.mulf %55, %54 : vector<8x128xf32>
    %57 = math.tanh %56 : vector<8x128xf32>
    %cst_30 = arith.constant 5.000000e-01 : f32
    %58 = vector.broadcast %cst_30 : f32 to vector<8x128xf32>
    %59 = arith.mulf %58, %57 : vector<8x128xf32>
    %cst_31 = arith.constant 5.000000e-01 : f32
    %60 = vector.broadcast %cst_31 : f32 to vector<8x128xf32>
    %61 = arith.addf %59, %60 : vector<8x128xf32>
    %62 = vector.extract_strided_slice %53 {offsets = [0, 128], sizes = [8, 128], strides = [1, 1]} : vector<8x512xf32> to vector<8x128xf32>
    %cst_32 = arith.constant 5.000000e-01 : f32
    %63 = vector.broadcast %cst_32 : f32 to vector<8x128xf32>
    %64 = arith.mulf %63, %62 : vector<8x128xf32>
    %65 = math.tanh %64 : vector<8x128xf32>
    %cst_33 = arith.constant 5.000000e-01 : f32
    %66 = vector.broadcast %cst_33 : f32 to vector<8x128xf32>
    %67 = arith.mulf %66, %65 : vector<8x128xf32>
    %cst_34 = arith.constant 5.000000e-01 : f32
    %68 = vector.broadcast %cst_34 : f32 to vector<8x128xf32>
    %69 = arith.addf %67, %68 : vector<8x128xf32>
    %70 = vector.extract_strided_slice %53 {offsets = [0, 256], sizes = [8, 128], strides = [1, 1]} : vector<8x512xf32> to vector<8x128xf32>
    %71 = math.tanh %70 : vector<8x128xf32>
    %72 = vector.extract_strided_slice %53 {offsets = [0, 384], sizes = [8, 128], strides = [1, 1]} : vector<8x512xf32> to vector<8x128xf32>
    %cst_35 = arith.constant 5.000000e-01 : f32
    %73 = vector.broadcast %cst_35 : f32 to vector<8x128xf32>
    %74 = arith.mulf %73, %72 : vector<8x128xf32>
    %75 = math.tanh %74 : vector<8x128xf32>
    %cst_36 = arith.constant 5.000000e-01 : f32
    %76 = vector.broadcast %cst_36 : f32 to vector<8x128xf32>
    %77 = arith.mulf %76, %75 : vector<8x128xf32>
    %cst_37 = arith.constant 5.000000e-01 : f32
    %78 = vector.broadcast %cst_37 : f32 to vector<8x128xf32>
    %79 = arith.addf %77, %78 : vector<8x128xf32>
    %80 = arith.mulf %69, %46 : vector<8x128xf32>
    %81 = arith.mulf %61, %71 : vector<8x128xf32>
    %82 = arith.addf %80, %81 : vector<8x128xf32>
    %83 = math.tanh %82 : vector<8x128xf32>
    %84 = arith.mulf %79, %83 : vector<8x128xf32>
    %c16 = arith.constant 16 : index
    %c0_38 = arith.constant 0 : index
    %85 = vector.load %arg11[%c16, %c0_38] : memref<128x512xf32, #tpu.memory_space<vmem>>, vector<8x512xf32>
    %86 = arith.truncf %84 : vector<8x128xf32> to vector<8x128xbf16>
    %c0_39 = arith.constant 0 : index
    %c0_40 = arith.constant 0 : index
    %87 = vector.load %arg4[%c0_39, %c0_40] : memref<128x512xbf16, #tpu.memory_space<vmem>>, vector<128x512xbf16>
    %cst_41 = arith.constant dense<0.000000e+00> : vector<8x512xf32>
    %88 = tpu.matmul %86, %87, %cst_41 {dimension_numbers = #tpu.dot_dimension_numbers<[1], [0], [0], [1], [0, 0, 1, 1], [], []>} : vector<8x128xbf16>, vector<128x512xbf16>, vector<8x512xf32> -> vector<8x512xf32>
    %89 = arith.addf %85, %88 : vector<8x512xf32>
    %90 = vector.extract_strided_slice %89 {offsets = [0, 0], sizes = [8, 128], strides = [1, 1]} : vector<8x512xf32> to vector<8x128xf32>
    %cst_42 = arith.constant 5.000000e-01 : f32
    %91 = vector.broadcast %cst_42 : f32 to vector<8x128xf32>
    %92 = arith.mulf %91, %90 : vector<8x128xf32>
    %93 = math.tanh %92 : vector<8x128xf32>
    %cst_43 = arith.constant 5.000000e-01 : f32
    %94 = vector.broadcast %cst_43 : f32 to vector<8x128xf32>
    %95 = arith.mulf %94, %93 : vector<8x128xf32>
    %cst_44 = arith.constant 5.000000e-01 : f32
    %96 = vector.broadcast %cst_44 : f32 to vector<8x128xf32>
    %97 = arith.addf %95, %96 : vector<8x128xf32>
    %98 = vector.extract_strided_slice %89 {offsets = [0, 128], sizes = [8, 128], strides = [1, 1]} : vector<8x512xf32> to vector<8x128xf32>
    %cst_45 = arith.constant 5.000000e-01 : f32
    %99 = vector.broadcast %cst_45 : f32 to vector<8x128xf32>
    %100 = arith.mulf %99, %98 : vector<8x128xf32>
    %101 = math.tanh %100 : vector<8x128xf32>
    %cst_46 = arith.constant 5.000000e-01 : f32
    %102 = vector.broadcast %cst_46 : f32 to vector<8x128xf32>
    %103 = arith.mulf %102, %101 : vector<8x128xf32>
    %cst_47 = arith.constant 5.000000e-01 : f32
    %104 = vector.broadcast %cst_47 : f32 to vector<8x128xf32>
    %105 = arith.addf %103, %104 : vector<8x128xf32>
    %106 = vector.extract_strided_slice %89 {offsets = [0, 256], sizes = [8, 128], strides = [1, 1]} : vector<8x512xf32> to vector<8x128xf32>
    %107 = math.tanh %106 : vector<8x128xf32>
    %108 = vector.extract_strided_slice %89 {offsets = [0, 384], sizes = [8, 128], strides = [1, 1]} : vector<8x512xf32> to vector<8x128xf32>
    %cst_48 = arith.constant 5.000000e-01 : f32
    %109 = vector.broadcast %cst_48 : f32 to vector<8x128xf32>
    %110 = arith.mulf %109, %108 : vector<8x128xf32>
    %111 = math.tanh %110 : vector<8x128xf32>
    %cst_49 = arith.constant 5.000000e-01 : f32
    %112 = vector.broadcast %cst_49 : f32 to vector<8x128xf32>
    %113 = arith.mulf %112, %111 : vector<8x128xf32>
    %cst_50 = arith.constant 5.000000e-01 : f32
    %114 = vector.broadcast %cst_50 : f32 to vector<8x128xf32>
    %115 = arith.addf %113, %114 : vector<8x128xf32>
    %116 = arith.mulf %105, %82 : vector<8x128xf32>
    %117 = arith.mulf %97, %107 : vector<8x128xf32>
    %118 = arith.addf %116, %117 : vector<8x128xf32>
    %119 = math.tanh %118 : vector<8x128xf32>
    %120 = arith.mulf %115, %119 : vector<8x128xf32>
    %c24 = arith.constant 24 : index
    %c0_51 = arith.constant 0 : index
    %121 = vector.load %arg11[%c24, %c0_51] : memref<128x512xf32, #tpu.memory_space<vmem>>, vector<8x512xf32>
    %122 = arith.truncf %120 : vector<8x128xf32> to vector<8x128xbf16>
    %c0_52 = arith.constant 0 : index
    %c0_53 = arith.constant 0 : index
    %123 = vector.load %arg4[%c0_52, %c0_53] : memref<128x512xbf16, #tpu.memory_space<vmem>>, vector<128x512xbf16>
    %cst_54 = arith.constant dense<0.000000e+00> : vector<8x512xf32>
    %124 = tpu.matmul %122, %123, %cst_54 {dimension_numbers = #tpu.dot_dimension_numbers<[1], [0], [0], [1], [0, 0, 1, 1], [], []>} : vector<8x128xbf16>, vector<128x512xbf16>, vector<8x512xf32> -> vector<8x512xf32>
    %125 = arith.addf %121, %124 : vector<8x512xf32>
    %126 = vector.extract_strided_slice %125 {offsets = [0, 0], sizes = [8, 128], strides = [1, 1]} : vector<8x512xf32> to vector<8x128xf32>
    %cst_55 = arith.constant 5.000000e-01 : f32
    %127 = vector.broadcast %cst_55 : f32 to vector<8x128xf32>
    %128 = arith.mulf %127, %126 : vector<8x128xf32>
    %129 = math.tanh %128 : vector<8x128xf32>
    %cst_56 = arith.constant 5.000000e-01 : f32
    %130 = vector.broadcast %cst_56 : f32 to vector<8x128xf32>
    %131 = arith.mulf %130, %129 : vector<8x128xf32>
    %cst_57 = arith.constant 5.000000e-01 : f32
    %132 = vector.broadcast %cst_57 : f32 to vector<8x128xf32>
    %133 = arith.addf %131, %132 : vector<8x128xf32>
    %134 = vector.extract_strided_slice %125 {offsets = [0, 128], sizes = [8, 128], strides = [1, 1]} : vector<8x512xf32> to vector<8x128xf32>
    %cst_58 = arith.constant 5.000000e-01 : f32
    %135 = vector.broadcast %cst_58 : f32 to vector<8x128xf32>
    %136 = arith.mulf %135, %134 : vector<8x128xf32>
    %137 = math.tanh %136 : vector<8x128xf32>
    %cst_59 = arith.constant 5.000000e-01 : f32
    %138 = vector.broadcast %cst_59 : f32 to vector<8x128xf32>
    %139 = arith.mulf %138, %137 : vector<8x128xf32>
    %cst_60 = arith.constant 5.000000e-01 : f32
    %140 = vector.broadcast %cst_60 : f32 to vector<8x128xf32>
    %141 = arith.addf %139, %140 : vector<8x128xf32>
    %142 = vector.extract_strided_slice %125 {offsets = [0, 256], sizes = [8, 128], strides = [1, 1]} : vector<8x512xf32> to vector<8x128xf32>
    %143 = math.tanh %142 : vector<8x128xf32>
    %144 = vector.extract_strided_slice %125 {offsets = [0, 384], sizes = [8, 128], strides = [1, 1]} : vector<8x512xf32> to vector<8x128xf32>
    %cst_61 = arith.constant 5.000000e-01 : f32
    %145 = vector.broadcast %cst_61 : f32 to vector<8x128xf32>
    %146 = arith.mulf %145, %144 : vector<8x128xf32>
    %147 = math.tanh %146 : vector<8x128xf32>
    %cst_62 = arith.constant 5.000000e-01 : f32
    %148 = vector.broadcast %cst_62 : f32 to vector<8x128xf32>
    %149 = arith.mulf %148, %147 : vector<8x128xf32>
    %cst_63 = arith.constant 5.000000e-01 : f32
    %150 = vector.broadcast %cst_63 : f32 to vector<8x128xf32>
    %151 = arith.addf %149, %150 : vector<8x128xf32>
    %152 = arith.mulf %141, %118 : vector<8x128xf32>
    %153 = arith.mulf %133, %143 : vector<8x128xf32>
    %154 = arith.addf %152, %153 : vector<8x128xf32>
    %155 = math.tanh %154 : vector<8x128xf32>
    %156 = arith.mulf %151, %155 : vector<8x128xf32>
    %c32 = arith.constant 32 : index
    %c0_64 = arith.constant 0 : index
    %157 = vector.load %arg11[%c32, %c0_64] : memref<128x512xf32, #tpu.memory_space<vmem>>, vector<8x512xf32>
    %158 = arith.truncf %156 : vector<8x128xf32> to vector<8x128xbf16>
    %c0_65 = arith.constant 0 : index
    %c0_66 = arith.constant 0 : index
    %159 = vector.load %arg4[%c0_65, %c0_66] : memref<128x512xbf16, #tpu.memory_space<vmem>>, vector<128x512xbf16>
    %cst_67 = arith.constant dense<0.000000e+00> : vector<8x512xf32>
    %160 = tpu.matmul %158, %159, %cst_67 {dimension_numbers = #tpu.dot_dimension_numbers<[1], [0], [0], [1], [0, 0, 1, 1], [], []>} : vector<8x128xbf16>, vector<128x512xbf16>, vector<8x512xf32> -> vector<8x512xf32>
    %161 = arith.addf %157, %160 : vector<8x512xf32>
    %162 = vector.extract_strided_slice %161 {offsets = [0, 0], sizes = [8, 128], strides = [1, 1]} : vector<8x512xf32> to vector<8x128xf32>
    %cst_68 = arith.constant 5.000000e-01 : f32
    %163 = vector.broadcast %cst_68 : f32 to vector<8x128xf32>
    %164 = arith.mulf %163, %162 : vector<8x128xf32>
    %165 = math.tanh %164 : vector<8x128xf32>
    %cst_69 = arith.constant 5.000000e-01 : f32
    %166 = vector.broadcast %cst_69 : f32 to vector<8x128xf32>
    %167 = arith.mulf %166, %165 : vector<8x128xf32>
    %cst_70 = arith.constant 5.000000e-01 : f32
    %168 = vector.broadcast %cst_70 : f32 to vector<8x128xf32>
    %169 = arith.addf %167, %168 : vector<8x128xf32>
    %170 = vector.extract_strided_slice %161 {offsets = [0, 128], sizes = [8, 128], strides = [1, 1]} : vector<8x512xf32> to vector<8x128xf32>
    %cst_71 = arith.constant 5.000000e-01 : f32
    %171 = vector.broadcast %cst_71 : f32 to vector<8x128xf32>
    %172 = arith.mulf %171, %170 : vector<8x128xf32>
    %173 = math.tanh %172 : vector<8x128xf32>
    %cst_72 = arith.constant 5.000000e-01 : f32
    %174 = vector.broadcast %cst_72 : f32 to vector<8x128xf32>
    %175 = arith.mulf %174, %173 : vector<8x128xf32>
    %cst_73 = arith.constant 5.000000e-01 : f32
    %176 = vector.broadcast %cst_73 : f32 to vector<8x128xf32>
    %177 = arith.addf %175, %176 : vector<8x128xf32>
    %178 = vector.extract_strided_slice %161 {offsets = [0, 256], sizes = [8, 128], strides = [1, 1]} : vector<8x512xf32> to vector<8x128xf32>
    %179 = math.tanh %178 : vector<8x128xf32>
    %180 = vector.extract_strided_slice %161 {offsets = [0, 384], sizes = [8, 128], strides = [1, 1]} : vector<8x512xf32> to vector<8x128xf32>
    %cst_74 = arith.constant 5.000000e-01 : f32
    %181 = vector.broadcast %cst_74 : f32 to vector<8x128xf32>
    %182 = arith.mulf %181, %180 : vector<8x128xf32>
    %183 = math.tanh %182 : vector<8x128xf32>
    %cst_75 = arith.constant 5.000000e-01 : f32
    %184 = vector.broadcast %cst_75 : f32 to vector<8x128xf32>
    %185 = arith.mulf %184, %183 : vector<8x128xf32>
    %cst_76 = arith.constant 5.000000e-01 : f32
    %186 = vector.broadcast %cst_76 : f32 to vector<8x128xf32>
    %187 = arith.addf %185, %186 : vector<8x128xf32>
    %188 = arith.mulf %177, %154 : vector<8x128xf32>
    %189 = arith.mulf %169, %179 : vector<8x128xf32>
    %190 = arith.addf %188, %189 : vector<8x128xf32>
    %191 = math.tanh %190 : vector<8x128xf32>
    %192 = arith.mulf %187, %191 : vector<8x128xf32>
    %c40 = arith.constant 40 : index
    %c0_77 = arith.constant 0 : index
    %193 = vector.load %arg11[%c40, %c0_77] : memref<128x512xf32, #tpu.memory_space<vmem>>, vector<8x512xf32>
    %194 = arith.truncf %192 : vector<8x128xf32> to vector<8x128xbf16>
    %c0_78 = arith.constant 0 : index
    %c0_79 = arith.constant 0 : index
    %195 = vector.load %arg4[%c0_78, %c0_79] : memref<128x512xbf16, #tpu.memory_space<vmem>>, vector<128x512xbf16>
    %cst_80 = arith.constant dense<0.000000e+00> : vector<8x512xf32>
    %196 = tpu.matmul %194, %195, %cst_80 {dimension_numbers = #tpu.dot_dimension_numbers<[1], [0], [0], [1], [0, 0, 1, 1], [], []>} : vector<8x128xbf16>, vector<128x512xbf16>, vector<8x512xf32> -> vector<8x512xf32>
    %197 = arith.addf %193, %196 : vector<8x512xf32>
    %198 = vector.extract_strided_slice %197 {offsets = [0, 0], sizes = [8, 128], strides = [1, 1]} : vector<8x512xf32> to vector<8x128xf32>
    %cst_81 = arith.constant 5.000000e-01 : f32
    %199 = vector.broadcast %cst_81 : f32 to vector<8x128xf32>
    %200 = arith.mulf %199, %198 : vector<8x128xf32>
    %201 = math.tanh %200 : vector<8x128xf32>
    %cst_82 = arith.constant 5.000000e-01 : f32
    %202 = vector.broadcast %cst_82 : f32 to vector<8x128xf32>
    %203 = arith.mulf %202, %201 : vector<8x128xf32>
    %cst_83 = arith.constant 5.000000e-01 : f32
    %204 = vector.broadcast %cst_83 : f32 to vector<8x128xf32>
    %205 = arith.addf %203, %204 : vector<8x128xf32>
    %206 = vector.extract_strided_slice %197 {offsets = [0, 128], sizes = [8, 128], strides = [1, 1]} : vector<8x512xf32> to vector<8x128xf32>
    %cst_84 = arith.constant 5.000000e-01 : f32
    %207 = vector.broadcast %cst_84 : f32 to vector<8x128xf32>
    %208 = arith.mulf %207, %206 : vector<8x128xf32>
    %209 = math.tanh %208 : vector<8x128xf32>
    %cst_85 = arith.constant 5.000000e-01 : f32
    %210 = vector.broadcast %cst_85 : f32 to vector<8x128xf32>
    %211 = arith.mulf %210, %209 : vector<8x128xf32>
    %cst_86 = arith.constant 5.000000e-01 : f32
    %212 = vector.broadcast %cst_86 : f32 to vector<8x128xf32>
    %213 = arith.addf %211, %212 : vector<8x128xf32>
    %214 = vector.extract_strided_slice %197 {offsets = [0, 256], sizes = [8, 128], strides = [1, 1]} : vector<8x512xf32> to vector<8x128xf32>
    %215 = math.tanh %214 : vector<8x128xf32>
    %216 = vector.extract_strided_slice %197 {offsets = [0, 384], sizes = [8, 128], strides = [1, 1]} : vector<8x512xf32> to vector<8x128xf32>
    %cst_87 = arith.constant 5.000000e-01 : f32
    %217 = vector.broadcast %cst_87 : f32 to vector<8x128xf32>
    %218 = arith.mulf %217, %216 : vector<8x128xf32>
    %219 = math.tanh %218 : vector<8x128xf32>
    %cst_88 = arith.constant 5.000000e-01 : f32
    %220 = vector.broadcast %cst_88 : f32 to vector<8x128xf32>
    %221 = arith.mulf %220, %219 : vector<8x128xf32>
    %cst_89 = arith.constant 5.000000e-01 : f32
    %222 = vector.broadcast %cst_89 : f32 to vector<8x128xf32>
    %223 = arith.addf %221, %222 : vector<8x128xf32>
    %224 = arith.mulf %213, %190 : vector<8x128xf32>
    %225 = arith.mulf %205, %215 : vector<8x128xf32>
    %226 = arith.addf %224, %225 : vector<8x128xf32>
    %227 = math.tanh %226 : vector<8x128xf32>
    %228 = arith.mulf %223, %227 : vector<8x128xf32>
    %c48 = arith.constant 48 : index
    %c0_90 = arith.constant 0 : index
    %229 = vector.load %arg11[%c48, %c0_90] : memref<128x512xf32, #tpu.memory_space<vmem>>, vector<8x512xf32>
    %230 = arith.truncf %228 : vector<8x128xf32> to vector<8x128xbf16>
    %c0_91 = arith.constant 0 : index
    %c0_92 = arith.constant 0 : index
    %231 = vector.load %arg4[%c0_91, %c0_92] : memref<128x512xbf16, #tpu.memory_space<vmem>>, vector<128x512xbf16>
    %cst_93 = arith.constant dense<0.000000e+00> : vector<8x512xf32>
    %232 = tpu.matmul %230, %231, %cst_93 {dimension_numbers = #tpu.dot_dimension_numbers<[1], [0], [0], [1], [0, 0, 1, 1], [], []>} : vector<8x128xbf16>, vector<128x512xbf16>, vector<8x512xf32> -> vector<8x512xf32>
    %233 = arith.addf %229, %232 : vector<8x512xf32>
    %234 = vector.extract_strided_slice %233 {offsets = [0, 0], sizes = [8, 128], strides = [1, 1]} : vector<8x512xf32> to vector<8x128xf32>
    %cst_94 = arith.constant 5.000000e-01 : f32
    %235 = vector.broadcast %cst_94 : f32 to vector<8x128xf32>
    %236 = arith.mulf %235, %234 : vector<8x128xf32>
    %237 = math.tanh %236 : vector<8x128xf32>
    %cst_95 = arith.constant 5.000000e-01 : f32
    %238 = vector.broadcast %cst_95 : f32 to vector<8x128xf32>
    %239 = arith.mulf %238, %237 : vector<8x128xf32>
    %cst_96 = arith.constant 5.000000e-01 : f32
    %240 = vector.broadcast %cst_96 : f32 to vector<8x128xf32>
    %241 = arith.addf %239, %240 : vector<8x128xf32>
    %242 = vector.extract_strided_slice %233 {offsets = [0, 128], sizes = [8, 128], strides = [1, 1]} : vector<8x512xf32> to vector<8x128xf32>
    %cst_97 = arith.constant 5.000000e-01 : f32
    %243 = vector.broadcast %cst_97 : f32 to vector<8x128xf32>
    %244 = arith.mulf %243, %242 : vector<8x128xf32>
    %245 = math.tanh %244 : vector<8x128xf32>
    %cst_98 = arith.constant 5.000000e-01 : f32
    %246 = vector.broadcast %cst_98 : f32 to vector<8x128xf32>
    %247 = arith.mulf %246, %245 : vector<8x128xf32>
    %cst_99 = arith.constant 5.000000e-01 : f32
    %248 = vector.broadcast %cst_99 : f32 to vector<8x128xf32>
    %249 = arith.addf %247, %248 : vector<8x128xf32>
    %250 = vector.extract_strided_slice %233 {offsets = [0, 256], sizes = [8, 128], strides = [1, 1]} : vector<8x512xf32> to vector<8x128xf32>
    %251 = math.tanh %250 : vector<8x128xf32>
    %252 = vector.extract_strided_slice %233 {offsets = [0, 384], sizes = [8, 128], strides = [1, 1]} : vector<8x512xf32> to vector<8x128xf32>
    %cst_100 = arith.constant 5.000000e-01 : f32
    %253 = vector.broadcast %cst_100 : f32 to vector<8x128xf32>
    %254 = arith.mulf %253, %252 : vector<8x128xf32>
    %255 = math.tanh %254 : vector<8x128xf32>
    %cst_101 = arith.constant 5.000000e-01 : f32
    %256 = vector.broadcast %cst_101 : f32 to vector<8x128xf32>
    %257 = arith.mulf %256, %255 : vector<8x128xf32>
    %cst_102 = arith.constant 5.000000e-01 : f32
    %258 = vector.broadcast %cst_102 : f32 to vector<8x128xf32>
    %259 = arith.addf %257, %258 : vector<8x128xf32>
    %260 = arith.mulf %249, %226 : vector<8x128xf32>
    %261 = arith.mulf %241, %251 : vector<8x128xf32>
    %262 = arith.addf %260, %261 : vector<8x128xf32>
    %263 = math.tanh %262 : vector<8x128xf32>
    %264 = arith.mulf %259, %263 : vector<8x128xf32>
    %c0_103 = arith.constant 0 : index
    %c0_104 = arith.constant 0 : index
    %265 = vector.load %arg12[%c0_103, %c0_104] : memref<80x128xf32, #tpu.memory_space<vmem>>, vector<8x128xf32>
    tpu.vector_store %arg12[%c0_103, %c0_104], %264 {strides = array<i32>} : memref<80x128xf32, #tpu.memory_space<vmem>>, vector<8x128xf32>,
    %c56 = arith.constant 56 : index
    %c0_105 = arith.constant 0 : index
    %266 = vector.load %arg11[%c56, %c0_105] : memref<128x512xf32, #tpu.memory_space<vmem>>, vector<8x512xf32>
    %267 = arith.truncf %264 : vector<8x128xf32> to vector<8x128xbf16>
    %c0_106 = arith.constant 0 : index
    %c0_107 = arith.constant 0 : index
    %268 = vector.load %arg4[%c0_106, %c0_107] : memref<128x512xbf16, #tpu.memory_space<vmem>>, vector<128x512xbf16>
    %cst_108 = arith.constant dense<0.000000e+00> : vector<8x512xf32>
    %269 = tpu.matmul %267, %268, %cst_108 {dimension_numbers = #tpu.dot_dimension_numbers<[1], [0], [0], [1], [0, 0, 1, 1], [], []>} : vector<8x128xbf16>, vector<128x512xbf16>, vector<8x512xf32> -> vector<8x512xf32>
    %270 = arith.addf %266, %269 : vector<8x512xf32>
    %271 = vector.extract_strided_slice %270 {offsets = [0, 0], sizes = [8, 128], strides = [1, 1]} : vector<8x512xf32> to vector<8x128xf32>
    %cst_109 = arith.constant 5.000000e-01 : f32
    %272 = vector.broadcast %cst_109 : f32 to vector<8x128xf32>
    %273 = arith.mulf %272, %271 : vector<8x128xf32>
    %274 = math.tanh %273 : vector<8x128xf32>
    %cst_110 = arith.constant 5.000000e-01 : f32
    %275 = vector.broadcast %cst_110 : f32 to vector<8x128xf32>
    %276 = arith.mulf %275, %274 : vector<8x128xf32>
    %cst_111 = arith.constant 5.000000e-01 : f32
    %277 = vector.broadcast %cst_111 : f32 to vector<8x128xf32>
    %278 = arith.addf %276, %277 : vector<8x128xf32>
    %279 = vector.extract_strided_slice %270 {offsets = [0, 128], sizes = [8, 128], strides = [1, 1]} : vector<8x512xf32> to vector<8x128xf32>
    %cst_112 = arith.constant 5.000000e-01 : f32
    %280 = vector.broadcast %cst_112 : f32 to vector<8x128xf32>
    %281 = arith.mulf %280, %279 : vector<8x128xf32>
    %282 = math.tanh %281 : vector<8x128xf32>
    %cst_113 = arith.constant 5.000000e-01 : f32
    %283 = vector.broadcast %cst_113 : f32 to vector<8x128xf32>
    %284 = arith.mulf %283, %282 : vector<8x128xf32>
    %cst_114 = arith.constant 5.000000e-01 : f32
    %285 = vector.broadcast %cst_114 : f32 to vector<8x128xf32>
    %286 = arith.addf %284, %285 : vector<8x128xf32>
    %287 = vector.extract_strided_slice %270 {offsets = [0, 256], sizes = [8, 128], strides = [1, 1]} : vector<8x512xf32> to vector<8x128xf32>
    %288 = math.tanh %287 : vector<8x128xf32>
    %289 = vector.extract_strided_slice %270 {offsets = [0, 384], sizes = [8, 128], strides = [1, 1]} : vector<8x512xf32> to vector<8x128xf32>
    %cst_115 = arith.constant 5.000000e-01 : f32
    %290 = vector.broadcast %cst_115 : f32 to vector<8x128xf32>
    %291 = arith.mulf %290, %289 : vector<8x128xf32>
    %292 = math.tanh %291 : vector<8x128xf32>
    %cst_116 = arith.constant 5.000000e-01 : f32
    %293 = vector.broadcast %cst_116 : f32 to vector<8x128xf32>
    %294 = arith.mulf %293, %292 : vector<8x128xf32>
    %cst_117 = arith.constant 5.000000e-01 : f32
    %295 = vector.broadcast %cst_117 : f32 to vector<8x128xf32>
    %296 = arith.addf %294, %295 : vector<8x128xf32>
    %297 = arith.mulf %286, %262 : vector<8x128xf32>
    %298 = arith.mulf %278, %288 : vector<8x128xf32>
    %299 = arith.addf %297, %298 : vector<8x128xf32>
    %300 = math.tanh %299 : vector<8x128xf32>
    %301 = arith.mulf %296, %300 : vector<8x128xf32>
    %c8_118 = arith.constant 8 : index
    %c0_119 = arith.constant 0 : index
    %302 = vector.load %arg12[%c8_118, %c0_119] : memref<80x128xf32, #tpu.memory_space<vmem>>, vector<8x128xf32>
    tpu.vector_store %arg12[%c8_118, %c0_119], %301 {strides = array<i32>} : memref<80x128xf32, #tpu.memory_space<vmem>>, vector<8x128xf32>,
    %c64 = arith.constant 64 : index
    %c0_120 = arith.constant 0 : index
    %303 = vector.load %arg11[%c64, %c0_120] : memref<128x512xf32, #tpu.memory_space<vmem>>, vector<8x512xf32>
    %304 = arith.truncf %301 : vector<8x128xf32> to vector<8x128xbf16>
    %c0_121 = arith.constant 0 : index
    %c0_122 = arith.constant 0 : index
    %305 = vector.load %arg4[%c0_121, %c0_122] : memref<128x512xbf16, #tpu.memory_space<vmem>>, vector<128x512xbf16>
    %cst_123 = arith.constant dense<0.000000e+00> : vector<8x512xf32>
    %306 = tpu.matmul %304, %305, %cst_123 {dimension_numbers = #tpu.dot_dimension_numbers<[1], [0], [0], [1], [0, 0, 1, 1], [], []>} : vector<8x128xbf16>, vector<128x512xbf16>, vector<8x512xf32> -> vector<8x512xf32>
    %307 = arith.addf %303, %306 : vector<8x512xf32>
    %308 = vector.extract_strided_slice %307 {offsets = [0, 0], sizes = [8, 128], strides = [1, 1]} : vector<8x512xf32> to vector<8x128xf32>
    %cst_124 = arith.constant 5.000000e-01 : f32
    %309 = vector.broadcast %cst_124 : f32 to vector<8x128xf32>
    %310 = arith.mulf %309, %308 : vector<8x128xf32>
    %311 = math.tanh %310 : vector<8x128xf32>
    %cst_125 = arith.constant 5.000000e-01 : f32
    %312 = vector.broadcast %cst_125 : f32 to vector<8x128xf32>
    %313 = arith.mulf %312, %311 : vector<8x128xf32>
    %cst_126 = arith.constant 5.000000e-01 : f32
    %314 = vector.broadcast %cst_126 : f32 to vector<8x128xf32>
    %315 = arith.addf %313, %314 : vector<8x128xf32>
    %316 = vector.extract_strided_slice %307 {offsets = [0, 128], sizes = [8, 128], strides = [1, 1]} : vector<8x512xf32> to vector<8x128xf32>
    %cst_127 = arith.constant 5.000000e-01 : f32
    %317 = vector.broadcast %cst_127 : f32 to vector<8x128xf32>
    %318 = arith.mulf %317, %316 : vector<8x128xf32>
    %319 = math.tanh %318 : vector<8x128xf32>
    %cst_128 = arith.constant 5.000000e-01 : f32
    %320 = vector.broadcast %cst_128 : f32 to vector<8x128xf32>
    %321 = arith.mulf %320, %319 : vector<8x128xf32>
    %cst_129 = arith.constant 5.000000e-01 : f32
    %322 = vector.broadcast %cst_129 : f32 to vector<8x128xf32>
    %323 = arith.addf %321, %322 : vector<8x128xf32>
    %324 = vector.extract_strided_slice %307 {offsets = [0, 256], sizes = [8, 128], strides = [1, 1]} : vector<8x512xf32> to vector<8x128xf32>
    %325 = math.tanh %324 : vector<8x128xf32>
    %326 = vector.extract_strided_slice %307 {offsets = [0, 384], sizes = [8, 128], strides = [1, 1]} : vector<8x512xf32> to vector<8x128xf32>
    %cst_130 = arith.constant 5.000000e-01 : f32
    %327 = vector.broadcast %cst_130 : f32 to vector<8x128xf32>
    %328 = arith.mulf %327, %326 : vector<8x128xf32>
    %329 = math.tanh %328 : vector<8x128xf32>
    %cst_131 = arith.constant 5.000000e-01 : f32
    %330 = vector.broadcast %cst_131 : f32 to vector<8x128xf32>
    %331 = arith.mulf %330, %329 : vector<8x128xf32>
    %cst_132 = arith.constant 5.000000e-01 : f32
    %332 = vector.broadcast %cst_132 : f32 to vector<8x128xf32>
    %333 = arith.addf %331, %332 : vector<8x128xf32>
    %334 = arith.mulf %323, %299 : vector<8x128xf32>
    %335 = arith.mulf %315, %325 : vector<8x128xf32>
    %336 = arith.addf %334, %335 : vector<8x128xf32>
    %337 = math.tanh %336 : vector<8x128xf32>
    %338 = arith.mulf %333, %337 : vector<8x128xf32>
    %c16_133 = arith.constant 16 : index
    %c0_134 = arith.constant 0 : index
    %339 = vector.load %arg12[%c16_133, %c0_134] : memref<80x128xf32, #tpu.memory_space<vmem>>, vector<8x128xf32>
    tpu.vector_store %arg12[%c16_133, %c0_134], %338 {strides = array<i32>} : memref<80x128xf32, #tpu.memory_space<vmem>>, vector<8x128xf32>,
    %c72 = arith.constant 72 : index
    %c0_135 = arith.constant 0 : index
    %340 = vector.load %arg11[%c72, %c0_135] : memref<128x512xf32, #tpu.memory_space<vmem>>, vector<8x512xf32>
    %341 = arith.truncf %338 : vector<8x128xf32> to vector<8x128xbf16>
    %c0_136 = arith.constant 0 : index
    %c0_137 = arith.constant 0 : index
    %342 = vector.load %arg4[%c0_136, %c0_137] : memref<128x512xbf16, #tpu.memory_space<vmem>>, vector<128x512xbf16>
    %cst_138 = arith.constant dense<0.000000e+00> : vector<8x512xf32>
    %343 = tpu.matmul %341, %342, %cst_138 {dimension_numbers = #tpu.dot_dimension_numbers<[1], [0], [0], [1], [0, 0, 1, 1], [], []>} : vector<8x128xbf16>, vector<128x512xbf16>, vector<8x512xf32> -> vector<8x512xf32>
    %344 = arith.addf %340, %343 : vector<8x512xf32>
    %345 = vector.extract_strided_slice %344 {offsets = [0, 0], sizes = [8, 128], strides = [1, 1]} : vector<8x512xf32> to vector<8x128xf32>
    %cst_139 = arith.constant 5.000000e-01 : f32
    %346 = vector.broadcast %cst_139 : f32 to vector<8x128xf32>
    %347 = arith.mulf %346, %345 : vector<8x128xf32>
    %348 = math.tanh %347 : vector<8x128xf32>
    %cst_140 = arith.constant 5.000000e-01 : f32
    %349 = vector.broadcast %cst_140 : f32 to vector<8x128xf32>
    %350 = arith.mulf %349, %348 : vector<8x128xf32>
    %cst_141 = arith.constant 5.000000e-01 : f32
    %351 = vector.broadcast %cst_141 : f32 to vector<8x128xf32>
    %352 = arith.addf %350, %351 : vector<8x128xf32>
    %353 = vector.extract_strided_slice %344 {offsets = [0, 128], sizes = [8, 128], strides = [1, 1]} : vector<8x512xf32> to vector<8x128xf32>
    %cst_142 = arith.constant 5.000000e-01 : f32
    %354 = vector.broadcast %cst_142 : f32 to vector<8x128xf32>
    %355 = arith.mulf %354, %353 : vector<8x128xf32>
    %356 = math.tanh %355 : vector<8x128xf32>
    %cst_143 = arith.constant 5.000000e-01 : f32
    %357 = vector.broadcast %cst_143 : f32 to vector<8x128xf32>
    %358 = arith.mulf %357, %356 : vector<8x128xf32>
    %cst_144 = arith.constant 5.000000e-01 : f32
    %359 = vector.broadcast %cst_144 : f32 to vector<8x128xf32>
    %360 = arith.addf %358, %359 : vector<8x128xf32>
    %361 = vector.extract_strided_slice %344 {offsets = [0, 256], sizes = [8, 128], strides = [1, 1]} : vector<8x512xf32> to vector<8x128xf32>
    %362 = math.tanh %361 : vector<8x128xf32>
    %363 = vector.extract_strided_slice %344 {offsets = [0, 384], sizes = [8, 128], strides = [1, 1]} : vector<8x512xf32> to vector<8x128xf32>
    %cst_145 = arith.constant 5.000000e-01 : f32
    %364 = vector.broadcast %cst_145 : f32 to vector<8x128xf32>
    %365 = arith.mulf %364, %363 : vector<8x128xf32>
    %366 = math.tanh %365 : vector<8x128xf32>
    %cst_146 = arith.constant 5.000000e-01 : f32
    %367 = vector.broadcast %cst_146 : f32 to vector<8x128xf32>
    %368 = arith.mulf %367, %366 : vector<8x128xf32>
    %cst_147 = arith.constant 5.000000e-01 : f32
    %369 = vector.broadcast %cst_147 : f32 to vector<8x128xf32>
    %370 = arith.addf %368, %369 : vector<8x128xf32>
    %371 = arith.mulf %360, %336 : vector<8x128xf32>
    %372 = arith.mulf %352, %362 : vector<8x128xf32>
    %373 = arith.addf %371, %372 : vector<8x128xf32>
    %374 = math.tanh %373 : vector<8x128xf32>
    %375 = arith.mulf %370, %374 : vector<8x128xf32>
    %c24_148 = arith.constant 24 : index
    %c0_149 = arith.constant 0 : index
    %376 = vector.load %arg12[%c24_148, %c0_149] : memref<80x128xf32, #tpu.memory_space<vmem>>, vector<8x128xf32>
    tpu.vector_store %arg12[%c24_148, %c0_149], %375 {strides = array<i32>} : memref<80x128xf32, #tpu.memory_space<vmem>>, vector<8x128xf32>,
    %c80 = arith.constant 80 : index
    %c0_150 = arith.constant 0 : index
    %377 = vector.load %arg11[%c80, %c0_150] : memref<128x512xf32, #tpu.memory_space<vmem>>, vector<8x512xf32>
    %378 = arith.truncf %375 : vector<8x128xf32> to vector<8x128xbf16>
    %c0_151 = arith.constant 0 : index
    %c0_152 = arith.constant 0 : index
    %379 = vector.load %arg4[%c0_151, %c0_152] : memref<128x512xbf16, #tpu.memory_space<vmem>>, vector<128x512xbf16>
    %cst_153 = arith.constant dense<0.000000e+00> : vector<8x512xf32>
    %380 = tpu.matmul %378, %379, %cst_153 {dimension_numbers = #tpu.dot_dimension_numbers<[1], [0], [0], [1], [0, 0, 1, 1], [], []>} : vector<8x128xbf16>, vector<128x512xbf16>, vector<8x512xf32> -> vector<8x512xf32>
    %381 = arith.addf %377, %380 : vector<8x512xf32>
    %382 = vector.extract_strided_slice %381 {offsets = [0, 0], sizes = [8, 128], strides = [1, 1]} : vector<8x512xf32> to vector<8x128xf32>
    %cst_154 = arith.constant 5.000000e-01 : f32
    %383 = vector.broadcast %cst_154 : f32 to vector<8x128xf32>
    %384 = arith.mulf %383, %382 : vector<8x128xf32>
    %385 = math.tanh %384 : vector<8x128xf32>
    %cst_155 = arith.constant 5.000000e-01 : f32
    %386 = vector.broadcast %cst_155 : f32 to vector<8x128xf32>
    %387 = arith.mulf %386, %385 : vector<8x128xf32>
    %cst_156 = arith.constant 5.000000e-01 : f32
    %388 = vector.broadcast %cst_156 : f32 to vector<8x128xf32>
    %389 = arith.addf %387, %388 : vector<8x128xf32>
    %390 = vector.extract_strided_slice %381 {offsets = [0, 128], sizes = [8, 128], strides = [1, 1]} : vector<8x512xf32> to vector<8x128xf32>
    %cst_157 = arith.constant 5.000000e-01 : f32
    %391 = vector.broadcast %cst_157 : f32 to vector<8x128xf32>
    %392 = arith.mulf %391, %390 : vector<8x128xf32>
    %393 = math.tanh %392 : vector<8x128xf32>
    %cst_158 = arith.constant 5.000000e-01 : f32
    %394 = vector.broadcast %cst_158 : f32 to vector<8x128xf32>
    %395 = arith.mulf %394, %393 : vector<8x128xf32>
    %cst_159 = arith.constant 5.000000e-01 : f32
    %396 = vector.broadcast %cst_159 : f32 to vector<8x128xf32>
    %397 = arith.addf %395, %396 : vector<8x128xf32>
    %398 = vector.extract_strided_slice %381 {offsets = [0, 256], sizes = [8, 128], strides = [1, 1]} : vector<8x512xf32> to vector<8x128xf32>
    %399 = math.tanh %398 : vector<8x128xf32>
    %400 = vector.extract_strided_slice %381 {offsets = [0, 384], sizes = [8, 128], strides = [1, 1]} : vector<8x512xf32> to vector<8x128xf32>
    %cst_160 = arith.constant 5.000000e-01 : f32
    %401 = vector.broadcast %cst_160 : f32 to vector<8x128xf32>
    %402 = arith.mulf %401, %400 : vector<8x128xf32>
    %403 = math.tanh %402 : vector<8x128xf32>
    %cst_161 = arith.constant 5.000000e-01 : f32
    %404 = vector.broadcast %cst_161 : f32 to vector<8x128xf32>
    %405 = arith.mulf %404, %403 : vector<8x128xf32>
    %cst_162 = arith.constant 5.000000e-01 : f32
    %406 = vector.broadcast %cst_162 : f32 to vector<8x128xf32>
    %407 = arith.addf %405, %406 : vector<8x128xf32>
    %408 = arith.mulf %397, %373 : vector<8x128xf32>
    %409 = arith.mulf %389, %399 : vector<8x128xf32>
    %410 = arith.addf %408, %409 : vector<8x128xf32>
    %411 = math.tanh %410 : vector<8x128xf32>
    %412 = arith.mulf %407, %411 : vector<8x128xf32>
    %c32_163 = arith.constant 32 : index
    %c0_164 = arith.constant 0 : index
    %413 = vector.load %arg12[%c32_163, %c0_164] : memref<80x128xf32, #tpu.memory_space<vmem>>, vector<8x128xf32>
    tpu.vector_store %arg12[%c32_163, %c0_164], %412 {strides = array<i32>} : memref<80x128xf32, #tpu.memory_space<vmem>>, vector<8x128xf32>,
    %c88 = arith.constant 88 : index
    %c0_165 = arith.constant 0 : index
    %414 = vector.load %arg11[%c88, %c0_165] : memref<128x512xf32, #tpu.memory_space<vmem>>, vector<8x512xf32>
    %415 = arith.truncf %412 : vector<8x128xf32> to vector<8x128xbf16>
    %c0_166 = arith.constant 0 : index
    %c0_167 = arith.constant 0 : index
    %416 = vector.load %arg4[%c0_166, %c0_167] : memref<128x512xbf16, #tpu.memory_space<vmem>>, vector<128x512xbf16>
    %cst_168 = arith.constant dense<0.000000e+00> : vector<8x512xf32>
    %417 = tpu.matmul %415, %416, %cst_168 {dimension_numbers = #tpu.dot_dimension_numbers<[1], [0], [0], [1], [0, 0, 1, 1], [], []>} : vector<8x128xbf16>, vector<128x512xbf16>, vector<8x512xf32> -> vector<8x512xf32>
    %418 = arith.addf %414, %417 : vector<8x512xf32>
    %419 = vector.extract_strided_slice %418 {offsets = [0, 0], sizes = [8, 128], strides = [1, 1]} : vector<8x512xf32> to vector<8x128xf32>
    %cst_169 = arith.constant 5.000000e-01 : f32
    %420 = vector.broadcast %cst_169 : f32 to vector<8x128xf32>
    %421 = arith.mulf %420, %419 : vector<8x128xf32>
    %422 = math.tanh %421 : vector<8x128xf32>
    %cst_170 = arith.constant 5.000000e-01 : f32
    %423 = vector.broadcast %cst_170 : f32 to vector<8x128xf32>
    %424 = arith.mulf %423, %422 : vector<8x128xf32>
    %cst_171 = arith.constant 5.000000e-01 : f32
    %425 = vector.broadcast %cst_171 : f32 to vector<8x128xf32>
    %426 = arith.addf %424, %425 : vector<8x128xf32>
    %427 = vector.extract_strided_slice %418 {offsets = [0, 128], sizes = [8, 128], strides = [1, 1]} : vector<8x512xf32> to vector<8x128xf32>
    %cst_172 = arith.constant 5.000000e-01 : f32
    %428 = vector.broadcast %cst_172 : f32 to vector<8x128xf32>
    %429 = arith.mulf %428, %427 : vector<8x128xf32>
    %430 = math.tanh %429 : vector<8x128xf32>
    %cst_173 = arith.constant 5.000000e-01 : f32
    %431 = vector.broadcast %cst_173 : f32 to vector<8x128xf32>
    %432 = arith.mulf %431, %430 : vector<8x128xf32>
    %cst_174 = arith.constant 5.000000e-01 : f32
    %433 = vector.broadcast %cst_174 : f32 to vector<8x128xf32>
    %434 = arith.addf %432, %433 : vector<8x128xf32>
    %435 = vector.extract_strided_slice %418 {offsets = [0, 256], sizes = [8, 128], strides = [1, 1]} : vector<8x512xf32> to vector<8x128xf32>
    %436 = math.tanh %435 : vector<8x128xf32>
    %437 = vector.extract_strided_slice %418 {offsets = [0, 384], sizes = [8, 128], strides = [1, 1]} : vector<8x512xf32> to vector<8x128xf32>
    %cst_175 = arith.constant 5.000000e-01 : f32
    %438 = vector.broadcast %cst_175 : f32 to vector<8x128xf32>
    %439 = arith.mulf %438, %437 : vector<8x128xf32>
    %440 = math.tanh %439 : vector<8x128xf32>
    %cst_176 = arith.constant 5.000000e-01 : f32
    %441 = vector.broadcast %cst_176 : f32 to vector<8x128xf32>
    %442 = arith.mulf %441, %440 : vector<8x128xf32>
    %cst_177 = arith.constant 5.000000e-01 : f32
    %443 = vector.broadcast %cst_177 : f32 to vector<8x128xf32>
    %444 = arith.addf %442, %443 : vector<8x128xf32>
    %445 = arith.mulf %434, %410 : vector<8x128xf32>
    %446 = arith.mulf %426, %436 : vector<8x128xf32>
    %447 = arith.addf %445, %446 : vector<8x128xf32>
    %448 = math.tanh %447 : vector<8x128xf32>
    %449 = arith.mulf %444, %448 : vector<8x128xf32>
    %c40_178 = arith.constant 40 : index
    %c0_179 = arith.constant 0 : index
    %450 = vector.load %arg12[%c40_178, %c0_179] : memref<80x128xf32, #tpu.memory_space<vmem>>, vector<8x128xf32>
    tpu.vector_store %arg12[%c40_178, %c0_179], %449 {strides = array<i32>} : memref<80x128xf32, #tpu.memory_space<vmem>>, vector<8x128xf32>,
    %c96 = arith.constant 96 : index
    %c0_180 = arith.constant 0 : index
    %451 = vector.load %arg11[%c96, %c0_180] : memref<128x512xf32, #tpu.memory_space<vmem>>, vector<8x512xf32>
    %452 = arith.truncf %449 : vector<8x128xf32> to vector<8x128xbf16>
    %c0_181 = arith.constant 0 : index
    %c0_182 = arith.constant 0 : index
    %453 = vector.load %arg4[%c0_181, %c0_182] : memref<128x512xbf16, #tpu.memory_space<vmem>>, vector<128x512xbf16>
    %cst_183 = arith.constant dense<0.000000e+00> : vector<8x512xf32>
    %454 = tpu.matmul %452, %453, %cst_183 {dimension_numbers = #tpu.dot_dimension_numbers<[1], [0], [0], [1], [0, 0, 1, 1], [], []>} : vector<8x128xbf16>, vector<128x512xbf16>, vector<8x512xf32> -> vector<8x512xf32>
    %455 = arith.addf %451, %454 : vector<8x512xf32>
    %456 = vector.extract_strided_slice %455 {offsets = [0, 0], sizes = [8, 128], strides = [1, 1]} : vector<8x512xf32> to vector<8x128xf32>
    %cst_184 = arith.constant 5.000000e-01 : f32
    %457 = vector.broadcast %cst_184 : f32 to vector<8x128xf32>
    %458 = arith.mulf %457, %456 : vector<8x128xf32>
    %459 = math.tanh %458 : vector<8x128xf32>
    %cst_185 = arith.constant 5.000000e-01 : f32
    %460 = vector.broadcast %cst_185 : f32 to vector<8x128xf32>
    %461 = arith.mulf %460, %459 : vector<8x128xf32>
    %cst_186 = arith.constant 5.000000e-01 : f32
    %462 = vector.broadcast %cst_186 : f32 to vector<8x128xf32>
    %463 = arith.addf %461, %462 : vector<8x128xf32>
    %464 = vector.extract_strided_slice %455 {offsets = [0, 128], sizes = [8, 128], strides = [1, 1]} : vector<8x512xf32> to vector<8x128xf32>
    %cst_187 = arith.constant 5.000000e-01 : f32
    %465 = vector.broadcast %cst_187 : f32 to vector<8x128xf32>
    %466 = arith.mulf %465, %464 : vector<8x128xf32>
    %467 = math.tanh %466 : vector<8x128xf32>
    %cst_188 = arith.constant 5.000000e-01 : f32
    %468 = vector.broadcast %cst_188 : f32 to vector<8x128xf32>
    %469 = arith.mulf %468, %467 : vector<8x128xf32>
    %cst_189 = arith.constant 5.000000e-01 : f32
    %470 = vector.broadcast %cst_189 : f32 to vector<8x128xf32>
    %471 = arith.addf %469, %470 : vector<8x128xf32>
    %472 = vector.extract_strided_slice %455 {offsets = [0, 256], sizes = [8, 128], strides = [1, 1]} : vector<8x512xf32> to vector<8x128xf32>
    %473 = math.tanh %472 : vector<8x128xf32>
    %474 = vector.extract_strided_slice %455 {offsets = [0, 384], sizes = [8, 128], strides = [1, 1]} : vector<8x512xf32> to vector<8x128xf32>
    %cst_190 = arith.constant 5.000000e-01 : f32
    %475 = vector.broadcast %cst_190 : f32 to vector<8x128xf32>
    %476 = arith.mulf %475, %474 : vector<8x128xf32>
    %477 = math.tanh %476 : vector<8x128xf32>
    %cst_191 = arith.constant 5.000000e-01 : f32
    %478 = vector.broadcast %cst_191 : f32 to vector<8x128xf32>
    %479 = arith.mulf %478, %477 : vector<8x128xf32>
    %cst_192 = arith.constant 5.000000e-01 : f32
    %480 = vector.broadcast %cst_192 : f32 to vector<8x128xf32>
    %481 = arith.addf %479, %480 : vector<8x128xf32>
    %482 = arith.mulf %471, %447 : vector<8x128xf32>
    %483 = arith.mulf %463, %473 : vector<8x128xf32>
    %484 = arith.addf %482, %483 : vector<8x128xf32>
    %485 = math.tanh %484 : vector<8x128xf32>
    %486 = arith.mulf %481, %485 : vector<8x128xf32>
    %c48_193 = arith.constant 48 : index
    %c0_194 = arith.constant 0 : index
    %487 = vector.load %arg12[%c48_193, %c0_194] : memref<80x128xf32, #tpu.memory_space<vmem>>, vector<8x128xf32>
    tpu.vector_store %arg12[%c48_193, %c0_194], %486 {strides = array<i32>} : memref<80x128xf32, #tpu.memory_space<vmem>>, vector<8x128xf32>,
    %c104 = arith.constant 104 : index
    %c0_195 = arith.constant 0 : index
    %488 = vector.load %arg11[%c104, %c0_195] : memref<128x512xf32, #tpu.memory_space<vmem>>, vector<8x512xf32>
    %489 = arith.truncf %486 : vector<8x128xf32> to vector<8x128xbf16>
    %c0_196 = arith.constant 0 : index
    %c0_197 = arith.constant 0 : index
    %490 = vector.load %arg4[%c0_196, %c0_197] : memref<128x512xbf16, #tpu.memory_space<vmem>>, vector<128x512xbf16>
    %cst_198 = arith.constant dense<0.000000e+00> : vector<8x512xf32>
    %491 = tpu.matmul %489, %490, %cst_198 {dimension_numbers = #tpu.dot_dimension_numbers<[1], [0], [0], [1], [0, 0, 1, 1], [], []>} : vector<8x128xbf16>, vector<128x512xbf16>, vector<8x512xf32> -> vector<8x512xf32>
    %492 = arith.addf %488, %491 : vector<8x512xf32>
    %493 = vector.extract_strided_slice %492 {offsets = [0, 0], sizes = [8, 128], strides = [1, 1]} : vector<8x512xf32> to vector<8x128xf32>
    %cst_199 = arith.constant 5.000000e-01 : f32
    %494 = vector.broadcast %cst_199 : f32 to vector<8x128xf32>
    %495 = arith.mulf %494, %493 : vector<8x128xf32>
    %496 = math.tanh %495 : vector<8x128xf32>
    %cst_200 = arith.constant 5.000000e-01 : f32
    %497 = vector.broadcast %cst_200 : f32 to vector<8x128xf32>
    %498 = arith.mulf %497, %496 : vector<8x128xf32>
    %cst_201 = arith.constant 5.000000e-01 : f32
    %499 = vector.broadcast %cst_201 : f32 to vector<8x128xf32>
    %500 = arith.addf %498, %499 : vector<8x128xf32>
    %501 = vector.extract_strided_slice %492 {offsets = [0, 128], sizes = [8, 128], strides = [1, 1]} : vector<8x512xf32> to vector<8x128xf32>
    %cst_202 = arith.constant 5.000000e-01 : f32
    %502 = vector.broadcast %cst_202 : f32 to vector<8x128xf32>
    %503 = arith.mulf %502, %501 : vector<8x128xf32>
    %504 = math.tanh %503 : vector<8x128xf32>
    %cst_203 = arith.constant 5.000000e-01 : f32
    %505 = vector.broadcast %cst_203 : f32 to vector<8x128xf32>
    %506 = arith.mulf %505, %504 : vector<8x128xf32>
    %cst_204 = arith.constant 5.000000e-01 : f32
    %507 = vector.broadcast %cst_204 : f32 to vector<8x128xf32>
    %508 = arith.addf %506, %507 : vector<8x128xf32>
    %509 = vector.extract_strided_slice %492 {offsets = [0, 256], sizes = [8, 128], strides = [1, 1]} : vector<8x512xf32> to vector<8x128xf32>
    %510 = math.tanh %509 : vector<8x128xf32>
    %511 = vector.extract_strided_slice %492 {offsets = [0, 384], sizes = [8, 128], strides = [1, 1]} : vector<8x512xf32> to vector<8x128xf32>
    %cst_205 = arith.constant 5.000000e-01 : f32
    %512 = vector.broadcast %cst_205 : f32 to vector<8x128xf32>
    %513 = arith.mulf %512, %511 : vector<8x128xf32>
    %514 = math.tanh %513 : vector<8x128xf32>
    %cst_206 = arith.constant 5.000000e-01 : f32
    %515 = vector.broadcast %cst_206 : f32 to vector<8x128xf32>
    %516 = arith.mulf %515, %514 : vector<8x128xf32>
    %cst_207 = arith.constant 5.000000e-01 : f32
    %517 = vector.broadcast %cst_207 : f32 to vector<8x128xf32>
    %518 = arith.addf %516, %517 : vector<8x128xf32>
    %519 = arith.mulf %508, %484 : vector<8x128xf32>
    %520 = arith.mulf %500, %510 : vector<8x128xf32>
    %521 = arith.addf %519, %520 : vector<8x128xf32>
    %522 = math.tanh %521 : vector<8x128xf32>
    %523 = arith.mulf %518, %522 : vector<8x128xf32>
    %c56_208 = arith.constant 56 : index
    %c0_209 = arith.constant 0 : index
    %524 = vector.load %arg12[%c56_208, %c0_209] : memref<80x128xf32, #tpu.memory_space<vmem>>, vector<8x128xf32>
    tpu.vector_store %arg12[%c56_208, %c0_209], %523 {strides = array<i32>} : memref<80x128xf32, #tpu.memory_space<vmem>>, vector<8x128xf32>,
    %c112 = arith.constant 112 : index
    %c0_210 = arith.constant 0 : index
    %525 = vector.load %arg11[%c112, %c0_210] : memref<128x512xf32, #tpu.memory_space<vmem>>, vector<8x512xf32>
    %526 = arith.truncf %523 : vector<8x128xf32> to vector<8x128xbf16>
    %c0_211 = arith.constant 0 : index
    %c0_212 = arith.constant 0 : index
    %527 = vector.load %arg4[%c0_211, %c0_212] : memref<128x512xbf16, #tpu.memory_space<vmem>>, vector<128x512xbf16>
    %cst_213 = arith.constant dense<0.000000e+00> : vector<8x512xf32>
    %528 = tpu.matmul %526, %527, %cst_213 {dimension_numbers = #tpu.dot_dimension_numbers<[1], [0], [0], [1], [0, 0, 1, 1], [], []>} : vector<8x128xbf16>, vector<128x512xbf16>, vector<8x512xf32> -> vector<8x512xf32>
    %529 = arith.addf %525, %528 : vector<8x512xf32>
    %530 = vector.extract_strided_slice %529 {offsets = [0, 0], sizes = [8, 128], strides = [1, 1]} : vector<8x512xf32> to vector<8x128xf32>
    %cst_214 = arith.constant 5.000000e-01 : f32
    %531 = vector.broadcast %cst_214 : f32 to vector<8x128xf32>
    %532 = arith.mulf %531, %530 : vector<8x128xf32>
    %533 = math.tanh %532 : vector<8x128xf32>
    %cst_215 = arith.constant 5.000000e-01 : f32
    %534 = vector.broadcast %cst_215 : f32 to vector<8x128xf32>
    %535 = arith.mulf %534, %533 : vector<8x128xf32>
    %cst_216 = arith.constant 5.000000e-01 : f32
    %536 = vector.broadcast %cst_216 : f32 to vector<8x128xf32>
    %537 = arith.addf %535, %536 : vector<8x128xf32>
    %538 = vector.extract_strided_slice %529 {offsets = [0, 128], sizes = [8, 128], strides = [1, 1]} : vector<8x512xf32> to vector<8x128xf32>
    %cst_217 = arith.constant 5.000000e-01 : f32
    %539 = vector.broadcast %cst_217 : f32 to vector<8x128xf32>
    %540 = arith.mulf %539, %538 : vector<8x128xf32>
    %541 = math.tanh %540 : vector<8x128xf32>
    %cst_218 = arith.constant 5.000000e-01 : f32
    %542 = vector.broadcast %cst_218 : f32 to vector<8x128xf32>
    %543 = arith.mulf %542, %541 : vector<8x128xf32>
    %cst_219 = arith.constant 5.000000e-01 : f32
    %544 = vector.broadcast %cst_219 : f32 to vector<8x128xf32>
    %545 = arith.addf %543, %544 : vector<8x128xf32>
    %546 = vector.extract_strided_slice %529 {offsets = [0, 256], sizes = [8, 128], strides = [1, 1]} : vector<8x512xf32> to vector<8x128xf32>
    %547 = math.tanh %546 : vector<8x128xf32>
    %548 = vector.extract_strided_slice %529 {offsets = [0, 384], sizes = [8, 128], strides = [1, 1]} : vector<8x512xf32> to vector<8x128xf32>
    %cst_220 = arith.constant 5.000000e-01 : f32
    %549 = vector.broadcast %cst_220 : f32 to vector<8x128xf32>
    %550 = arith.mulf %549, %548 : vector<8x128xf32>
    %551 = math.tanh %550 : vector<8x128xf32>
    %cst_221 = arith.constant 5.000000e-01 : f32
    %552 = vector.broadcast %cst_221 : f32 to vector<8x128xf32>
    %553 = arith.mulf %552, %551 : vector<8x128xf32>
    %cst_222 = arith.constant 5.000000e-01 : f32
    %554 = vector.broadcast %cst_222 : f32 to vector<8x128xf32>
    %555 = arith.addf %553, %554 : vector<8x128xf32>
    %556 = arith.mulf %545, %521 : vector<8x128xf32>
    %557 = arith.mulf %537, %547 : vector<8x128xf32>
    %558 = arith.addf %556, %557 : vector<8x128xf32>
    %559 = math.tanh %558 : vector<8x128xf32>
    %560 = arith.mulf %555, %559 : vector<8x128xf32>
    %c64_223 = arith.constant 64 : index
    %c0_224 = arith.constant 0 : index
    %561 = vector.load %arg12[%c64_223, %c0_224] : memref<80x128xf32, #tpu.memory_space<vmem>>, vector<8x128xf32>
    tpu.vector_store %arg12[%c64_223, %c0_224], %560 {strides = array<i32>} : memref<80x128xf32, #tpu.memory_space<vmem>>, vector<8x128xf32>,
    %c120 = arith.constant 120 : index
    %c0_225 = arith.constant 0 : index
    %562 = vector.load %arg11[%c120, %c0_225] : memref<128x512xf32, #tpu.memory_space<vmem>>, vector<8x512xf32>
    %563 = arith.truncf %560 : vector<8x128xf32> to vector<8x128xbf16>
    %c0_226 = arith.constant 0 : index
    %c0_227 = arith.constant 0 : index
    %564 = vector.load %arg4[%c0_226, %c0_227] : memref<128x512xbf16, #tpu.memory_space<vmem>>, vector<128x512xbf16>
    %cst_228 = arith.constant dense<0.000000e+00> : vector<8x512xf32>
    %565 = tpu.matmul %563, %564, %cst_228 {dimension_numbers = #tpu.dot_dimension_numbers<[1], [0], [0], [1], [0, 0, 1, 1], [], []>} : vector<8x128xbf16>, vector<128x512xbf16>, vector<8x512xf32> -> vector<8x512xf32>
    %566 = arith.addf %562, %565 : vector<8x512xf32>
    %567 = vector.extract_strided_slice %566 {offsets = [0, 0], sizes = [8, 128], strides = [1, 1]} : vector<8x512xf32> to vector<8x128xf32>
    %cst_229 = arith.constant 5.000000e-01 : f32
    %568 = vector.broadcast %cst_229 : f32 to vector<8x128xf32>
    %569 = arith.mulf %568, %567 : vector<8x128xf32>
    %570 = math.tanh %569 : vector<8x128xf32>
    %cst_230 = arith.constant 5.000000e-01 : f32
    %571 = vector.broadcast %cst_230 : f32 to vector<8x128xf32>
    %572 = arith.mulf %571, %570 : vector<8x128xf32>
    %cst_231 = arith.constant 5.000000e-01 : f32
    %573 = vector.broadcast %cst_231 : f32 to vector<8x128xf32>
    %574 = arith.addf %572, %573 : vector<8x128xf32>
    %575 = vector.extract_strided_slice %566 {offsets = [0, 128], sizes = [8, 128], strides = [1, 1]} : vector<8x512xf32> to vector<8x128xf32>
    %cst_232 = arith.constant 5.000000e-01 : f32
    %576 = vector.broadcast %cst_232 : f32 to vector<8x128xf32>
    %577 = arith.mulf %576, %575 : vector<8x128xf32>
    %578 = math.tanh %577 : vector<8x128xf32>
    %cst_233 = arith.constant 5.000000e-01 : f32
    %579 = vector.broadcast %cst_233 : f32 to vector<8x128xf32>
    %580 = arith.mulf %579, %578 : vector<8x128xf32>
    %cst_234 = arith.constant 5.000000e-01 : f32
    %581 = vector.broadcast %cst_234 : f32 to vector<8x128xf32>
    %582 = arith.addf %580, %581 : vector<8x128xf32>
    %583 = vector.extract_strided_slice %566 {offsets = [0, 256], sizes = [8, 128], strides = [1, 1]} : vector<8x512xf32> to vector<8x128xf32>
    %584 = math.tanh %583 : vector<8x128xf32>
    %585 = vector.extract_strided_slice %566 {offsets = [0, 384], sizes = [8, 128], strides = [1, 1]} : vector<8x512xf32> to vector<8x128xf32>
    %cst_235 = arith.constant 5.000000e-01 : f32
    %586 = vector.broadcast %cst_235 : f32 to vector<8x128xf32>
    %587 = arith.mulf %586, %585 : vector<8x128xf32>
    %588 = math.tanh %587 : vector<8x128xf32>
    %cst_236 = arith.constant 5.000000e-01 : f32
    %589 = vector.broadcast %cst_236 : f32 to vector<8x128xf32>
    %590 = arith.mulf %589, %588 : vector<8x128xf32>
    %cst_237 = arith.constant 5.000000e-01 : f32
    %591 = vector.broadcast %cst_237 : f32 to vector<8x128xf32>
    %592 = arith.addf %590, %591 : vector<8x128xf32>
    %593 = arith.mulf %582, %558 : vector<8x128xf32>
    %594 = arith.mulf %574, %584 : vector<8x128xf32>
    %595 = arith.addf %593, %594 : vector<8x128xf32>
    %596 = math.tanh %595 : vector<8x128xf32>
    %597 = arith.mulf %592, %596 : vector<8x128xf32>
    %c72_238 = arith.constant 72 : index
    %c0_239 = arith.constant 0 : index
    %598 = vector.load %arg12[%c72_238, %c0_239] : memref<80x128xf32, #tpu.memory_space<vmem>>, vector<8x128xf32>
    tpu.vector_store %arg12[%c72_238, %c0_239], %597 {strides = array<i32>} : memref<80x128xf32, #tpu.memory_space<vmem>>, vector<8x128xf32>,
    %c0_240 = arith.constant 0 : index
    %c0_241 = arith.constant 0 : index
    %599 = vector.load %arg9[%c0_240, %c0_241] : memref<8x128xf32, #tpu.memory_space<vmem>>, vector<8x128xf32>
    tpu.vector_store %arg9[%c0_240, %c0_241], %597 {strides = array<i32>} : memref<8x128xf32, #tpu.memory_space<vmem>>, vector<8x128xf32>,
    %c0_242 = arith.constant 0 : index
    %c0_243 = arith.constant 0 : index
    %600 = vector.load %arg10[%c0_242, %c0_243] : memref<8x128xf32, #tpu.memory_space<vmem>>, vector<8x128xf32>
    tpu.vector_store %arg10[%c0_242, %c0_243], %595 {strides = array<i32>} : memref<8x128xf32, #tpu.memory_space<vmem>>, vector<8x128xf32>,
    %c0_i32_244 = arith.constant 0 : i32
    %601 = tpu.memref_slice %arg15[%c0_i32_244] : memref<2x!tpu.dma_semaphore, #tpu.memory_space<semaphore_mem>> -> memref<1x!tpu.dma_semaphore, #tpu.memory_space<semaphore_mem>>
    %602 = tpu.memref_squeeze %601 : memref<1x!tpu.dma_semaphore, #tpu.memory_space<semaphore_mem>> -> memref<!tpu.dma_semaphore, #tpu.memory_space<semaphore_mem>>
    tpu.wait_dma2 semaphore(%602 : memref<!tpu.dma_semaphore, #tpu.memory_space<semaphore_mem>>) src(%arg6 : memref<128x128xbf16, #tpu.memory_space<any>>) dst(%arg13 : memref<128x128xbf16, #tpu.memory_space<vmem>>)
    %c1_i32_245 = arith.constant 1 : i32
    %603 = tpu.memref_slice %arg15[%c1_i32_245] : memref<2x!tpu.dma_semaphore, #tpu.memory_space<semaphore_mem>> -> memref<1x!tpu.dma_semaphore, #tpu.memory_space<semaphore_mem>>
    %604 = tpu.memref_squeeze %603 : memref<1x!tpu.dma_semaphore, #tpu.memory_space<semaphore_mem>> -> memref<!tpu.dma_semaphore, #tpu.memory_space<semaphore_mem>>
    tpu.wait_dma2 semaphore(%604 : memref<!tpu.dma_semaphore, #tpu.memory_space<semaphore_mem>>) src(%arg7 : memref<1x128xf32, #tpu.memory_space<any>>) dst(%arg14 : memref<1x128xf32, #tpu.memory_space<vmem>>)
    %c0_246 = arith.constant 0 : index
    %c0_247 = arith.constant 0 : index
    %605 = vector.load %arg12[%c0_246, %c0_247] : memref<80x128xf32, #tpu.memory_space<vmem>>, vector<80x128xf32>
    %606 = arith.truncf %605 : vector<80x128xf32> to vector<80x128xbf16>
    %c0_248 = arith.constant 0 : index
    %c0_249 = arith.constant 0 : index
    %607 = vector.load %arg13[%c0_248, %c0_249] : memref<128x128xbf16, #tpu.memory_space<vmem>>, vector<128x128xbf16>
    %cst_250 = arith.constant dense<0.000000e+00> : vector<80x128xf32>
    %608 = tpu.matmul %606, %607, %cst_250 {dimension_numbers = #tpu.dot_dimension_numbers<[1], [0], [0], [1], [0, 0, 1, 1], [], []>} : vector<80x128xbf16>, vector<128x128xbf16>, vector<80x128xf32> -> vector<80x128xf32>
    %c0_251 = arith.constant 0 : index
    %c0_252 = arith.constant 0 : index
    %609 = vector.load %arg14[%c0_251, %c0_252] : memref<1x128xf32, #tpu.memory_space<vmem>>, vector<1x128xf32>
    %610 = vector.broadcast %609 : vector<1x128xf32> to vector<80x128xf32>
    %611 = arith.addf %608, %610 : vector<80x128xf32>
    %c0_253 = arith.constant 0 : index
    %c0_254 = arith.constant 0 : index
    %612 = vector.load %arg8[%c0_253, %c0_254] : memref<80x128xf32, #tpu.memory_space<vmem>>, vector<80x128xf32>
    tpu.vector_store %arg8[%c0_253, %c0_254], %611 {strides = array<i32>} : memref<80x128xf32, #tpu.memory_space<vmem>>, vector<80x128xf32>,
    return
  }
}

</mosaic_0001>

<llo_original>
// kernel: lstm_model_forward.1
$region0: #{lstm_model_forward.1}
  #allocation0 [shape = 'u32[]', space=smem, size = 0x4, offset = 0x4, fixed_abs, tag = 'smem constant byte address 0x4 - core index']
  #allocation1 [shape = 'u32[144,128]{1,0:T(1,128)}', space=vmem, size = 0x12000, scoped, tag = 'internal scratch']
  #allocation2 [shape = 'f32[128,512]{1,0:T(8,128)}', space=vmem, size = 0x40000, scoped, tag = 'scratch operand']
  #allocation3 [shape = 'f32[80,128]{1,0:T(8,128)}', space=vmem, size = 0xa000, scoped, tag = 'scratch operand']
  #allocation4 [shape = 'bf16[128,128]{1,0:T(16,128)(2,1)}', space=vmem, size = 0x8000, scoped, tag = 'scratch operand']
  #allocation5 [shape = 'f32[1,128]{1,0:T(1,128)}', space=vmem, size = 0x200, scoped, tag = 'scratch operand']
  #allocation6 [shape = 's32[2]{0}', space=sflag, size = 0x8, scoped, tag = 'scratch operand']
  #allocation9 [shape = 's32[]', space=sflag, size = 0x4, offset = 0, fixed_abs, tag = 'sflag constant byte address 0x0 - dummy sync flag']
  #allocation10 [shape = 's32[]', space=sflag, size = 0x4, offset = 0, fixed_abs, tag = 'sflag constant byte address 0x0 - dummy sync flag']
  %s0 = inlined_call_operand.vmem [shape: bf16[128,8], index: 0, kind: input, shape index: {}]
  %s1 = inlined_call_operand.vmem [shape: f32[8,128], index: 1, kind: input, shape index: {}]
  %s2 = inlined_call_operand.vmem [shape: f32[8,128], index: 2, kind: input, shape index: {}]
  %s3 = inlined_call_operand.vmem [shape: bf16[8,512], index: 3, kind: input, shape index: {}]
  %s4 = inlined_call_operand.hbm [shape: bf16[128,512], index: 4, kind: input, shape index: {}]
  %s5 = inlined_call_operand.vmem [shape: f32[1,512], index: 5, kind: input, shape index: {}]
  %s6 = inlined_call_operand.vmem [shape: bf16[128,128], index: 6, kind: input, shape index: {}]
  %s7 = inlined_call_operand.vmem [shape: f32[1,128], index: 7, kind: input, shape index: {}]
  %s8 = inlined_call_operand.vmem [shape: f32[80,128], index: 8, kind: output, shape index: {0}]
  %s9 = inlined_call_operand.vmem [shape: f32[8,128], index: 9, kind: output, shape index: {1}]
  %s10 = inlined_call_operand.vmem [shape: f32[8,128], index: 10, kind: output, shape index: {2}]
  %11 = xla_tuple %s8, %s9, %s10
  %s12 = sld [smem:[#allocation0]]
  $region118: #{lstm_model_forward.1} parent=0
    _
  %s14 = ssub.s32 1, %s12
  %s15 = scalar_select 0, %s14, %s12
  $region1: #{lstm_model_forward.1} parent=0
    #allocation7 [shape = 'u8[131072]{0}', space=vmem, size = 0x20000, scoped, tag = 'input window, operand 4, single buffered']
    #allocation8 [shape = 's32[1]{0}', space=sflag, size = 0x4, scoped, tag = 'scoped memory for lstm_model_forward.1']
    %16 = vsyncpa [#allocation8], 0
    // Predicated region
    $region2: #{lstm_model_forward.1} parent=1 // pred_check
      _
    $region3: #{lstm_model_forward.1} parent=1 // pred_check_branch
      %18 = sbr.rel (0) target = $region5
    $region4: #{lstm_model_forward.1} parent=1 // pred_region
      _
    $region5: #{lstm_model_forward.1} parent=1 // pred_fallthru
      _
    // Predicated region
    $region6: #{lstm_model_forward.1} parent=1 // pred_check
      _
    $region7: #{lstm_model_forward.1} parent=1 // pred_check_branch
      %20 = sbr.rel (0) target = $region9
    $region8: #{lstm_model_forward.1} parent=1 // pred_region
      _
    $region9: #{lstm_model_forward.1} parent=1 // pred_fallthru
      _
    // Predicated region
    $region10: #{lstm_model_forward.1} parent=1 // pred_check
      _
    $region11: #{lstm_model_forward.1} parent=1 // pred_check_branch
      %22 = sbr.rel (0) target = $region13
    $region12: #{lstm_model_forward.1} parent=1 // pred_region
      _
    $region13: #{lstm_model_forward.1} parent=1 // pred_fallthru
      _
    // Predicated region
    $region14: #{lstm_model_forward.1} parent=1 // pred_check
      _
    $region15: #{lstm_model_forward.1} parent=1 // pred_check_branch
      %24 = sbr.rel (0) target = $region17
    $region16: #{lstm_model_forward.1} parent=1 // pred_region
      _
    $region17: #{lstm_model_forward.1} parent=1 // pred_fallthru
      _
    // Predicated region
    $region18: #{lstm_model_forward.1} parent=1 // pred_check
      _
    $region19: #{lstm_model_forward.1} parent=1 // pred_check_branch
      %26 = sbr.rel (0) target = $region21
    $region20: #{lstm_model_forward.1} parent=1 // pred_region
      %s28 = ssub.s32 4096, 4096
      %29 = vsyncadd [#allocation8], %s28
      %s30 = sshll.u32 [#allocation7], 4
      %s31 = int_to_ptr.vmem [resolvable:$true] %s30
      %36 = dma.hbm_to_vmem [thread:$0]  %s4, 4096, %s31, [#allocation8], 256, 256, 16
    $region21: #{lstm_model_forward.1} parent=1 // pred_fallthru
      _
    // Predicated region
    $region22: #{lstm_model_forward.1} parent=1 // pred_check
      _
    $region23: #{lstm_model_forward.1} parent=1 // pred_check_branch
      %38 = sbr.rel (0) target = $region25
    $region24: #{lstm_model_forward.1} parent=1 // pred_region
      _
    $region25: #{lstm_model_forward.1} parent=1 // pred_fallthru
      _
    // Predicated region
    $region26: #{lstm_model_forward.1} parent=1 // pred_check
      _
    $region27: #{lstm_model_forward.1} parent=1 // pred_check_branch
      %40 = sbr.rel (0) target = $region29
    $region28: #{lstm_model_forward.1} parent=1 // pred_region
      %41 = dma.done [#allocation8], 4096
    $region29: #{lstm_model_forward.1} parent=1 // pred_fallthru
      _
    %p44 = scmp.lt.u32.totalorder 64, 8
    %p45 = pneg %p44
    // Predicated region
    $region30: #{lstm_model_forward.1} parent=1 // pred_check
      _
    $region31: #{lstm_model_forward.1} parent=1 // pred_check_branch
      %47 = sbr.rel (%p44) target = $region33
    $region32: #{lstm_model_forward.1} parent=1 // pred_region
      %s62 = sand.u32 64, 7
      %p63 = scmp.eq.s32.totalorder %s62, 0
      // Predicated region
      $region45: #{lstm_model_forward.1} parent=32 // pred_check
        %p64 = pneg %p63
      $region46: #{lstm_model_forward.1} parent=32 // pred_check_branch
        %66 = sbr.rel (%p64) target = $region48
      $region47: #{lstm_model_forward.1} parent=32 // pred_region
        loop: start=0, step=1, limit=1
        $region49: #{lstm_model_forward.1} parent=47 // loop_pre_header
          _
        $region50: #{lstm_model_forward.1} parent=47 // loop_header
          %s68 = sphi 0, %s72
          %p69 = scmp.ge.s32.totalorder %s68, 1
          %s73 = sphi %s6, %s6
          %s74 = sphi [#allocation4], [#allocation4]
        $region51: #{lstm_model_forward.1} parent=47 // loop_header_branch
          %71 = sbr.rel (%p69) target = $region55
        $region52: #{lstm_model_forward.1} parent=47 // loop_body
          %v75 = vld [vmem:[%s73] sm:$0xff]
          %76 = vst [vmem:[%s74] sm:$0xff] %v75
          %v77 = vld [vmem:[%s73 + $0x8] sm:$0xff]
          %78 = vst [vmem:[%s74 + $0x8] sm:$0xff] %v77
          %v79 = vld [vmem:[%s73 + $0x10] sm:$0xff]
          %80 = vst [vmem:[%s74 + $0x10] sm:$0xff] %v79
          %v81 = vld [vmem:[%s73 + $0x18] sm:$0xff]
          %82 = vst [vmem:[%s74 + $0x18] sm:$0xff] %v81
          %v83 = vld [vmem:[%s73 + $0x20] sm:$0xff]
          %84 = vst [vmem:[%s74 + $0x20] sm:$0xff] %v83
          %v85 = vld [vmem:[%s73 + $0x28] sm:$0xff]
          %86 = vst [vmem:[%s74 + $0x28] sm:$0xff] %v85
          %v87 = vld [vmem:[%s73 + $0x30] sm:$0xff]
          %88 = vst [vmem:[%s74 + $0x30] sm:$0xff] %v87
          %v89 = vld [vmem:[%s73 + $0x38] sm:$0xff]
          %90 = vst [vmem:[%s74 + $0x38] sm:$0xff] %v89
        $region53: #{lstm_model_forward.1} parent=47 // loop_footer
          %s72 = sadd.s32 1, %s68
        $region54: #{lstm_model_forward.1} parent=47 // loop_footer_branch
          %67 = sbr.rel target = $region50
        $region55: #{lstm_model_forward.1} parent=47 // loop_exit
          _
      $region48: #{lstm_model_forward.1} parent=32 // pred_fallthru
        _
      %p91 = pneg %p63
      // Predicated region
      $region56: #{lstm_model_forward.1} parent=32 // pred_check
        _
      $region57: #{lstm_model_forward.1} parent=32 // pred_check_branch
        %93 = sbr.rel (%p63) target = $region59
      $region58: #{lstm_model_forward.1} parent=32 // pred_region
        %s94 = sand.u32 64, 7
      $region59: #{lstm_model_forward.1} parent=32 // pred_fallthru
        _
    $region33: #{lstm_model_forward.1} parent=1 // pred_fallthru
      _
    // Predicated region
    $region34: #{lstm_model_forward.1} parent=1 // pred_check
      %p48 = pneg %p44
    $region35: #{lstm_model_forward.1} parent=1 // pred_check_branch
      %50 = sbr.rel (%p48) target = $region37
    $region36: #{lstm_model_forward.1} parent=1 // pred_region
      %s51 = sshllo.u32 0, 64
      loop: start=0, step=1, limit=1
      $region38: #{lstm_model_forward.1} parent=36 // loop_pre_header
        _
      $region39: #{lstm_model_forward.1} parent=36 // loop_header
        %s53 = sphi 0, %s57
        %p54 = scmp.ge.s32.totalorder %s53, 1
        %s58 = sphi %s6, %s6
        %s59 = sphi [#allocation4], [#allocation4]
      $region40: #{lstm_model_forward.1} parent=36 // loop_header_branch
        %56 = sbr.rel (%p54) target = $region44
      $region41: #{lstm_model_forward.1} parent=36 // loop_body
        %v60 = vld [vmem:[%s58] sm:%s51]
        %61 = vst [vmem:[%s59] sm:%s51] %v60
      $region42: #{lstm_model_forward.1} parent=36 // loop_footer
        %s57 = sadd.s32 1, %s53
      $region43: #{lstm_model_forward.1} parent=36 // loop_footer_branch
        %52 = sbr.rel target = $region39
      $region44: #{lstm_model_forward.1} parent=36 // loop_exit
        _
    $region37: #{lstm_model_forward.1} parent=1 // pred_fallthru
      _
    // Predicated region
    $region60: #{lstm_model_forward.1} parent=1 // pred_check
      _
    $region61: #{lstm_model_forward.1} parent=1 // pred_check_branch
      %97 = sbr.rel (0) target = $region63
    $region62: #{lstm_model_forward.1} parent=1 // pred_region
      %98 = vsyncadd [#allocation6], 1024
    $region63: #{lstm_model_forward.1} parent=1 // pred_fallthru
      _
    %s99 = scalar_lea.sflag [#allocation6], 1
    %p101 = scmp.lt.u32.totalorder 1, 8
    %p102 = pneg %p101
    // Predicated region
    $region64: #{lstm_model_forward.1} parent=1 // pred_check
      _
    $region65: #{lstm_model_forward.1} parent=1 // pred_check_branch
      %104 = sbr.rel (%p101) target = $region67
    $region66: #{lstm_model_forward.1} parent=1 // pred_region
      %s119 = sand.u32 1, 7
      %p120 = scmp.eq.s32.totalorder %s119, 0
      %p121 = pneg %p120
      // Predicated region
      $region79: #{lstm_model_forward.1} parent=66 // pred_check
        _
      $region80: #{lstm_model_forward.1} parent=66 // pred_check_branch
        %123 = sbr.rel (%p120) target = $region82
      $region81: #{lstm_model_forward.1} parent=66 // pred_region
        %s124 = sand.u32 1, 7
        %s125 = ssub.s32 1, %s124
        %s126 = scalar_lea.vmem %s7, %s125
        %s127 = ssub.s32 1, %s124
        %s128 = scalar_lea.vmem [#allocation5], %s127
        %s129 = sshllo.u32 0, %s124
        loop: start=0, step=1, limit=1
        $region83: #{lstm_model_forward.1} parent=81 // loop_pre_header
          _
        $region84: #{lstm_model_forward.1} parent=81 // loop_header
          %s131 = sphi 0, %s135
          %p132 = scmp.ge.s32.totalorder %s131, 1
          %s136 = sphi %s126, %s126
          %s137 = sphi %s128, %s128
        $region85: #{lstm_model_forward.1} parent=81 // loop_header_branch
          %134 = sbr.rel (%p132) target = $region89
        $region86: #{lstm_model_forward.1} parent=81 // loop_body
          %v138 = vld [vmem:[%s136] sm:%s129]
          %139 = vst [vmem:[%s137] sm:%s129] %v138
        $region87: #{lstm_model_forward.1} parent=81 // loop_footer
          %s135 = sadd.s32 1, %s131
        $region88: #{lstm_model_forward.1} parent=81 // loop_footer_branch
          %130 = sbr.rel target = $region84
        $region89: #{lstm_model_forward.1} parent=81 // loop_exit
          _
      $region82: #{lstm_model_forward.1} parent=66 // pred_fallthru
        _
    $region67: #{lstm_model_forward.1} parent=1 // pred_fallthru
      _
    // Predicated region
    $region68: #{lstm_model_forward.1} parent=1 // pred_check
      %p105 = pneg %p101
    $region69: #{lstm_model_forward.1} parent=1 // pred_check_branch
      %107 = sbr.rel (%p105) target = $region71
    $region70: #{lstm_model_forward.1} parent=1 // pred_region
      %s108 = sshllo.u32 0, 1
      loop: start=0, step=1, limit=1
      $region72: #{lstm_model_forward.1} parent=70 // loop_pre_header
        _
      $region73: #{lstm_model_forward.1} parent=70 // loop_header
        %s110 = sphi 0, %s114
        %p111 = scmp.ge.s32.totalorder %s110, 1
        %s115 = sphi %s7, %s7
        %s116 = sphi [#allocation5], [#allocation5]
      $region74: #{lstm_model_forward.1} parent=70 // loop_header_branch
        %113 = sbr.rel (%p111) target = $region78
      $region75: #{lstm_model_forward.1} parent=70 // loop_body
        %v117 = vld [vmem:[%s115] sm:%s108]
        %118 = vst [vmem:[%s116] sm:%s108] %v117
      $region76: #{lstm_model_forward.1} parent=70 // loop_footer
        %s114 = sadd.s32 1, %s110
      $region77: #{lstm_model_forward.1} parent=70 // loop_footer_branch
        %109 = sbr.rel target = $region73
      $region78: #{lstm_model_forward.1} parent=70 // loop_exit
        _
    $region71: #{lstm_model_forward.1} parent=1 // pred_fallthru
      _
    // Predicated region
    $region90: #{lstm_model_forward.1} parent=1 // pred_check
      _
    $region91: #{lstm_model_forward.1} parent=1 // pred_check_branch
      %142 = sbr.rel (0) target = $region93
    $region92: #{lstm_model_forward.1} parent=1 // pred_region
      %143 = vsyncadd %s99, 16
    $region93: #{lstm_model_forward.1} parent=1 // pred_fallthru
      _
    %v144 = vld [vmem:[%s0] sm:$0xf]
    %v145 = vld [vmem:[%s0 + $0x4] sm:$0xf]
    %v146 = vld [vmem:[%s0 + $0x8] sm:$0xf]
    %v147 = vld [vmem:[%s0 + $0xc] sm:$0xf]
    %v148 = vld [vmem:[%s0 + $0x10] sm:$0xf]
    %v149 = vld [vmem:[%s0 + $0x14] sm:$0xf]
    %v150 = vld [vmem:[%s0 + $0x18] sm:$0xf]
    %v151 = vld [vmem:[%s0 + $0x1c] sm:$0xf]
    %v152 = vld [vmem:[%s0 + $0x20] sm:$0xf]
    %v153 = vld [vmem:[%s0 + $0x24] sm:$0xf]
    %v154 = vld [vmem:[%s0 + $0x28] sm:$0xf]
    %v155 = vld [vmem:[%s0 + $0x2c] sm:$0xf]
    %v156 = vld [vmem:[%s0 + $0x30] sm:$0xf]
    %v157 = vld [vmem:[%s0 + $0x34] sm:$0xf]
    %v158 = vld [vmem:[%s0 + $0x38] sm:$0xf]
    %v159 = vld [vmem:[%s0 + $0x3c] sm:$0xf]
    %v160 = vld [vmem:[%s3] sm:$0xff]
    %v161 = vld [vmem:[%s3 + $0x8] sm:$0xff]
    %v162 = vld [vmem:[%s5] sm:$0xf]
    %v164 = vlaneseq
    %v165 = vshrl.u32 %v164, 7
    %v166 = vsub.s32 0, %v165
    %v167 = vrot.slane %v162, %v166
    %v168 = vlaneseq
    %v169 = vshrl.u32 %v168, 7
    %v170 = vsub.s32 1, %v169
    %v171 = vrot.slane %v162, %v170
    %v172 = vlaneseq
    %v173 = vshrl.u32 %v172, 7
    %v174 = vsub.s32 2, %v173
    %v175 = vrot.slane %v162, %v174
    %v176 = vlaneseq
    %v177 = vshrl.u32 %v176, 7
    %v178 = vsub.s32 3, %v177
    %v179 = vrot.slane %v162, %v178
    %v200 = vunpack.c.l.b16 %v144
    %v201 = vunpack.c.l.b16 %v145
    %v202 = vunpack.c.l.b16 %v146
    %v203 = vunpack.c.l.b16 %v147
    %v204 = vunpack.c.l.b16 %v148
    %v205 = vunpack.c.l.b16 %v149
    %v206 = vunpack.c.l.b16 %v150
    %v207 = vunpack.c.l.b16 %v151
    %v208 = vunpack.c.l.b16 %v152
    %v209 = vunpack.c.l.b16 %v153
    %v210 = vunpack.c.l.b16 %v154
    %v211 = vunpack.c.l.b16 %v155
    %v212 = vunpack.c.l.b16 %v156
    %v213 = vunpack.c.l.b16 %v157
    %v214 = vunpack.c.l.b16 %v158
    %v215 = vunpack.c.l.b16 %v159
    %v216 = vpack.c.b16 %v201, %v200
    %v217 = vpack.c.b16 %v203, %v202
    %v218 = vpack.c.b16 %v205, %v204
    %v219 = vpack.c.b16 %v207, %v206
    %v220 = vpack.c.b16 %v209, %v208
    %v221 = vpack.c.b16 %v211, %v210
    %v222 = vpack.c.b16 %v213, %v212
    %v223 = vpack.c.b16 %v215, %v214
    %v226 = vunpack.c.l.b16 %v160
    %v227 = vunpack.c.h.b16 %v160
    %v228 = vunpack.c.l.b16 %v161
    %v229 = vunpack.c.h.b16 %v161
    %v230 = vpack.c.b16 %v226, %v226
    %v231 = vpack.c.b16 %v227, %v227
    %v232 = vpack.c.b16 %v228, %v228
    %v233 = vpack.c.b16 %v229, %v229
    %vm234 = vcmask 64512
    %v236 = vsel %vm234, %v216, 0
    %v239 = vsel %vm234, %v217, 0
    %v242 = vsel %vm234, %v218, 0
    %v245 = vsel %vm234, %v219, 0
    %v248 = vsel %vm234, %v220, 0
    %v251 = vsel %vm234, %v221, 0
    %v254 = vsel %vm234, %v222, 0
    %v257 = vsel %vm234, %v223, 0
    %vm259 = vcmask 1043456
    %v261 = vsel %vm259, %v230, 0
    %v264 = vsel %vm259, %v231, 0
    %v267 = vsel %vm259, %v232, 0
    %v270 = vsel %vm259, %v233, 0
    %272 = vmatprep.subr.bf16.mxu0 %v264
    %273 = vmatpush1.bf16.msra.mxu0 %v261
    %274 = vmatprep.subr.bf16.mxu0 0
    %275 = vmatpush1.bf16.msra.mxu0 0
    %276 = vmatprep.subr.bf16.mxu0 0
    %277 = vmatpush1.bf16.msra.mxu0 0
    %278 = vmatprep.subr.bf16.mxu0 0
    %279 = vmatpush1.bf16.msra.mxu0 0
    %280 = vmatprep.subr.bf16.mxu0 0
    %281 = vmatpush1.bf16.msra.mxu0 0
    %282 = vmatprep.subr.bf16.mxu0 0
    %283 = vmatpush1.bf16.msra.mxu0 0
    %284 = vmatprep.subr.bf16.mxu0 0
    %285 = vmatpush1.bf16.msra.mxu0 0
    %286 = vmatprep.subr.bf16.mxu0 0
    %287 = vmatpush1.bf16.msra.mxu0 0
    %288 = vmatprep.subr.bf16.mxu0 0
    %289 = vmatpush1.bf16.msra.mxu0 0
    %290 = vmatprep.subr.bf16.mxu0 0
    %291 = vmatpush1.bf16.msra.mxu0 0
    %292 = vmatprep.subr.bf16.mxu0 0
    %293 = vmatpush1.bf16.msra.mxu0 0
    %294 = vmatprep.subr.bf16.mxu0 0
    %295 = vmatpush1.bf16.msra.mxu0 0
    %296 = vmatprep.subr.bf16.mxu0 0
    %297 = vmatpush1.bf16.msra.mxu0 0
    %298 = vmatprep.subr.bf16.mxu0 0
    %299 = vmatpush1.bf16.msra.mxu0 0
    %300 = vmatprep.subr.bf16.mxu0 0
    %301 = vmatpush1.bf16.msra.mxu0 0
    %302 = vmatprep.subr.bf16.mxu0 0
    %303 = vmatpush1.bf16.msra.mxu0 0
    %304 = vmatprep.mubr.bf16.mxu0 0
    %305 = vmatmul.mubr.bf16.gmra.mrb[0].mxu0 %v236
    %v306 = vpop.f32.mrb[0].mxu0
    %v307 = vadd.f32 %v167, %v306
    %v308 = vpop.f32.mrb[0].mxu0
    %v309 = vadd.f32 %v171, %v308
    %v310 = vpop.f32.mrb[0].mxu0
    %v311 = vadd.f32 %v167, %v310
    %v312 = vpop.f32.mrb[0].mxu0
    %v313 = vadd.f32 %v171, %v312
    %314 = vmatprep.mubr.bf16.mxu0 0
    %315 = vmatmul.mubr.bf16.gmra.mrb[0].mxu0 %v239
    %v316 = vpop.f32.mrb[0].mxu0
    %v317 = vadd.f32 %v167, %v316
    %v318 = vpop.f32.mrb[0].mxu0
    %v319 = vadd.f32 %v171, %v318
    %v320 = vpop.f32.mrb[0].mxu0
    %v321 = vadd.f32 %v167, %v320
    %v322 = vpop.f32.mrb[0].mxu0
    %v323 = vadd.f32 %v171, %v322
    %324 = vmatprep.mubr.bf16.mxu0 0
    %325 = vmatmul.mubr.bf16.gmra.mrb[0].mxu0 %v242
    %v326 = vpop.f32.mrb[0].mxu0
    %v327 = vadd.f32 %v167, %v326
    %v328 = vpop.f32.mrb[0].mxu0
    %v329 = vadd.f32 %v171, %v328
    %v330 = vpop.f32.mrb[0].mxu0
    %v331 = vadd.f32 %v167, %v330
    %v332 = vpop.f32.mrb[0].mxu0
    %v333 = vadd.f32 %v171, %v332
    %334 = vmatprep.mubr.bf16.mxu0 0
    %335 = vmatmul.mubr.bf16.gmra.mrb[0].mxu0 %v245
    %v336 = vpop.f32.mrb[0].mxu0
    %v337 = vadd.f32 %v167, %v336
    %v338 = vpop.f32.mrb[0].mxu0
    %v339 = vadd.f32 %v171, %v338
    %v340 = vpop.f32.mrb[0].mxu0
    %v341 = vadd.f32 %v167, %v340
    %v342 = vpop.f32.mrb[0].mxu0
    %v343 = vadd.f32 %v171, %v342
    %344 = vmatprep.mubr.bf16.mxu0 0
    %345 = vmatmul.mubr.bf16.gmra.mrb[0].mxu0 %v248
    %v346 = vpop.f32.mrb[0].mxu0
    %v347 = vadd.f32 %v167, %v346
    %v348 = vpop.f32.mrb[0].mxu0
    %v349 = vadd.f32 %v171, %v348
    %v350 = vpop.f32.mrb[0].mxu0
    %v351 = vadd.f32 %v167, %v350
    %v352 = vpop.f32.mrb[0].mxu0
    %v353 = vadd.f32 %v171, %v352
    %354 = vmatprep.mubr.bf16.mxu0 0
    %355 = vmatmul.mubr.bf16.gmra.mrb[0].mxu0 %v251
    %v356 = vpop.f32.mrb[0].mxu0
    %v357 = vadd.f32 %v167, %v356
    %v358 = vpop.f32.mrb[0].mxu0
    %v359 = vadd.f32 %v171, %v358
    %v360 = vpop.f32.mrb[0].mxu0
    %v361 = vadd.f32 %v167, %v360
    %v362 = vpop.f32.mrb[0].mxu0
    %v363 = vadd.f32 %v171, %v362
    %364 = vmatprep.mubr.bf16.mxu0 0
    %365 = vmatmul.mubr.bf16.gmra.mrb[0].mxu0 %v254
    %v366 = vpop.f32.mrb[0].mxu0
    %v367 = vadd.f32 %v167, %v366
    %v368 = vpop.f32.mrb[0].mxu0
    %v369 = vadd.f32 %v171, %v368
    %v370 = vpop.f32.mrb[0].mxu0
    %v371 = vadd.f32 %v167, %v370
    %v372 = vpop.f32.mrb[0].mxu0
    %v373 = vadd.f32 %v171, %v372
    %374 = vmatprep.mubr.bf16.mxu0 0
    %375 = vmatmul.mubr.bf16.gmra.mrb[0].mxu0 %v257
    %v376 = vpop.f32.mrb[0].mxu0
    %v377 = vadd.f32 %v167, %v376
    %v378 = vpop.f32.mrb[0].mxu0
    %v379 = vadd.f32 %v171, %v378
    %v380 = vpop.f32.mrb[0].mxu0
    %v381 = vadd.f32 %v167, %v380
    %v382 = vpop.f32.mrb[0].mxu0
    %v383 = vadd.f32 %v171, %v382
    %384 = vdwg.mxu0
    %385 = vmatprep.subr.bf16.mxu0 %v270
    %386 = vmatpush1.bf16.msra.mxu0 %v267
    %387 = vmatprep.subr.bf16.mxu0 0
    %388 = vmatpush1.bf16.msra.mxu0 0
    %389 = vmatprep.subr.bf16.mxu0 0
    %390 = vmatpush1.bf16.msra.mxu0 0
    %391 = vmatprep.subr.bf16.mxu0 0
    %392 = vmatpush1.bf16.msra.mxu0 0
    %393 = vmatprep.subr.bf16.mxu0 0
    %394 = vmatpush1.bf16.msra.mxu0 0
    %395 = vmatprep.subr.bf16.mxu0 0
    %396 = vmatpush1.bf16.msra.mxu0 0
    %397 = vmatprep.subr.bf16.mxu0 0
    %398 = vmatpush1.bf16.msra.mxu0 0
    %399 = vmatprep.subr.bf16.mxu0 0
    %400 = vmatpush1.bf16.msra.mxu0 0
    %401 = vmatprep.subr.bf16.mxu0 0
    %402 = vmatpush1.bf16.msra.mxu0 0
    %403 = vmatprep.subr.bf16.mxu0 0
    %404 = vmatpush1.bf16.msra.mxu0 0
    %405 = vmatprep.subr.bf16.mxu0 0
    %406 = vmatpush1.bf16.msra.mxu0 0
    %407 = vmatprep.subr.bf16.mxu0 0
    %408 = vmatpush1.bf16.msra.mxu0 0
    %409 = vmatprep.subr.bf16.mxu0 0
    %410 = vmatpush1.bf16.msra.mxu0 0
    %411 = vmatprep.subr.bf16.mxu0 0
    %412 = vmatpush1.bf16.msra.mxu0 0
    %413 = vmatprep.subr.bf16.mxu0 0
    %414 = vmatpush1.bf16.msra.mxu0 0
    %415 = vmatprep.subr.bf16.mxu0 0
    %416 = vmatpush1.bf16.msra.mxu0 0
    %417 = vmatprep.mubr.bf16.mxu0 0
    %418 = vmatmul.mubr.bf16.gmra.mrb[0].mxu0 %v236
    %v419 = vpop.f32.mrb[0].mxu0
    %v420 = vadd.f32 %v175, %v419
    %v421 = vpop.f32.mrb[0].mxu0
    %v422 = vadd.f32 %v179, %v421
    %v423 = vpop.f32.mrb[0].mxu0
    %v424 = vadd.f32 %v175, %v423
    %v425 = vpop.f32.mrb[0].mxu0
    %v426 = vadd.f32 %v179, %v425
    %427 = vmatprep.mubr.bf16.mxu0 0
    %428 = vmatmul.mubr.bf16.gmra.mrb[0].mxu0 %v239
    %v429 = vpop.f32.mrb[0].mxu0
    %v430 = vadd.f32 %v175, %v429
    %v431 = vpop.f32.mrb[0].mxu0
    %v432 = vadd.f32 %v179, %v431
    %v433 = vpop.f32.mrb[0].mxu0
    %v434 = vadd.f32 %v175, %v433
    %v435 = vpop.f32.mrb[0].mxu0
    %v436 = vadd.f32 %v179, %v435
    %437 = vmatprep.mubr.bf16.mxu0 0
    %438 = vmatmul.mubr.bf16.gmra.mrb[0].mxu0 %v242
    %v439 = vpop.f32.mrb[0].mxu0
    %v440 = vadd.f32 %v175, %v439
    %v441 = vpop.f32.mrb[0].mxu0
    %v442 = vadd.f32 %v179, %v441
    %v443 = vpop.f32.mrb[0].mxu0
    %v444 = vadd.f32 %v175, %v443
    %v445 = vpop.f32.mrb[0].mxu0
    %v446 = vadd.f32 %v179, %v445
    %447 = vmatprep.mubr.bf16.mxu0 0
    %448 = vmatmul.mubr.bf16.gmra.mrb[0].mxu0 %v245
    %v449 = vpop.f32.mrb[0].mxu0
    %v450 = vadd.f32 %v175, %v449
    %v451 = vpop.f32.mrb[0].mxu0
    %v452 = vadd.f32 %v179, %v451
    %v453 = vpop.f32.mrb[0].mxu0
    %v454 = vadd.f32 %v175, %v453
    %v455 = vpop.f32.mrb[0].mxu0
    %v456 = vadd.f32 %v179, %v455
    %457 = vmatprep.mubr.bf16.mxu0 0
    %458 = vmatmul.mubr.bf16.gmra.mrb[0].mxu0 %v248
    %v459 = vpop.f32.mrb[0].mxu0
    %v460 = vadd.f32 %v175, %v459
    %v461 = vpop.f32.mrb[0].mxu0
    %v462 = vadd.f32 %v179, %v461
    %v463 = vpop.f32.mrb[0].mxu0
    %v464 = vadd.f32 %v175, %v463
    %v465 = vpop.f32.mrb[0].mxu0
    %v466 = vadd.f32 %v179, %v465
    %467 = vmatprep.mubr.bf16.mxu0 0
    %468 = vmatmul.mubr.bf16.gmra.mrb[0].mxu0 %v251
    %v469 = vpop.f32.mrb[0].mxu0
    %v470 = vadd.f32 %v175, %v469
    %v471 = vpop.f32.mrb[0].mxu0
    %v472 = vadd.f32 %v179, %v471
    %v473 = vpop.f32.mrb[0].mxu0
    %v474 = vadd.f32 %v175, %v473
    %v475 = vpop.f32.mrb[0].mxu0
    %v476 = vadd.f32 %v179, %v475
    %477 = vmatprep.mubr.bf16.mxu0 0
    %478 = vmatmul.mubr.bf16.gmra.mrb[0].mxu0 %v254
    %v479 = vpop.f32.mrb[0].mxu0
    %v480 = vadd.f32 %v175, %v479
    %v481 = vpop.f32.mrb[0].mxu0
    %v482 = vadd.f32 %v179, %v481
    %v483 = vpop.f32.mrb[0].mxu0
    %v484 = vadd.f32 %v175, %v483
    %v485 = vpop.f32.mrb[0].mxu0
    %v486 = vadd.f32 %v179, %v485
    %487 = vmatprep.mubr.bf16.mxu0 0
    %488 = vmatmul.mubr.bf16.gmra.mrb[0].mxu0 %v257
    %v489 = vpop.f32.mrb[0].mxu0
    %v490 = vadd.f32 %v175, %v489
    %v491 = vpop.f32.mrb[0].mxu0
    %v492 = vadd.f32 %v179, %v491
    %v493 = vpop.f32.mrb[0].mxu0
    %v494 = vadd.f32 %v175, %v493
    %v495 = vpop.f32.mrb[0].mxu0
    %v496 = vadd.f32 %v179, %v495
    %497 = vdwg.mxu0
    %498 = vst [vmem:[#allocation2] sm:$0xff] %v307
    %499 = vst [vmem:[#allocation2 + $0x8] sm:$0xff] %v309
    %500 = vst [vmem:[#allocation2 + $0x10] sm:$0xff] %v420
    %501 = vst [vmem:[#allocation2 + $0x18] sm:$0xff] %v422
    %502 = vst [vmem:[#allocation2 + $0x20] sm:$0xff] %v311
    %503 = vst [vmem:[#allocation2 + $0x28] sm:$0xff] %v313
    %504 = vst [vmem:[#allocation2 + $0x30] sm:$0xff] %v424
    %505 = vst [vmem:[#allocation2 + $0x38] sm:$0xff] %v426
    %506 = vst [vmem:[#allocation2 + $0x40] sm:$0xff] %v317
    %507 = vst [vmem:[#allocation2 + $0x48] sm:$0xff] %v319
    %508 = vst [vmem:[#allocation2 + $0x50] sm:$0xff] %v430
    %509 = vst [vmem:[#allocation2 + $0x58] sm:$0xff] %v432
    %510 = vst [vmem:[#allocation2 + $0x60] sm:$0xff] %v321
    %511 = vst [vmem:[#allocation2 + $0x68] sm:$0xff] %v323
    %512 = vst [vmem:[#allocation2 + $0x70] sm:$0xff] %v434
    %513 = vst [vmem:[#allocation2 + $0x78] sm:$0xff] %v436
    %514 = vst [vmem:[#allocation2 + $0x80] sm:$0xff] %v327
    %515 = vst [vmem:[#allocation2 + $0x88] sm:$0xff] %v329
    %516 = vst [vmem:[#allocation2 + $0x90] sm:$0xff] %v440
    %517 = vst [vmem:[#allocation2 + $0x98] sm:$0xff] %v442
    %518 = vst [vmem:[#allocation2 + $0xa0] sm:$0xff] %v331
    %519 = vst [vmem:[#allocation2 + $0xa8] sm:$0xff] %v333
    %520 = vst [vmem:[#allocation2 + $0xb0] sm:$0xff] %v444
    %521 = vst [vmem:[#allocation2 + $0xb8] sm:$0xff] %v446
    %522 = vst [vmem:[#allocation2 + $0xc0] sm:$0xff] %v337
    %523 = vst [vmem:[#allocation2 + $0xc8] sm:$0xff] %v339
    %524 = vst [vmem:[#allocation2 + $0xd0] sm:$0xff] %v450
    %525 = vst [vmem:[#allocation2 + $0xd8] sm:$0xff] %v452
    %526 = vst [vmem:[#allocation2 + $0xe0] sm:$0xff] %v341
    %527 = vst [vmem:[#allocation2 + $0xe8] sm:$0xff] %v343
    %528 = vst [vmem:[#allocation2 + $0xf0] sm:$0xff] %v454
    %529 = vst [vmem:[#allocation2 + $0xf8] sm:$0xff] %v456
    %530 = vst [vmem:[#allocation2 + $0x100] sm:$0xff] %v347
    %531 = vst [vmem:[#allocation2 + $0x108] sm:$0xff] %v349
    %532 = vst [vmem:[#allocation2 + $0x110] sm:$0xff] %v460
    %533 = vst [vmem:[#allocation2 + $0x118] sm:$0xff] %v462
    %534 = vst [vmem:[#allocation2 + $0x120] sm:$0xff] %v351
    %535 = vst [vmem:[#allocation2 + $0x128] sm:$0xff] %v353
    %536 = vst [vmem:[#allocation2 + $0x130] sm:$0xff] %v464
    %537 = vst [vmem:[#allocation2 + $0x138] sm:$0xff] %v466
    %538 = vst [vmem:[#allocation2 + $0x140] sm:$0xff] %v357
    %539 = vst [vmem:[#allocation2 + $0x148] sm:$0xff] %v359
    %540 = vst [vmem:[#allocation2 + $0x150] sm:$0xff] %v470
    %541 = vst [vmem:[#allocation2 + $0x158] sm:$0xff] %v472
    %542 = vst [vmem:[#allocation2 + $0x160] sm:$0xff] %v361
    %543 = vst [vmem:[#allocation2 + $0x168] sm:$0xff] %v363
    %544 = vst [vmem:[#allocation2 + $0x170] sm:$0xff] %v474
    %545 = vst [vmem:[#allocation2 + $0x178] sm:$0xff] %v476
    %546 = vst [vmem:[#allocation2 + $0x180] sm:$0xff] %v367
    %547 = vst [vmem:[#allocation2 + $0x188] sm:$0xff] %v369
    %548 = vst [vmem:[#allocation2 + $0x190] sm:$0xff] %v480
    %549 = vst [vmem:[#allocation2 + $0x198] sm:$0xff] %v482
    %550 = vst [vmem:[#allocation2 + $0x1a0] sm:$0xff] %v371
    %551 = vst [vmem:[#allocation2 + $0x1a8] sm:$0xff] %v373
    %552 = vst [vmem:[#allocation2 + $0x1b0] sm:$0xff] %v484
    %553 = vst [vmem:[#allocation2 + $0x1b8] sm:$0xff] %v486
    %554 = vst [vmem:[#allocation2 + $0x1c0] sm:$0xff] %v377
    %555 = vst [vmem:[#allocation2 + $0x1c8] sm:$0xff] %v379
    %556 = vst [vmem:[#allocation2 + $0x1d0] sm:$0xff] %v490
    %557 = vst [vmem:[#allocation2 + $0x1d8] sm:$0xff] %v492
    %558 = vst [vmem:[#allocation2 + $0x1e0] sm:$0xff] %v381
    %559 = vst [vmem:[#allocation2 + $0x1e8] sm:$0xff] %v383
    %560 = vst [vmem:[#allocation2 + $0x1f0] sm:$0xff] %v494
    %561 = vst [vmem:[#allocation2 + $0x1f8] sm:$0xff] %v496
    %v562 = vld [vmem:[%s1] sm:$0xff]
    %v563 = vld [vmem:[%s2] sm:$0xff]
    %v564 = vld [vmem:[#allocation2] sm:$0xff]
    %v565 = vld [vmem:[#allocation2 + $0x8] sm:$0xff]
    %v566 = vld [vmem:[#allocation2 + $0x10] sm:$0xff]
    %v567 = vld [vmem:[#allocation2 + $0x18] sm:$0xff]
    %v568 = vpack.c.bf16 %v562, %v562
    %v569 = vld [vmem:[#allocation7] sm:$0xff]
    %v570 = vld [vmem:[#allocation7 + $0x8] sm:$0xff]
    %v571 = vld [vmem:[#allocation7 + $0x10] sm:$0xff]
    %v572 = vld [vmem:[#allocation7 + $0x18] sm:$0xff]
    %v573 = vld [vmem:[#allocation7 + $0x20] sm:$0xff]
    %v574 = vld [vmem:[#allocation7 + $0x28] sm:$0xff]
    %v575 = vld [vmem:[#allocation7 + $0x30] sm:$0xff]
    %v576 = vld [vmem:[#allocation7 + $0x38] sm:$0xff]
    %v577 = vld [vmem:[#allocation7 + $0x40] sm:$0xff]
    %v578 = vld [vmem:[#allocation7 + $0x48] sm:$0xff]
    %v579 = vld [vmem:[#allocation7 + $0x50] sm:$0xff]
    %v580 = vld [vmem:[#allocation7 + $0x58] sm:$0xff]
    %v581 = vld [vmem:[#allocation7 + $0x60] sm:$0xff]
    %v582 = vld [vmem:[#allocation7 + $0x68] sm:$0xff]
    %v583 = vld [vmem:[#allocation7 + $0x70] sm:$0xff]
    %v584 = vld [vmem:[#allocation7 + $0x78] sm:$0xff]
    %v585 = vld [vmem:[#allocation7 + $0x80] sm:$0xff]
    %v586 = vld [vmem:[#allocation7 + $0x88] sm:$0xff]
    %v587 = vld [vmem:[#allocation7 + $0x90] sm:$0xff]
    %v588 = vld [vmem:[#allocation7 + $0x98] sm:$0xff]
    %v589 = vld [vmem:[#allocation7 + $0xa0] sm:$0xff]
    %v590 = vld [vmem:[#allocation7 + $0xa8] sm:$0xff]
    %v591 = vld [vmem:[#allocation7 + $0xb0] sm:$0xff]
    %v592 = vld [vmem:[#allocation7 + $0xb8] sm:$0xff]
    %v593 = vld [vmem:[#allocation7 + $0xc0] sm:$0xff]
    %v594 = vld [vmem:[#allocation7 + $0xc8] sm:$0xff]
    %v595 = vld [vmem:[#allocation7 + $0xd0] sm:$0xff]
    %v596 = vld [vmem:[#allocation7 + $0xd8] sm:$0xff]
    %v597 = vld [vmem:[#allocation7 + $0xe0] sm:$0xff]
    %v598 = vld [vmem:[#allocation7 + $0xe8] sm:$0xff]
    %v599 = vld [vmem:[#allocation7 + $0xf0] sm:$0xff]
    %v600 = vld [vmem:[#allocation7 + $0xf8] sm:$0xff]
    %v633 = vunpack.c.l.b16 %v569
    %v634 = vunpack.c.h.b16 %v569
    %v635 = vunpack.c.l.b16 %v570
    %v636 = vunpack.c.h.b16 %v570
    %v637 = vunpack.c.l.b16 %v571
    %v638 = vunpack.c.h.b16 %v571
    %v639 = vunpack.c.l.b16 %v572
    %v640 = vunpack.c.h.b16 %v572
    %v641 = vunpack.c.l.b16 %v573
    %v642 = vunpack.c.h.b16 %v573
    %v643 = vunpack.c.l.b16 %v574
    %v644 = vunpack.c.h.b16 %v574
    %v645 = vunpack.c.l.b16 %v575
    %v646 = vunpack.c.h.b16 %v575
    %v647 = vunpack.c.l.b16 %v576
    %v648 = vunpack.c.h.b16 %v576
    %v649 = vunpack.c.l.b16 %v577
    %v650 = vunpack.c.h.b16 %v577
    %v651 = vunpack.c.l.b16 %v578
    %v652 = vunpack.c.h.b16 %v578
    %v653 = vunpack.c.l.b16 %v579
    %v654 = vunpack.c.h.b16 %v579
    %v655 = vunpack.c.l.b16 %v580
    %v656 = vunpack.c.h.b16 %v580
    %v657 = vunpack.c.l.b16 %v581
    %v658 = vunpack.c.h.b16 %v581
    %v659 = vunpack.c.l.b16 %v582
    %v660 = vunpack.c.h.b16 %v582
    %v661 = vunpack.c.l.b16 %v583
    %v662 = vunpack.c.h.b16 %v583
    %v663 = vunpack.c.l.b16 %v584
    %v664 = vunpack.c.h.b16 %v584
    %v665 = vunpack.c.l.b16 %v585
    %v666 = vunpack.c.h.b16 %v585
    %v667 = vunpack.c.l.b16 %v586
    %v668 = vunpack.c.h.b16 %v586
    %v669 = vunpack.c.l.b16 %v587
    %v670 = vunpack.c.h.b16 %v587
    %v671 = vunpack.c.l.b16 %v588
    %v672 = vunpack.c.h.b16 %v588
    %v673 = vunpack.c.l.b16 %v589
    %v674 = vunpack.c.h.b16 %v589
    %v675 = vunpack.c.l.b16 %v590
    %v676 = vunpack.c.h.b16 %v590
    %v677 = vunpack.c.l.b16 %v591
    %v678 = vunpack.c.h.b16 %v591
    %v679 = vunpack.c.l.b16 %v592
    %v680 = vunpack.c.h.b16 %v592
    %v681 = vunpack.c.l.b16 %v593
    %v682 = vunpack.c.h.b16 %v593
    %v683 = vunpack.c.l.b16 %v594
    %v684 = vunpack.c.h.b16 %v594
    %v685 = vunpack.c.l.b16 %v595
    %v686 = vunpack.c.h.b16 %v595
    %v687 = vunpack.c.l.b16 %v596
    %v688 = vunpack.c.h.b16 %v596
    %v689 = vunpack.c.l.b16 %v597
    %v690 = vunpack.c.h.b16 %v597
    %v691 = vunpack.c.l.b16 %v598
    %v692 = vunpack.c.h.b16 %v598
    %v693 = vunpack.c.l.b16 %v599
    %v694 = vunpack.c.h.b16 %v599
    %v695 = vunpack.c.l.b16 %v600
    %v696 = vunpack.c.h.b16 %v600
    %v697 = vpack.c.b16 %v637, %v633
    %v698 = vpack.c.b16 %v638, %v634
    %v699 = vpack.c.b16 %v639, %v635
    %v700 = vpack.c.b16 %v640, %v636
    %v701 = vpack.c.b16 %v645, %v641
    %v702 = vpack.c.b16 %v646, %v642
    %v703 = vpack.c.b16 %v647, %v643
    %v704 = vpack.c.b16 %v648, %v644
    %v705 = vpack.c.b16 %v653, %v649
    %v706 = vpack.c.b16 %v654, %v650
    %v707 = vpack.c.b16 %v655, %v651
    %v708 = vpack.c.b16 %v656, %v652
    %v709 = vpack.c.b16 %v661, %v657
    %v710 = vpack.c.b16 %v662, %v658
    %v711 = vpack.c.b16 %v663, %v659
    %v712 = vpack.c.b16 %v664, %v660
    %v713 = vpack.c.b16 %v669, %v665
    %v714 = vpack.c.b16 %v670, %v666
    %v715 = vpack.c.b16 %v671, %v667
    %v716 = vpack.c.b16 %v672, %v668
    %v717 = vpack.c.b16 %v677, %v673
    %v718 = vpack.c.b16 %v678, %v674
    %v719 = vpack.c.b16 %v679, %v675
    %v720 = vpack.c.b16 %v680, %v676
    %v721 = vpack.c.b16 %v685, %v681
    %v722 = vpack.c.b16 %v686, %v682
    %v723 = vpack.c.b16 %v687, %v683
    %v724 = vpack.c.b16 %v688, %v684
    %v725 = vpack.c.b16 %v693, %v689
    %v726 = vpack.c.b16 %v694, %v690
    %v727 = vpack.c.b16 %v695, %v691
    %v728 = vpack.c.b16 %v696, %v692
    %761 = vmatprep.subr.bf16.mxu0 %v698
    %762 = vmatpush1.bf16.msra.mxu0 %v697
    %763 = vmatprep.subr.bf16.mxu0 %v702
    %764 = vmatpush1.bf16.msra.mxu0 %v701
    %765 = vmatprep.subr.bf16.mxu0 %v706
    %766 = vmatpush1.bf16.msra.mxu0 %v705
    %767 = vmatprep.subr.bf16.mxu0 %v710
    %768 = vmatpush1.bf16.msra.mxu0 %v709
    %769 = vmatprep.subr.bf16.mxu0 %v714
    %770 = vmatpush1.bf16.msra.mxu0 %v713
    %771 = vmatprep.subr.bf16.mxu0 %v718
    %772 = vmatpush1.bf16.msra.mxu0 %v717
    %773 = vmatprep.subr.bf16.mxu0 %v722
    %774 = vmatpush1.bf16.msra.mxu0 %v721
    %775 = vmatprep.subr.bf16.mxu0 %v726
    %776 = vmatpush1.bf16.msra.mxu0 %v725
    %777 = vmatprep.subr.bf16.mxu0 0
    %778 = vmatpush1.bf16.msra.mxu0 0
    %779 = vmatprep.subr.bf16.mxu0 0
    %780 = vmatpush1.bf16.msra.mxu0 0
    %781 = vmatprep.subr.bf16.mxu0 0
    %782 = vmatpush1.bf16.msra.mxu0 0
    %783 = vmatprep.subr.bf16.mxu0 0
    %784 = vmatpush1.bf16.msra.mxu0 0
    %785 = vmatprep.subr.bf16.mxu0 0
    %786 = vmatpush1.bf16.msra.mxu0 0
    %787 = vmatprep.subr.bf16.mxu0 0
    %788 = vmatpush1.bf16.msra.mxu0 0
    %789 = vmatprep.subr.bf16.mxu0 0
    %790 = vmatpush1.bf16.msra.mxu0 0
    %791 = vmatprep.subr.bf16.mxu0 0
    %792 = vmatpush1.bf16.msra.mxu0 0
    %793 = vmatprep.mubr.bf16.mxu0 0
    %794 = vmatmul.mubr.bf16.gmra.mrb[0].mxu0 %v568
    %v795 = vpop.f32.mrb[0].mxu0
    %v796 = vadd.f32 0.0, %v795
    %v797 = vpop.f32.mrb[0].mxu0
    %v798 = vadd.f32 0.0, %v797
    %v799 = vpop.f32.mrb[0].mxu0
    %v800 = vpop.f32.mrb[0].mxu0
    %801 = vdwg.mxu0
    %802 = vmatprep.subr.bf16.mxu0 %v700
    %803 = vmatpush1.bf16.msra.mxu0 %v699
    %804 = vmatprep.subr.bf16.mxu0 %v704
    %805 = vmatpush1.bf16.msra.mxu0 %v703
    %806 = vmatprep.subr.bf16.mxu0 %v708
    %807 = vmatpush1.bf16.msra.mxu0 %v707
    %808 = vmatprep.subr.bf16.mxu0 %v712
    %809 = vmatpush1.bf16.msra.mxu0 %v711
    %810 = vmatprep.subr.bf16.mxu0 %v716
    %811 = vmatpush1.bf16.msra.mxu0 %v715
    %812 = vmatprep.subr.bf16.mxu0 %v720
    %813 = vmatpush1.bf16.msra.mxu0 %v719
    %814 = vmatprep.subr.bf16.mxu0 %v724
    %815 = vmatpush1.bf16.msra.mxu0 %v723
    %816 = vmatprep.subr.bf16.mxu0 %v728
    %817 = vmatpush1.bf16.msra.mxu0 %v727
    %818 = vmatprep.subr.bf16.mxu0 0
    %819 = vmatpush1.bf16.msra.mxu0 0
    %820 = vmatprep.subr.bf16.mxu0 0
    %821 = vmatpush1.bf16.msra.mxu0 0
    %822 = vmatprep.subr.bf16.mxu0 0
    %823 = vmatpush1.bf16.msra.mxu0 0
    %824 = vmatprep.subr.bf16.mxu0 0
    %825 = vmatpush1.bf16.msra.mxu0 0
    %826 = vmatprep.subr.bf16.mxu0 0
    %827 = vmatpush1.bf16.msra.mxu0 0
    %828 = vmatprep.subr.bf16.mxu0 0
    %829 = vmatpush1.bf16.msra.mxu0 0
    %830 = vmatprep.subr.bf16.mxu0 0
    %831 = vmatpush1.bf16.msra.mxu0 0
    %832 = vmatprep.subr.bf16.mxu0 0
    %833 = vmatpush1.bf16.msra.mxu0 0
    %834 = vmatprep.mubr.bf16.mxu0 0
    %835 = vmatmul.mubr.bf16.gmra.mrb[0].mxu0 %v568
    %v836 = vpop.f32.mrb[0].mxu0
    %v837 = vadd.f32 0.0, %v836
    %v838 = vpop.f32.mrb[0].mxu0
    %v839 = vadd.f32 0.0, %v838
    %v840 = vpop.f32.mrb[0].mxu0
    %v841 = vpop.f32.mrb[0].mxu0
    %842 = vdwg.mxu0
    %v843 = vadd.f32 %v564, %v796
    %v844 = vadd.f32 %v565, %v798
    %v845 = vadd.f32 %v566, %v837
    %v846 = vadd.f32 %v567, %v839
    %v847 = vmul.f32 %v843, 0.5
    %v848 = vtanh.pop %v847
    %v849 = vmul.f32 %v848, 0.5
    %v850 = vadd.f32 %v849, 0.5
    %v851 = vmul.f32 %v844, 0.5
    %v852 = vtanh.pop %v851
    %v853 = vmul.f32 %v852, 0.5
    %v854 = vadd.f32 %v853, 0.5
    %v855 = vtanh.pop %v845
    %v856 = vmul.f32 %v846, 0.5
    %v857 = vtanh.pop %v856
    %v858 = vmul.f32 %v857, 0.5
    %v859 = vadd.f32 %v858, 0.5
    %v860 = vmul.f32 %v854, %v563
    %v861 = vmul.f32 %v850, %v855
    %v862 = vadd.f32 %v860, %v861
    %v863 = vtanh.pop %v862
    %v864 = vmul.f32 %v859, %v863
    %v865 = vld [vmem:[#allocation2 + $0x20] sm:$0xff]
    %v866 = vld [vmem:[#allocation2 + $0x28] sm:$0xff]
    %v867 = vld [vmem:[#allocation2 + $0x30] sm:$0xff]
    %v868 = vld [vmem:[#allocation2 + $0x38] sm:$0xff]
    %v869 = vpack.c.bf16 %v864, %v864
    %870 = vmatprep.subr.bf16.mxu0 %v698
    %871 = vmatpush1.bf16.msra.mxu0 %v697
    %872 = vmatprep.subr.bf16.mxu0 %v702
    %873 = vmatpush1.bf16.msra.mxu0 %v701
    %874 = vmatprep.subr.bf16.mxu0 %v706
    %875 = vmatpush1.bf16.msra.mxu0 %v705
    %876 = vmatprep.subr.bf16.mxu0 %v710
    %877 = vmatpush1.bf16.msra.mxu0 %v709
    %878 = vmatprep.subr.bf16.mxu0 %v714
    %879 = vmatpush1.bf16.msra.mxu0 %v713
    %880 = vmatprep.subr.bf16.mxu0 %v718
    %881 = vmatpush1.bf16.msra.mxu0 %v717
    %882 = vmatprep.subr.bf16.mxu0 %v722
    %883 = vmatpush1.bf16.msra.mxu0 %v721
    %884 = vmatprep.subr.bf16.mxu0 %v726
    %885 = vmatpush1.bf16.msra.mxu0 %v725
    %886 = vmatprep.subr.bf16.mxu0 0
    %887 = vmatpush1.bf16.msra.mxu0 0
    %888 = vmatprep.subr.bf16.mxu0 0
    %889 = vmatpush1.bf16.msra.mxu0 0
    %890 = vmatprep.subr.bf16.mxu0 0
    %891 = vmatpush1.bf16.msra.mxu0 0
    %892 = vmatprep.subr.bf16.mxu0 0
    %893 = vmatpush1.bf16.msra.mxu0 0
    %894 = vmatprep.subr.bf16.mxu0 0
    %895 = vmatpush1.bf16.msra.mxu0 0
    %896 = vmatprep.subr.bf16.mxu0 0
    %897 = vmatpush1.bf16.msra.mxu0 0
    %898 = vmatprep.subr.bf16.mxu0 0
    %899 = vmatpush1.bf16.msra.mxu0 0
    %900 = vmatprep.subr.bf16.mxu0 0
    %901 = vmatpush1.bf16.msra.mxu0 0
    %902 = vmatprep.mubr.bf16.mxu0 0
    %903 = vmatmul.mubr.bf16.gmra.mrb[0].mxu0 %v869
    %v904 = vpop.f32.mrb[0].mxu0
    %v905 = vadd.f32 0.0, %v904
    %v906 = vpop.f32.mrb[0].mxu0
    %v907 = vadd.f32 0.0, %v906
    %v908 = vpop.f32.mrb[0].mxu0
    %v909 = vpop.f32.mrb[0].mxu0
    %910 = vdwg.mxu0
    %911 = vmatprep.subr.bf16.mxu0 %v700
    %912 = vmatpush1.bf16.msra.mxu0 %v699
    %913 = vmatprep.subr.bf16.mxu0 %v704
    %914 = vmatpush1.bf16.msra.mxu0 %v703
    %915 = vmatprep.subr.bf16.mxu0 %v708
    %916 = vmatpush1.bf16.msra.mxu0 %v707
    %917 = vmatprep.subr.bf16.mxu0 %v712
    %918 = vmatpush1.bf16.msra.mxu0 %v711
    %919 = vmatprep.subr.bf16.mxu0 %v716
    %920 = vmatpush1.bf16.msra.mxu0 %v715
    %921 = vmatprep.subr.bf16.mxu0 %v720
    %922 = vmatpush1.bf16.msra.mxu0 %v719
    %923 = vmatprep.subr.bf16.mxu0 %v724
    %924 = vmatpush1.bf16.msra.mxu0 %v723
    %925 = vmatprep.subr.bf16.mxu0 %v728
    %926 = vmatpush1.bf16.msra.mxu0 %v727
    %927 = vmatprep.subr.bf16.mxu0 0
    %928 = vmatpush1.bf16.msra.mxu0 0
    %929 = vmatprep.subr.bf16.mxu0 0
    %930 = vmatpush1.bf16.msra.mxu0 0
    %931 = vmatprep.subr.bf16.mxu0 0
    %932 = vmatpush1.bf16.msra.mxu0 0
    %933 = vmatprep.subr.bf16.mxu0 0
    %934 = vmatpush1.bf16.msra.mxu0 0
    %935 = vmatprep.subr.bf16.mxu0 0
    %936 = vmatpush1.bf16.msra.mxu0 0
    %937 = vmatprep.subr.bf16.mxu0 0
    %938 = vmatpush1.bf16.msra.mxu0 0
    %939 = vmatprep.subr.bf16.mxu0 0
    %940 = vmatpush1.bf16.msra.mxu0 0
    %941 = vmatprep.subr.bf16.mxu0 0
    %942 = vmatpush1.bf16.msra.mxu0 0
    %943 = vmatprep.mubr.bf16.mxu0 0
    %944 = vmatmul.mubr.bf16.gmra.mrb[0].mxu0 %v869
    %v945 = vpop.f32.mrb[0].mxu0
    %v946 = vadd.f32 0.0, %v945
    %v947 = vpop.f32.mrb[0].mxu0
    %v948 = vadd.f32 0.0, %v947
    %v949 = vpop.f32.mrb[0].mxu0
    %v950 = vpop.f32.mrb[0].mxu0
    %951 = vdwg.mxu0
    %v952 = vadd.f32 %v865, %v905
    %v953 = vadd.f32 %v866, %v907
    %v954 = vadd.f32 %v867, %v946
    %v955 = vadd.f32 %v868, %v948
    %v956 = vmul.f32 %v952, 0.5
    %v957 = vtanh.pop %v956
    %v958 = vmul.f32 %v957, 0.5
    %v959 = vadd.f32 %v958, 0.5
    %v960 = vmul.f32 %v953, 0.5
    %v961 = vtanh.pop %v960
    %v962 = vmul.f32 %v961, 0.5
    %v963 = vadd.f32 %v962, 0.5
    %v964 = vtanh.pop %v954
    %v965 = vmul.f32 %v955, 0.5
    %v966 = vtanh.pop %v965
    %v967 = vmul.f32 %v966, 0.5
    %v968 = vadd.f32 %v967, 0.5
    %v969 = vmul.f32 %v963, %v862
    %v970 = vmul.f32 %v959, %v964
    %v971 = vadd.f32 %v969, %v970
    %v972 = vtanh.pop %v971
    %v973 = vmul.f32 %v968, %v972
    %v974 = vld [vmem:[#allocation2 + $0x40] sm:$0xff]
    %v975 = vld [vmem:[#allocation2 + $0x48] sm:$0xff]
    %v976 = vld [vmem:[#allocation2 + $0x50] sm:$0xff]
    %v977 = vld [vmem:[#allocation2 + $0x58] sm:$0xff]
    %v978 = vpack.c.bf16 %v973, %v973
    %979 = vmatprep.subr.bf16.mxu0 %v698
    %980 = vmatpush1.bf16.msra.mxu0 %v697
    %981 = vmatprep.subr.bf16.mxu0 %v702
    %982 = vmatpush1.bf16.msra.mxu0 %v701
    %983 = vmatprep.subr.bf16.mxu0 %v706
    %984 = vmatpush1.bf16.msra.mxu0 %v705
    %985 = vmatprep.subr.bf16.mxu0 %v710
    %986 = vmatpush1.bf16.msra.mxu0 %v709
    %987 = vmatprep.subr.bf16.mxu0 %v714
    %988 = vmatpush1.bf16.msra.mxu0 %v713
    %989 = vmatprep.subr.bf16.mxu0 %v718
    %990 = vmatpush1.bf16.msra.mxu0 %v717
    %991 = vmatprep.subr.bf16.mxu0 %v722
    %992 = vmatpush1.bf16.msra.mxu0 %v721
    %993 = vmatprep.subr.bf16.mxu0 %v726
    %994 = vmatpush1.bf16.msra.mxu0 %v725
    %995 = vmatprep.subr.bf16.mxu0 0
    %996 = vmatpush1.bf16.msra.mxu0 0
    %997 = vmatprep.subr.bf16.mxu0 0
    %998 = vmatpush1.bf16.msra.mxu0 0
    %999 = vmatprep.subr.bf16.mxu0 0
    %1000 = vmatpush1.bf16.msra.mxu0 0
    %1001 = vmatprep.subr.bf16.mxu0 0
    %1002 = vmatpush1.bf16.msra.mxu0 0
    %1003 = vmatprep.subr.bf16.mxu0 0
    %1004 = vmatpush1.bf16.msra.mxu0 0
    %1005 = vmatprep.subr.bf16.mxu0 0
    %1006 = vmatpush1.bf16.msra.mxu0 0
    %1007 = vmatprep.subr.bf16.mxu0 0
    %1008 = vmatpush1.bf16.msra.mxu0 0
    %1009 = vmatprep.subr.bf16.mxu0 0
    %1010 = vmatpush1.bf16.msra.mxu0 0
    %1011 = vmatprep.mubr.bf16.mxu0 0
    %1012 = vmatmul.mubr.bf16.gmra.mrb[0].mxu0 %v978
    %v1013 = vpop.f32.mrb[0].mxu0
    %v1014 = vadd.f32 0.0, %v1013
    %v1015 = vpop.f32.mrb[0].mxu0
    %v1016 = vadd.f32 0.0, %v1015
    %v1017 = vpop.f32.mrb[0].mxu0
    %v1018 = vpop.f32.mrb[0].mxu0
    %1019 = vdwg.mxu0
    %1020 = vmatprep.subr.bf16.mxu0 %v700
    %1021 = vmatpush1.bf16.msra.mxu0 %v699
    %1022 = vmatprep.subr.bf16.mxu0 %v704
    %1023 = vmatpush1.bf16.msra.mxu0 %v703
    %1024 = vmatprep.subr.bf16.mxu0 %v708
    %1025 = vmatpush1.bf16.msra.mxu0 %v707
    %1026 = vmatprep.subr.bf16.mxu0 %v712
    %1027 = vmatpush1.bf16.msra.mxu0 %v711
    %1028 = vmatprep.subr.bf16.mxu0 %v716
    %1029 = vmatpush1.bf16.msra.mxu0 %v715
    %1030 = vmatprep.subr.bf16.mxu0 %v720
    %1031 = vmatpush1.bf16.msra.mxu0 %v719
    %1032 = vmatprep.subr.bf16.mxu0 %v724
    %1033 = vmatpush1.bf16.msra.mxu0 %v723
    %1034 = vmatprep.subr.bf16.mxu0 %v728
    %1035 = vmatpush1.bf16.msra.mxu0 %v727
    %1036 = vmatprep.subr.bf16.mxu0 0
    %1037 = vmatpush1.bf16.msra.mxu0 0
    %1038 = vmatprep.subr.bf16.mxu0 0
    %1039 = vmatpush1.bf16.msra.mxu0 0
    %1040 = vmatprep.subr.bf16.mxu0 0
    %1041 = vmatpush1.bf16.msra.mxu0 0
    %1042 = vmatprep.subr.bf16.mxu0 0
    %1043 = vmatpush1.bf16.msra.mxu0 0
    %1044 = vmatprep.subr.bf16.mxu0 0
    %1045 = vmatpush1.bf16.msra.mxu0 0
    %1046 = vmatprep.subr.bf16.mxu0 0
    %1047 = vmatpush1.bf16.msra.mxu0 0
    %1048 = vmatprep.subr.bf16.mxu0 0
    %1049 = vmatpush1.bf16.msra.mxu0 0
    %1050 = vmatprep.subr.bf16.mxu0 0
    %1051 = vmatpush1.bf16.msra.mxu0 0
    %1052 = vmatprep.mubr.bf16.mxu0 0
    %1053 = vmatmul.mubr.bf16.gmra.mrb[0].mxu0 %v978
    %v1054 = vpop.f32.mrb[0].mxu0
    %v1055 = vadd.f32 0.0, %v1054
    %v1056 = vpop.f32.mrb[0].mxu0
    %v1057 = vadd.f32 0.0, %v1056
    %v1058 = vpop.f32.mrb[0].mxu0
    %v1059 = vpop.f32.mrb[0].mxu0
    %1060 = vdwg.mxu0
    %v1061 = vadd.f32 %v974, %v1014
    %v1062 = vadd.f32 %v975, %v1016
    %v1063 = vadd.f32 %v976, %v1055
    %v1064 = vadd.f32 %v977, %v1057
    %v1065 = vmul.f32 %v1061, 0.5
    %v1066 = vtanh.pop %v1065
    %v1067 = vmul.f32 %v1066, 0.5
    %v1068 = vadd.f32 %v1067, 0.5
    %v1069 = vmul.f32 %v1062, 0.5
    %v1070 = vtanh.pop %v1069
    %v1071 = vmul.f32 %v1070, 0.5
    %v1072 = vadd.f32 %v1071, 0.5
    %v1073 = vtanh.pop %v1063
    %v1074 = vmul.f32 %v1064, 0.5
    %v1075 = vtanh.pop %v1074
    %v1076 = vmul.f32 %v1075, 0.5
    %v1077 = vadd.f32 %v1076, 0.5
    %v1078 = vmul.f32 %v1072, %v971
    %v1079 = vmul.f32 %v1068, %v1073
    %v1080 = vadd.f32 %v1078, %v1079
    %v1081 = vtanh.pop %v1080
    %v1082 = vmul.f32 %v1077, %v1081
    %v1083 = vld [vmem:[#allocation2 + $0x60] sm:$0xff]
    %v1084 = vld [vmem:[#allocation2 + $0x68] sm:$0xff]
    %v1085 = vld [vmem:[#allocation2 + $0x70] sm:$0xff]
    %v1086 = vld [vmem:[#allocation2 + $0x78] sm:$0xff]
    %v1087 = vpack.c.bf16 %v1082, %v1082
    %1088 = vmatprep.subr.bf16.mxu0 %v698
    %1089 = vmatpush1.bf16.msra.mxu0 %v697
    %1090 = vmatprep.subr.bf16.mxu0 %v702
    %1091 = vmatpush1.bf16.msra.mxu0 %v701
    %1092 = vmatprep.subr.bf16.mxu0 %v706
    %1093 = vmatpush1.bf16.msra.mxu0 %v705
    %1094 = vmatprep.subr.bf16.mxu0 %v710
    %1095 = vmatpush1.bf16.msra.mxu0 %v709
    %1096 = vmatprep.subr.bf16.mxu0 %v714
    %1097 = vmatpush1.bf16.msra.mxu0 %v713
    %1098 = vmatprep.subr.bf16.mxu0 %v718
    %1099 = vmatpush1.bf16.msra.mxu0 %v717
    %1100 = vmatprep.subr.bf16.mxu0 %v722
    %1101 = vmatpush1.bf16.msra.mxu0 %v721
    %1102 = vmatprep.subr.bf16.mxu0 %v726
    %1103 = vmatpush1.bf16.msra.mxu0 %v725
    %1104 = vmatprep.subr.bf16.mxu0 0
    %1105 = vmatpush1.bf16.msra.mxu0 0
    %1106 = vmatprep.subr.bf16.mxu0 0
    %1107 = vmatpush1.bf16.msra.mxu0 0
    %1108 = vmatprep.subr.bf16.mxu0 0
    %1109 = vmatpush1.bf16.msra.mxu0 0
    %1110 = vmatprep.subr.bf16.mxu0 0
    %1111 = vmatpush1.bf16.msra.mxu0 0
    %1112 = vmatprep.subr.bf16.mxu0 0
    %1113 = vmatpush1.bf16.msra.mxu0 0
    %1114 = vmatprep.subr.bf16.mxu0 0
    %1115 = vmatpush1.bf16.msra.mxu0 0
    %1116 = vmatprep.subr.bf16.mxu0 0
    %1117 = vmatpush1.bf16.msra.mxu0 0
    %1118 = vmatprep.subr.bf16.mxu0 0
    %1119 = vmatpush1.bf16.msra.mxu0 0
    %1120 = vmatprep.mubr.bf16.mxu0 0
    %1121 = vmatmul.mubr.bf16.gmra.mrb[0].mxu0 %v1087
    %v1122 = vpop.f32.mrb[0].mxu0
    %v1123 = vadd.f32 0.0, %v1122
    %v1124 = vpop.f32.mrb[0].mxu0
    %v1125 = vadd.f32 0.0, %v1124
    %v1126 = vpop.f32.mrb[0].mxu0
    %v1127 = vpop.f32.mrb[0].mxu0
    %1128 = vdwg.mxu0
    %1129 = vmatprep.subr.bf16.mxu0 %v700
    %1130 = vmatpush1.bf16.msra.mxu0 %v699
    %1131 = vmatprep.subr.bf16.mxu0 %v704
    %1132 = vmatpush1.bf16.msra.mxu0 %v703
    %1133 = vmatprep.subr.bf16.mxu0 %v708
    %1134 = vmatpush1.bf16.msra.mxu0 %v707
    %1135 = vmatprep.subr.bf16.mxu0 %v712
    %1136 = vmatpush1.bf16.msra.mxu0 %v711
    %1137 = vmatprep.subr.bf16.mxu0 %v716
    %1138 = vmatpush1.bf16.msra.mxu0 %v715
    %1139 = vmatprep.subr.bf16.mxu0 %v720
    %1140 = vmatpush1.bf16.msra.mxu0 %v719
    %1141 = vmatprep.subr.bf16.mxu0 %v724
    %1142 = vmatpush1.bf16.msra.mxu0 %v723
    %1143 = vmatprep.subr.bf16.mxu0 %v728
    %1144 = vmatpush1.bf16.msra.mxu0 %v727
    %1145 = vmatprep.subr.bf16.mxu0 0
    %1146 = vmatpush1.bf16.msra.mxu0 0
    %1147 = vmatprep.subr.bf16.mxu0 0
    %1148 = vmatpush1.bf16.msra.mxu0 0
    %1149 = vmatprep.subr.bf16.mxu0 0
    %1150 = vmatpush1.bf16.msra.mxu0 0
    %1151 = vmatprep.subr.bf16.mxu0 0
    %1152 = vmatpush1.bf16.msra.mxu0 0
    %1153 = vmatprep.subr.bf16.mxu0 0
    %1154 = vmatpush1.bf16.msra.mxu0 0
    %1155 = vmatprep.subr.bf16.mxu0 0
    %1156 = vmatpush1.bf16.msra.mxu0 0
    %1157 = vmatprep.subr.bf16.mxu0 0
    %1158 = vmatpush1.bf16.msra.mxu0 0
    %1159 = vmatprep.subr.bf16.mxu0 0
    %1160 = vmatpush1.bf16.msra.mxu0 0
    %1161 = vmatprep.mubr.bf16.mxu0 0
    %1162 = vmatmul.mubr.bf16.gmra.mrb[0].mxu0 %v1087
    %v1163 = vpop.f32.mrb[0].mxu0
    %v1164 = vadd.f32 0.0, %v1163
    %v1165 = vpop.f32.mrb[0].mxu0
    %v1166 = vadd.f32 0.0, %v1165
    %v1167 = vpop.f32.mrb[0].mxu0
    %v1168 = vpop.f32.mrb[0].mxu0
    %1169 = vdwg.mxu0
    %v1170 = vadd.f32 %v1083, %v1123
    %v1171 = vadd.f32 %v1084, %v1125
    %v1172 = vadd.f32 %v1085, %v1164
    %v1173 = vadd.f32 %v1086, %v1166
    %v1174 = vmul.f32 %v1170, 0.5
    %v1175 = vtanh.pop %v1174
    %v1176 = vmul.f32 %v1175, 0.5
    %v1177 = vadd.f32 %v1176, 0.5
    %v1178 = vmul.f32 %v1171, 0.5
    %v1179 = vtanh.pop %v1178
    %v1180 = vmul.f32 %v1179, 0.5
    %v1181 = vadd.f32 %v1180, 0.5
    %v1182 = vtanh.pop %v1172
    %v1183 = vmul.f32 %v1173, 0.5
    %v1184 = vtanh.pop %v1183
    %v1185 = vmul.f32 %v1184, 0.5
    %v1186 = vadd.f32 %v1185, 0.5
    %v1187 = vmul.f32 %v1181, %v1080
    %v1188 = vmul.f32 %v1177, %v1182
    %v1189 = vadd.f32 %v1187, %v1188
    %v1190 = vtanh.pop %v1189
    %v1191 = vmul.f32 %v1186, %v1190
    %v1192 = vld [vmem:[#allocation2 + $0x80] sm:$0xff]
    %v1193 = vld [vmem:[#allocation2 + $0x88] sm:$0xff]
    %v1194 = vld [vmem:[#allocation2 + $0x90] sm:$0xff]
    %v1195 = vld [vmem:[#allocation2 + $0x98] sm:$0xff]
    %v1196 = vpack.c.bf16 %v1191, %v1191
    %1197 = vmatprep.subr.bf16.mxu0 %v698
    %1198 = vmatpush1.bf16.msra.mxu0 %v697
    %1199 = vmatprep.subr.bf16.mxu0 %v702
    %1200 = vmatpush1.bf16.msra.mxu0 %v701
    %1201 = vmatprep.subr.bf16.mxu0 %v706
    %1202 = vmatpush1.bf16.msra.mxu0 %v705
    %1203 = vmatprep.subr.bf16.mxu0 %v710
    %1204 = vmatpush1.bf16.msra.mxu0 %v709
    %1205 = vmatprep.subr.bf16.mxu0 %v714
    %1206 = vmatpush1.bf16.msra.mxu0 %v713
    %1207 = vmatprep.subr.bf16.mxu0 %v718
    %1208 = vmatpush1.bf16.msra.mxu0 %v717
    %1209 = vmatprep.subr.bf16.mxu0 %v722
    %1210 = vmatpush1.bf16.msra.mxu0 %v721
    %1211 = vmatprep.subr.bf16.mxu0 %v726
    %1212 = vmatpush1.bf16.msra.mxu0 %v725
    %1213 = vmatprep.subr.bf16.mxu0 0
    %1214 = vmatpush1.bf16.msra.mxu0 0
    %1215 = vmatprep.subr.bf16.mxu0 0
    %1216 = vmatpush1.bf16.msra.mxu0 0
    %1217 = vmatprep.subr.bf16.mxu0 0
    %1218 = vmatpush1.bf16.msra.mxu0 0
    %1219 = vmatprep.subr.bf16.mxu0 0
    %1220 = vmatpush1.bf16.msra.mxu0 0
    %1221 = vmatprep.subr.bf16.mxu0 0
    %1222 = vmatpush1.bf16.msra.mxu0 0
    %1223 = vmatprep.subr.bf16.mxu0 0
    %1224 = vmatpush1.bf16.msra.mxu0 0
    %1225 = vmatprep.subr.bf16.mxu0 0
    %1226 = vmatpush1.bf16.msra.mxu0 0
    %1227 = vmatprep.subr.bf16.mxu0 0
    %1228 = vmatpush1.bf16.msra.mxu0 0
    %1229 = vmatprep.mubr.bf16.mxu0 0
    %1230 = vmatmul.mubr.bf16.gmra.mrb[0].mxu0 %v1196
    %v1231 = vpop.f32.mrb[0].mxu0
    %v1232 = vadd.f32 0.0, %v1231
    %v1233 = vpop.f32.mrb[0].mxu0
    %v1234 = vadd.f32 0.0, %v1233
    %v1235 = vpop.f32.mrb[0].mxu0
    %v1236 = vpop.f32.mrb[0].mxu0
    %1237 = vdwg.mxu0
    %1238 = vmatprep.subr.bf16.mxu0 %v700
    %1239 = vmatpush1.bf16.msra.mxu0 %v699
    %1240 = vmatprep.subr.bf16.mxu0 %v704
    %1241 = vmatpush1.bf16.msra.mxu0 %v703
    %1242 = vmatprep.subr.bf16.mxu0 %v708
    %1243 = vmatpush1.bf16.msra.mxu0 %v707
    %1244 = vmatprep.subr.bf16.mxu0 %v712
    %1245 = vmatpush1.bf16.msra.mxu0 %v711
    %1246 = vmatprep.subr.bf16.mxu0 %v716
    %1247 = vmatpush1.bf16.msra.mxu0 %v715
    %1248 = vmatprep.subr.bf16.mxu0 %v720
    %1249 = vmatpush1.bf16.msra.mxu0 %v719
    %1250 = vmatprep.subr.bf16.mxu0 %v724
    %1251 = vmatpush1.bf16.msra.mxu0 %v723
    %1252 = vmatprep.subr.bf16.mxu0 %v728
    %1253 = vmatpush1.bf16.msra.mxu0 %v727
    %1254 = vmatprep.subr.bf16.mxu0 0
    %1255 = vmatpush1.bf16.msra.mxu0 0
    %1256 = vmatprep.subr.bf16.mxu0 0
    %1257 = vmatpush1.bf16.msra.mxu0 0
    %1258 = vmatprep.subr.bf16.mxu0 0
    %1259 = vmatpush1.bf16.msra.mxu0 0
    %1260 = vmatprep.subr.bf16.mxu0 0
    %1261 = vmatpush1.bf16.msra.mxu0 0
    %1262 = vmatprep.subr.bf16.mxu0 0
    %1263 = vmatpush1.bf16.msra.mxu0 0
    %1264 = vmatprep.subr.bf16.mxu0 0
    %1265 = vmatpush1.bf16.msra.mxu0 0
    %1266 = vmatprep.subr.bf16.mxu0 0
    %1267 = vmatpush1.bf16.msra.mxu0 0
    %1268 = vmatprep.subr.bf16.mxu0 0
    %1269 = vmatpush1.bf16.msra.mxu0 0
    %1270 = vmatprep.mubr.bf16.mxu0 0
    %1271 = vmatmul.mubr.bf16.gmra.mrb[0].mxu0 %v1196
    %v1272 = vpop.f32.mrb[0].mxu0
    %v1273 = vadd.f32 0.0, %v1272
    %v1274 = vpop.f32.mrb[0].mxu0
    %v1275 = vadd.f32 0.0, %v1274
    %v1276 = vpop.f32.mrb[0].mxu0
    %v1277 = vpop.f32.mrb[0].mxu0
    %1278 = vdwg.mxu0
    %v1279 = vadd.f32 %v1192, %v1232
    %v1280 = vadd.f32 %v1193, %v1234
    %v1281 = vadd.f32 %v1194, %v1273
    %v1282 = vadd.f32 %v1195, %v1275
    %v1283 = vmul.f32 %v1279, 0.5
    %v1284 = vtanh.pop %v1283
    %v1285 = vmul.f32 %v1284, 0.5
    %v1286 = vadd.f32 %v1285, 0.5
    %v1287 = vmul.f32 %v1280, 0.5
    %v1288 = vtanh.pop %v1287
    %v1289 = vmul.f32 %v1288, 0.5
    %v1290 = vadd.f32 %v1289, 0.5
    %v1291 = vtanh.pop %v1281
    %v1292 = vmul.f32 %v1282, 0.5
    %v1293 = vtanh.pop %v1292
    %v1294 = vmul.f32 %v1293, 0.5
    %v1295 = vadd.f32 %v1294, 0.5
    %v1296 = vmul.f32 %v1290, %v1189
    %v1297 = vmul.f32 %v1286, %v1291
    %v1298 = vadd.f32 %v1296, %v1297
    %v1299 = vtanh.pop %v1298
    %v1300 = vmul.f32 %v1295, %v1299
    %v1301 = vld [vmem:[#allocation2 + $0xa0] sm:$0xff]
    %v1302 = vld [vmem:[#allocation2 + $0xa8] sm:$0xff]
    %v1303 = vld [vmem:[#allocation2 + $0xb0] sm:$0xff]
    %v1304 = vld [vmem:[#allocation2 + $0xb8] sm:$0xff]
    %v1305 = vpack.c.bf16 %v1300, %v1300
    %1306 = vmatprep.subr.bf16.mxu0 %v698
    %1307 = vmatpush1.bf16.msra.mxu0 %v697
    %1308 = vmatprep.subr.bf16.mxu0 %v702
    %1309 = vmatpush1.bf16.msra.mxu0 %v701
    %1310 = vmatprep.subr.bf16.mxu0 %v706
    %1311 = vmatpush1.bf16.msra.mxu0 %v705
    %1312 = vmatprep.subr.bf16.mxu0 %v710
    %1313 = vmatpush1.bf16.msra.mxu0 %v709
    %1314 = vmatprep.subr.bf16.mxu0 %v714
    %1315 = vmatpush1.bf16.msra.mxu0 %v713
    %1316 = vmatprep.subr.bf16.mxu0 %v718
    %1317 = vmatpush1.bf16.msra.mxu0 %v717
    %1318 = vmatprep.subr.bf16.mxu0 %v722
    %1319 = vmatpush1.bf16.msra.mxu0 %v721
    %1320 = vmatprep.subr.bf16.mxu0 %v726
    %1321 = vmatpush1.bf16.msra.mxu0 %v725
    %1322 = vmatprep.subr.bf16.mxu0 0
    %1323 = vmatpush1.bf16.msra.mxu0 0
    %1324 = vmatprep.subr.bf16.mxu0 0
    %1325 = vmatpush1.bf16.msra.mxu0 0
    %1326 = vmatprep.subr.bf16.mxu0 0
    %1327 = vmatpush1.bf16.msra.mxu0 0
    %1328 = vmatprep.subr.bf16.mxu0 0
    %1329 = vmatpush1.bf16.msra.mxu0 0
    %1330 = vmatprep.subr.bf16.mxu0 0
    %1331 = vmatpush1.bf16.msra.mxu0 0
    %1332 = vmatprep.subr.bf16.mxu0 0
    %1333 = vmatpush1.bf16.msra.mxu0 0
    %1334 = vmatprep.subr.bf16.mxu0 0
    %1335 = vmatpush1.bf16.msra.mxu0 0
    %1336 = vmatprep.subr.bf16.mxu0 0
    %1337 = vmatpush1.bf16.msra.mxu0 0
    %1338 = vmatprep.mubr.bf16.mxu0 0
    %1339 = vmatmul.mubr.bf16.gmra.mrb[0].mxu0 %v1305
    %v1340 = vpop.f32.mrb[0].mxu0
    %v1341 = vadd.f32 0.0, %v1340
    %v1342 = vpop.f32.mrb[0].mxu0
    %v1343 = vadd.f32 0.0, %v1342
    %v1344 = vpop.f32.mrb[0].mxu0
    %v1345 = vpop.f32.mrb[0].mxu0
    %1346 = vdwg.mxu0
    %1347 = vmatprep.subr.bf16.mxu0 %v700
    %1348 = vmatpush1.bf16.msra.mxu0 %v699
    %1349 = vmatprep.subr.bf16.mxu0 %v704
    %1350 = vmatpush1.bf16.msra.mxu0 %v703
    %1351 = vmatprep.subr.bf16.mxu0 %v708
    %1352 = vmatpush1.bf16.msra.mxu0 %v707
    %1353 = vmatprep.subr.bf16.mxu0 %v712
    %1354 = vmatpush1.bf16.msra.mxu0 %v711
    %1355 = vmatprep.subr.bf16.mxu0 %v716
    %1356 = vmatpush1.bf16.msra.mxu0 %v715
    %1357 = vmatprep.subr.bf16.mxu0 %v720
    %1358 = vmatpush1.bf16.msra.mxu0 %v719
    %1359 = vmatprep.subr.bf16.mxu0 %v724
    %1360 = vmatpush1.bf16.msra.mxu0 %v723
    %1361 = vmatprep.subr.bf16.mxu0 %v728
    %1362 = vmatpush1.bf16.msra.mxu0 %v727
    %1363 = vmatprep.subr.bf16.mxu0 0
    %1364 = vmatpush1.bf16.msra.mxu0 0
    %1365 = vmatprep.subr.bf16.mxu0 0
    %1366 = vmatpush1.bf16.msra.mxu0 0
    %1367 = vmatprep.subr.bf16.mxu0 0
    %1368 = vmatpush1.bf16.msra.mxu0 0
    %1369 = vmatprep.subr.bf16.mxu0 0
    %1370 = vmatpush1.bf16.msra.mxu0 0
    %1371 = vmatprep.subr.bf16.mxu0 0
    %1372 = vmatpush1.bf16.msra.mxu0 0
    %1373 = vmatprep.subr.bf16.mxu0 0
    %1374 = vmatpush1.bf16.msra.mxu0 0
    %1375 = vmatprep.subr.bf16.mxu0 0
    %1376 = vmatpush1.bf16.msra.mxu0 0
    %1377 = vmatprep.subr.bf16.mxu0 0
    %1378 = vmatpush1.bf16.msra.mxu0 0
    %1379 = vmatprep.mubr.bf16.mxu0 0
    %1380 = vmatmul.mubr.bf16.gmra.mrb[0].mxu0 %v1305
    %v1381 = vpop.f32.mrb[0].mxu0
    %v1382 = vadd.f32 0.0, %v1381
    %v1383 = vpop.f32.mrb[0].mxu0
    %v1384 = vadd.f32 0.0, %v1383
    %v1385 = vpop.f32.mrb[0].mxu0
    %v1386 = vpop.f32.mrb[0].mxu0
    %1387 = vdwg.mxu0
    %v1388 = vadd.f32 %v1301, %v1341
    %v1389 = vadd.f32 %v1302, %v1343
    %v1390 = vadd.f32 %v1303, %v1382
    %v1391 = vadd.f32 %v1304, %v1384
    %v1392 = vmul.f32 %v1388, 0.5
    %v1393 = vtanh.pop %v1392
    %v1394 = vmul.f32 %v1393, 0.5
    %v1395 = vadd.f32 %v1394, 0.5
    %v1396 = vmul.f32 %v1389, 0.5
    %v1397 = vtanh.pop %v1396
    %v1398 = vmul.f32 %v1397, 0.5
    %v1399 = vadd.f32 %v1398, 0.5
    %v1400 = vtanh.pop %v1390
    %v1401 = vmul.f32 %v1391, 0.5
    %v1402 = vtanh.pop %v1401
    %v1403 = vmul.f32 %v1402, 0.5
    %v1404 = vadd.f32 %v1403, 0.5
    %v1405 = vmul.f32 %v1399, %v1298
    %v1406 = vmul.f32 %v1395, %v1400
    %v1407 = vadd.f32 %v1405, %v1406
    %v1408 = vtanh.pop %v1407
    %v1409 = vmul.f32 %v1404, %v1408
    %v1410 = vld [vmem:[#allocation2 + $0xc0] sm:$0xff]
    %v1411 = vld [vmem:[#allocation2 + $0xc8] sm:$0xff]
    %v1412 = vld [vmem:[#allocation2 + $0xd0] sm:$0xff]
    %v1413 = vld [vmem:[#allocation2 + $0xd8] sm:$0xff]
    %v1414 = vpack.c.bf16 %v1409, %v1409
    %1415 = vmatprep.subr.bf16.mxu0 %v698
    %1416 = vmatpush1.bf16.msra.mxu0 %v697
    %1417 = vmatprep.subr.bf16.mxu0 %v702
    %1418 = vmatpush1.bf16.msra.mxu0 %v701
    %1419 = vmatprep.subr.bf16.mxu0 %v706
    %1420 = vmatpush1.bf16.msra.mxu0 %v705
    %1421 = vmatprep.subr.bf16.mxu0 %v710
    %1422 = vmatpush1.bf16.msra.mxu0 %v709
    %1423 = vmatprep.subr.bf16.mxu0 %v714
    %1424 = vmatpush1.bf16.msra.mxu0 %v713
    %1425 = vmatprep.subr.bf16.mxu0 %v718
    %1426 = vmatpush1.bf16.msra.mxu0 %v717
    %1427 = vmatprep.subr.bf16.mxu0 %v722
    %1428 = vmatpush1.bf16.msra.mxu0 %v721
    %1429 = vmatprep.subr.bf16.mxu0 %v726
    %1430 = vmatpush1.bf16.msra.mxu0 %v725
    %1431 = vmatprep.subr.bf16.mxu0 0
    %1432 = vmatpush1.bf16.msra.mxu0 0
    %1433 = vmatprep.subr.bf16.mxu0 0
    %1434 = vmatpush1.bf16.msra.mxu0 0
    %1435 = vmatprep.subr.bf16.mxu0 0
    %1436 = vmatpush1.bf16.msra.mxu0 0
    %1437 = vmatprep.subr.bf16.mxu0 0
    %1438 = vmatpush1.bf16.msra.mxu0 0
    %1439 = vmatprep.subr.bf16.mxu0 0
    %1440 = vmatpush1.bf16.msra.mxu0 0
    %1441 = vmatprep.subr.bf16.mxu0 0
    %1442 = vmatpush1.bf16.msra.mxu0 0
    %1443 = vmatprep.subr.bf16.mxu0 0
    %1444 = vmatpush1.bf16.msra.mxu0 0
    %1445 = vmatprep.subr.bf16.mxu0 0
    %1446 = vmatpush1.bf16.msra.mxu0 0
    %1447 = vmatprep.mubr.bf16.mxu0 0
    %1448 = vmatmul.mubr.bf16.gmra.mrb[0].mxu0 %v1414
    %v1449 = vpop.f32.mrb[0].mxu0
    %v1450 = vadd.f32 0.0, %v1449
    %v1451 = vpop.f32.mrb[0].mxu0
    %v1452 = vadd.f32 0.0, %v1451
    %v1453 = vpop.f32.mrb[0].mxu0
    %v1454 = vpop.f32.mrb[0].mxu0
    %1455 = vdwg.mxu0
    %1456 = vmatprep.subr.bf16.mxu0 %v700
    %1457 = vmatpush1.bf16.msra.mxu0 %v699
    %1458 = vmatprep.subr.bf16.mxu0 %v704
    %1459 = vmatpush1.bf16.msra.mxu0 %v703
    %1460 = vmatprep.subr.bf16.mxu0 %v708
    %1461 = vmatpush1.bf16.msra.mxu0 %v707
    %1462 = vmatprep.subr.bf16.mxu0 %v712
    %1463 = vmatpush1.bf16.msra.mxu0 %v711
    %1464 = vmatprep.subr.bf16.mxu0 %v716
    %1465 = vmatpush1.bf16.msra.mxu0 %v715
    %1466 = vmatprep.subr.bf16.mxu0 %v720
    %1467 = vmatpush1.bf16.msra.mxu0 %v719
    %1468 = vmatprep.subr.bf16.mxu0 %v724
    %1469 = vmatpush1.bf16.msra.mxu0 %v723
    %1470 = vmatprep.subr.bf16.mxu0 %v728
    %1471 = vmatpush1.bf16.msra.mxu0 %v727
    %1472 = vmatprep.subr.bf16.mxu0 0
    %1473 = vmatpush1.bf16.msra.mxu0 0
    %1474 = vmatprep.subr.bf16.mxu0 0
    %1475 = vmatpush1.bf16.msra.mxu0 0
    %1476 = vmatprep.subr.bf16.mxu0 0
    %1477 = vmatpush1.bf16.msra.mxu0 0
    %1478 = vmatprep.subr.bf16.mxu0 0
    %1479 = vmatpush1.bf16.msra.mxu0 0
    %1480 = vmatprep.subr.bf16.mxu0 0
    %1481 = vmatpush1.bf16.msra.mxu0 0
    %1482 = vmatprep.subr.bf16.mxu0 0
    %1483 = vmatpush1.bf16.msra.mxu0 0
    %1484 = vmatprep.subr.bf16.mxu0 0
    %1485 = vmatpush1.bf16.msra.mxu0 0
    %1486 = vmatprep.subr.bf16.mxu0 0
    %1487 = vmatpush1.bf16.msra.mxu0 0
    %1488 = vmatprep.mubr.bf16.mxu0 0
    %1489 = vmatmul.mubr.bf16.gmra.mrb[0].mxu0 %v1414
    %v1490 = vpop.f32.mrb[0].mxu0
    %v1491 = vadd.f32 0.0, %v1490
    %v1492 = vpop.f32.mrb[0].mxu0
    %v1493 = vadd.f32 0.0, %v1492
    %v1494 = vpop.f32.mrb[0].mxu0
    %v1495 = vpop.f32.mrb[0].mxu0
    %1496 = vdwg.mxu0
    %v1497 = vadd.f32 %v1410, %v1450
    %v1498 = vadd.f32 %v1411, %v1452
    %v1499 = vadd.f32 %v1412, %v1491
    %v1500 = vadd.f32 %v1413, %v1493
    %v1501 = vmul.f32 %v1497, 0.5
    %v1502 = vtanh.pop %v1501
    %v1503 = vmul.f32 %v1502, 0.5
    %v1504 = vadd.f32 %v1503, 0.5
    %v1505 = vmul.f32 %v1498, 0.5
    %v1506 = vtanh.pop %v1505
    %v1507 = vmul.f32 %v1506, 0.5
    %v1508 = vadd.f32 %v1507, 0.5
    %v1509 = vtanh.pop %v1499
    %v1510 = vmul.f32 %v1500, 0.5
    %v1511 = vtanh.pop %v1510
    %v1512 = vmul.f32 %v1511, 0.5
    %v1513 = vadd.f32 %v1512, 0.5
    %v1514 = vmul.f32 %v1508, %v1407
    %v1515 = vmul.f32 %v1504, %v1509
    %v1516 = vadd.f32 %v1514, %v1515
    %v1517 = vtanh.pop %v1516
    %v1518 = vmul.f32 %v1513, %v1517
    %1519 = vst [vmem:[#allocation3] sm:$0xff] %v1518
    %v1520 = vld [vmem:[#allocation2 + $0xe0] sm:$0xff]
    %v1521 = vld [vmem:[#allocation2 + $0xe8] sm:$0xff]
    %v1522 = vld [vmem:[#allocation2 + $0xf0] sm:$0xff]
    %v1523 = vld [vmem:[#allocation2 + $0xf8] sm:$0xff]
    %v1524 = vpack.c.bf16 %v1518, %v1518
    %v1525 = vld [vmem:[#allocation7] sm:$0xff]
    %v1526 = vld [vmem:[#allocation7 + $0x8] sm:$0xff]
    %v1527 = vld [vmem:[#allocation7 + $0x10] sm:$0xff]
    %v1528 = vld [vmem:[#allocation7 + $0x18] sm:$0xff]
    %v1529 = vld [vmem:[#allocation7 + $0x20] sm:$0xff]
    %v1530 = vld [vmem:[#allocation7 + $0x28] sm:$0xff]
    %v1531 = vld [vmem:[#allocation7 + $0x30] sm:$0xff]
    %v1532 = vld [vmem:[#allocation7 + $0x38] sm:$0xff]
    %v1533 = vld [vmem:[#allocation7 + $0x40] sm:$0xff]
    %v1534 = vld [vmem:[#allocation7 + $0x48] sm:$0xff]
    %v1535 = vld [vmem:[#allocation7 + $0x50] sm:$0xff]
    %v1536 = vld [vmem:[#allocation7 + $0x58] sm:$0xff]
    %v1537 = vld [vmem:[#allocation7 + $0x60] sm:$0xff]
    %v1538 = vld [vmem:[#allocation7 + $0x68] sm:$0xff]
    %v1539 = vld [vmem:[#allocation7 + $0x70] sm:$0xff]
    %v1540 = vld [vmem:[#allocation7 + $0x78] sm:$0xff]
    %v1541 = vld [vmem:[#allocation7 + $0x80] sm:$0xff]
    %v1542 = vld [vmem:[#allocation7 + $0x88] sm:$0xff]
    %v1543 = vld [vmem:[#allocation7 + $0x90] sm:$0xff]
    %v1544 = vld [vmem:[#allocation7 + $0x98] sm:$0xff]
    %v1545 = vld [vmem:[#allocation7 + $0xa0] sm:$0xff]
    %v1546 = vld [vmem:[#allocation7 + $0xa8] sm:$0xff]
    %v1547 = vld [vmem:[#allocation7 + $0xb0] sm:$0xff]
    %v1548 = vld [vmem:[#allocation7 + $0xb8] sm:$0xff]
    %v1549 = vld [vmem:[#allocation7 + $0xc0] sm:$0xff]
    %v1550 = vld [vmem:[#allocation7 + $0xc8] sm:$0xff]
    %v1551 = vld [vmem:[#allocation7 + $0xd0] sm:$0xff]
    %v1552 = vld [vmem:[#allocation7 + $0xd8] sm:$0xff]
    %v1553 = vld [vmem:[#allocation7 + $0xe0] sm:$0xff]
    %v1554 = vld [vmem:[#allocation7 + $0xe8] sm:$0xff]
    %v1555 = vld [vmem:[#allocation7 + $0xf0] sm:$0xff]
    %v1556 = vld [vmem:[#allocation7 + $0xf8] sm:$0xff]
    %v1589 = vunpack.c.l.b16 %v1525
    %v1590 = vunpack.c.h.b16 %v1525
    %v1591 = vunpack.c.l.b16 %v1526
    %v1592 = vunpack.c.h.b16 %v1526
    %v1593 = vunpack.c.l.b16 %v1527
    %v1594 = vunpack.c.h.b16 %v1527
    %v1595 = vunpack.c.l.b16 %v1528
    %v1596 = vunpack.c.h.b16 %v1528
    %v1597 = vunpack.c.l.b16 %v1529
    %v1598 = vunpack.c.h.b16 %v1529
    %v1599 = vunpack.c.l.b16 %v1530
    %v1600 = vunpack.c.h.b16 %v1530
    %v1601 = vunpack.c.l.b16 %v1531
    %v1602 = vunpack.c.h.b16 %v1531
    %v1603 = vunpack.c.l.b16 %v1532
    %v1604 = vunpack.c.h.b16 %v1532
    %v1605 = vunpack.c.l.b16 %v1533
    %v1606 = vunpack.c.h.b16 %v1533
    %v1607 = vunpack.c.l.b16 %v1534
    %v1608 = vunpack.c.h.b16 %v1534
    %v1609 = vunpack.c.l.b16 %v1535
    %v1610 = vunpack.c.h.b16 %v1535
    %v1611 = vunpack.c.l.b16 %v1536
    %v1612 = vunpack.c.h.b16 %v1536
    %v1613 = vunpack.c.l.b16 %v1537
    %v1614 = vunpack.c.h.b16 %v1537
    %v1615 = vunpack.c.l.b16 %v1538
    %v1616 = vunpack.c.h.b16 %v1538
    %v1617 = vunpack.c.l.b16 %v1539
    %v1618 = vunpack.c.h.b16 %v1539
    %v1619 = vunpack.c.l.b16 %v1540
    %v1620 = vunpack.c.h.b16 %v1540
    %v1621 = vunpack.c.l.b16 %v1541
    %v1622 = vunpack.c.h.b16 %v1541
    %v1623 = vunpack.c.l.b16 %v1542
    %v1624 = vunpack.c.h.b16 %v1542
    %v1625 = vunpack.c.l.b16 %v1543
    %v1626 = vunpack.c.h.b16 %v1543
    %v1627 = vunpack.c.l.b16 %v1544
    %v1628 = vunpack.c.h.b16 %v1544
    %v1629 = vunpack.c.l.b16 %v1545
    %v1630 = vunpack.c.h.b16 %v1545
    %v1631 = vunpack.c.l.b16 %v1546
    %v1632 = vunpack.c.h.b16 %v1546
    %v1633 = vunpack.c.l.b16 %v1547
    %v1634 = vunpack.c.h.b16 %v1547
    %v1635 = vunpack.c.l.b16 %v1548
    %v1636 = vunpack.c.h.b16 %v1548
    %v1637 = vunpack.c.l.b16 %v1549
    %v1638 = vunpack.c.h.b16 %v1549
    %v1639 = vunpack.c.l.b16 %v1550
    %v1640 = vunpack.c.h.b16 %v1550
    %v1641 = vunpack.c.l.b16 %v1551
    %v1642 = vunpack.c.h.b16 %v1551
    %v1643 = vunpack.c.l.b16 %v1552
    %v1644 = vunpack.c.h.b16 %v1552
    %v1645 = vunpack.c.l.b16 %v1553
    %v1646 = vunpack.c.h.b16 %v1553
    %v1647 = vunpack.c.l.b16 %v1554
    %v1648 = vunpack.c.h.b16 %v1554
    %v1649 = vunpack.c.l.b16 %v1555
    %v1650 = vunpack.c.h.b16 %v1555
    %v1651 = vunpack.c.l.b16 %v1556
    %v1652 = vunpack.c.h.b16 %v1556
    %v1653 = vpack.c.b16 %v1593, %v1589
    %v1654 = vpack.c.b16 %v1594, %v1590
    %v1655 = vpack.c.b16 %v1595, %v1591
    %v1656 = vpack.c.b16 %v1596, %v1592
    %v1657 = vpack.c.b16 %v1601, %v1597
    %v1658 = vpack.c.b16 %v1602, %v1598
    %v1659 = vpack.c.b16 %v1603, %v1599
    %v1660 = vpack.c.b16 %v1604, %v1600
    %v1661 = vpack.c.b16 %v1609, %v1605
    %v1662 = vpack.c.b16 %v1610, %v1606
    %v1663 = vpack.c.b16 %v1611, %v1607
    %v1664 = vpack.c.b16 %v1612, %v1608
    %v1665 = vpack.c.b16 %v1617, %v1613
    %v1666 = vpack.c.b16 %v1618, %v1614
    %v1667 = vpack.c.b16 %v1619, %v1615
    %v1668 = vpack.c.b16 %v1620, %v1616
    %v1669 = vpack.c.b16 %v1625, %v1621
    %v1670 = vpack.c.b16 %v1626, %v1622
    %v1671 = vpack.c.b16 %v1627, %v1623
    %v1672 = vpack.c.b16 %v1628, %v1624
    %v1673 = vpack.c.b16 %v1633, %v1629
    %v1674 = vpack.c.b16 %v1634, %v1630
    %v1675 = vpack.c.b16 %v1635, %v1631
    %v1676 = vpack.c.b16 %v1636, %v1632
    %v1677 = vpack.c.b16 %v1641, %v1637
    %v1678 = vpack.c.b16 %v1642, %v1638
    %v1679 = vpack.c.b16 %v1643, %v1639
    %v1680 = vpack.c.b16 %v1644, %v1640
    %v1681 = vpack.c.b16 %v1649, %v1645
    %v1682 = vpack.c.b16 %v1650, %v1646
    %v1683 = vpack.c.b16 %v1651, %v1647
    %v1684 = vpack.c.b16 %v1652, %v1648
    %1717 = vmatprep.subr.bf16.mxu0 %v1654
    %1718 = vmatpush1.bf16.msra.mxu0 %v1653
    %1719 = vmatprep.subr.bf16.mxu0 %v1658
    %1720 = vmatpush1.bf16.msra.mxu0 %v1657
    %1721 = vmatprep.subr.bf16.mxu0 %v1662
    %1722 = vmatpush1.bf16.msra.mxu0 %v1661
    %1723 = vmatprep.subr.bf16.mxu0 %v1666
    %1724 = vmatpush1.bf16.msra.mxu0 %v1665
    %1725 = vmatprep.subr.bf16.mxu0 %v1670
    %1726 = vmatpush1.bf16.msra.mxu0 %v1669
    %1727 = vmatprep.subr.bf16.mxu0 %v1674
    %1728 = vmatpush1.bf16.msra.mxu0 %v1673
    %1729 = vmatprep.subr.bf16.mxu0 %v1678
    %1730 = vmatpush1.bf16.msra.mxu0 %v1677
    %1731 = vmatprep.subr.bf16.mxu0 %v1682
    %1732 = vmatpush1.bf16.msra.mxu0 %v1681
    %1733 = vmatprep.subr.bf16.mxu0 0
    %1734 = vmatpush1.bf16.msra.mxu0 0
    %1735 = vmatprep.subr.bf16.mxu0 0
    %1736 = vmatpush1.bf16.msra.mxu0 0
    %1737 = vmatprep.subr.bf16.mxu0 0
    %1738 = vmatpush1.bf16.msra.mxu0 0
    %1739 = vmatprep.subr.bf16.mxu0 0
    %1740 = vmatpush1.bf16.msra.mxu0 0
    %1741 = vmatprep.subr.bf16.mxu0 0
    %1742 = vmatpush1.bf16.msra.mxu0 0
    %1743 = vmatprep.subr.bf16.mxu0 0
    %1744 = vmatpush1.bf16.msra.mxu0 0
    %1745 = vmatprep.subr.bf16.mxu0 0
    %1746 = vmatpush1.bf16.msra.mxu0 0
    %1747 = vmatprep.subr.bf16.mxu0 0
    %1748 = vmatpush1.bf16.msra.mxu0 0
    %1749 = vmatprep.mubr.bf16.mxu0 0
    %1750 = vmatmul.mubr.bf16.gmra.mrb[0].mxu0 %v1524
    %v1751 = vpop.f32.mrb[0].mxu0
    %v1752 = vadd.f32 0.0, %v1751
    %v1753 = vpop.f32.mrb[0].mxu0
    %v1754 = vadd.f32 0.0, %v1753
    %v1755 = vpop.f32.mrb[0].mxu0
    %v1756 = vpop.f32.mrb[0].mxu0
    %1757 = vdwg.mxu0
    %1758 = vmatprep.subr.bf16.mxu0 %v1656
    %1759 = vmatpush1.bf16.msra.mxu0 %v1655
    %1760 = vmatprep.subr.bf16.mxu0 %v1660
    %1761 = vmatpush1.bf16.msra.mxu0 %v1659
    %1762 = vmatprep.subr.bf16.mxu0 %v1664
    %1763 = vmatpush1.bf16.msra.mxu0 %v1663
    %1764 = vmatprep.subr.bf16.mxu0 %v1668
    %1765 = vmatpush1.bf16.msra.mxu0 %v1667
    %1766 = vmatprep.subr.bf16.mxu0 %v1672
    %1767 = vmatpush1.bf16.msra.mxu0 %v1671
    %1768 = vmatprep.subr.bf16.mxu0 %v1676
    %1769 = vmatpush1.bf16.msra.mxu0 %v1675
    %1770 = vmatprep.subr.bf16.mxu0 %v1680
    %1771 = vmatpush1.bf16.msra.mxu0 %v1679
    %1772 = vmatprep.subr.bf16.mxu0 %v1684
    %1773 = vmatpush1.bf16.msra.mxu0 %v1683
    %1774 = vmatprep.subr.bf16.mxu0 0
    %1775 = vmatpush1.bf16.msra.mxu0 0
    %1776 = vmatprep.subr.bf16.mxu0 0
    %1777 = vmatpush1.bf16.msra.mxu0 0
    %1778 = vmatprep.subr.bf16.mxu0 0
    %1779 = vmatpush1.bf16.msra.mxu0 0
    %1780 = vmatprep.subr.bf16.mxu0 0
    %1781 = vmatpush1.bf16.msra.mxu0 0
    %1782 = vmatprep.subr.bf16.mxu0 0
    %1783 = vmatpush1.bf16.msra.mxu0 0
    %1784 = vmatprep.subr.bf16.mxu0 0
    %1785 = vmatpush1.bf16.msra.mxu0 0
    %1786 = vmatprep.subr.bf16.mxu0 0
    %1787 = vmatpush1.bf16.msra.mxu0 0
    %1788 = vmatprep.subr.bf16.mxu0 0
    %1789 = vmatpush1.bf16.msra.mxu0 0
    %1790 = vmatprep.mubr.bf16.mxu0 0
    %1791 = vmatmul.mubr.bf16.gmra.mrb[0].mxu0 %v1524
    %v1792 = vpop.f32.mrb[0].mxu0
    %v1793 = vadd.f32 0.0, %v1792
    %v1794 = vpop.f32.mrb[0].mxu0
    %v1795 = vadd.f32 0.0, %v1794
    %v1796 = vpop.f32.mrb[0].mxu0
    %v1797 = vpop.f32.mrb[0].mxu0
    %1798 = vdwg.mxu0
    %v1799 = vadd.f32 %v1520, %v1752
    %v1800 = vadd.f32 %v1521, %v1754
    %v1801 = vadd.f32 %v1522, %v1793
    %v1802 = vadd.f32 %v1523, %v1795
    %v1803 = vmul.f32 %v1799, 0.5
    %v1804 = vtanh.pop %v1803
    %v1805 = vmul.f32 %v1804, 0.5
    %v1806 = vadd.f32 %v1805, 0.5
    %v1807 = vmul.f32 %v1800, 0.5
    %v1808 = vtanh.pop %v1807
    %v1809 = vmul.f32 %v1808, 0.5
    %v1810 = vadd.f32 %v1809, 0.5
    %v1811 = vtanh.pop %v1801
    %v1812 = vmul.f32 %v1802, 0.5
    %v1813 = vtanh.pop %v1812
    %v1814 = vmul.f32 %v1813, 0.5
    %v1815 = vadd.f32 %v1814, 0.5
    %v1816 = vmul.f32 %v1810, %v1516
    %v1817 = vmul.f32 %v1806, %v1811
    %v1818 = vadd.f32 %v1816, %v1817
    %v1819 = vtanh.pop %v1818
    %v1820 = vmul.f32 %v1815, %v1819
    %1821 = vst [vmem:[#allocation3 + $0x8] sm:$0xff] %v1820
    %v1822 = vld [vmem:[#allocation2 + $0x100] sm:$0xff]
    %v1823 = vld [vmem:[#allocation2 + $0x108] sm:$0xff]
    %v1824 = vld [vmem:[#allocation2 + $0x110] sm:$0xff]
    %v1825 = vld [vmem:[#allocation2 + $0x118] sm:$0xff]
    %v1826 = vpack.c.bf16 %v1820, %v1820
    %v1827 = vld [vmem:[#allocation7] sm:$0xff]
    %v1828 = vld [vmem:[#allocation7 + $0x8] sm:$0xff]
    %v1829 = vld [vmem:[#allocation7 + $0x10] sm:$0xff]
    %v1830 = vld [vmem:[#allocation7 + $0x18] sm:$0xff]
    %v1831 = vld [vmem:[#allocation7 + $0x20] sm:$0xff]
    %v1832 = vld [vmem:[#allocation7 + $0x28] sm:$0xff]
    %v1833 = vld [vmem:[#allocation7 + $0x30] sm:$0xff]
    %v1834 = vld [vmem:[#allocation7 + $0x38] sm:$0xff]
    %v1835 = vld [vmem:[#allocation7 + $0x40] sm:$0xff]
    %v1836 = vld [vmem:[#allocation7 + $0x48] sm:$0xff]
    %v1837 = vld [vmem:[#allocation7 + $0x50] sm:$0xff]
    %v1838 = vld [vmem:[#allocation7 + $0x58] sm:$0xff]
    %v1839 = vld [vmem:[#allocation7 + $0x60] sm:$0xff]
    %v1840 = vld [vmem:[#allocation7 + $0x68] sm:$0xff]
    %v1841 = vld [vmem:[#allocation7 + $0x70] sm:$0xff]
    %v1842 = vld [vmem:[#allocation7 + $0x78] sm:$0xff]
    %v1843 = vld [vmem:[#allocation7 + $0x80] sm:$0xff]
    %v1844 = vld [vmem:[#allocation7 + $0x88] sm:$0xff]
    %v1845 = vld [vmem:[#allocation7 + $0x90] sm:$0xff]
    %v1846 = vld [vmem:[#allocation7 + $0x98] sm:$0xff]
    %v1847 = vld [vmem:[#allocation7 + $0xa0] sm:$0xff]
    %v1848 = vld [vmem:[#allocation7 + $0xa8] sm:$0xff]
    %v1849 = vld [vmem:[#allocation7 + $0xb0] sm:$0xff]
    %v1850 = vld [vmem:[#allocation7 + $0xb8] sm:$0xff]
    %v1851 = vld [vmem:[#allocation7 + $0xc0] sm:$0xff]
    %v1852 = vld [vmem:[#allocation7 + $0xc8] sm:$0xff]
    %v1853 = vld [vmem:[#allocation7 + $0xd0] sm:$0xff]
    %v1854 = vld [vmem:[#allocation7 + $0xd8] sm:$0xff]
    %v1855 = vld [vmem:[#allocation7 + $0xe0] sm:$0xff]
    %v1856 = vld [vmem:[#allocation7 + $0xe8] sm:$0xff]
    %v1857 = vld [vmem:[#allocation7 + $0xf0] sm:$0xff]
    %v1858 = vld [vmem:[#allocation7 + $0xf8] sm:$0xff]
    %v1891 = vunpack.c.l.b16 %v1827
    %v1892 = vunpack.c.h.b16 %v1827
    %v1893 = vunpack.c.l.b16 %v1828
    %v1894 = vunpack.c.h.b16 %v1828
    %v1895 = vunpack.c.l.b16 %v1829
    %v1896 = vunpack.c.h.b16 %v1829
    %v1897 = vunpack.c.l.b16 %v1830
    %v1898 = vunpack.c.h.b16 %v1830
    %v1899 = vunpack.c.l.b16 %v1831
    %v1900 = vunpack.c.h.b16 %v1831
    %v1901 = vunpack.c.l.b16 %v1832
    %v1902 = vunpack.c.h.b16 %v1832
    %v1903 = vunpack.c.l.b16 %v1833
    %v1904 = vunpack.c.h.b16 %v1833
    %v1905 = vunpack.c.l.b16 %v1834
    %v1906 = vunpack.c.h.b16 %v1834
    %v1907 = vunpack.c.l.b16 %v1835
    %v1908 = vunpack.c.h.b16 %v1835
    %v1909 = vunpack.c.l.b16 %v1836
    %v1910 = vunpack.c.h.b16 %v1836
    %v1911 = vunpack.c.l.b16 %v1837
    %v1912 = vunpack.c.h.b16 %v1837
    %v1913 = vunpack.c.l.b16 %v1838
    %v1914 = vunpack.c.h.b16 %v1838
    %v1915 = vunpack.c.l.b16 %v1839
    %v1916 = vunpack.c.h.b16 %v1839
    %v1917 = vunpack.c.l.b16 %v1840
    %v1918 = vunpack.c.h.b16 %v1840
    %v1919 = vunpack.c.l.b16 %v1841
    %v1920 = vunpack.c.h.b16 %v1841
    %v1921 = vunpack.c.l.b16 %v1842
    %v1922 = vunpack.c.h.b16 %v1842
    %v1923 = vunpack.c.l.b16 %v1843
    %v1924 = vunpack.c.h.b16 %v1843
    %v1925 = vunpack.c.l.b16 %v1844
    %v1926 = vunpack.c.h.b16 %v1844
    %v1927 = vunpack.c.l.b16 %v1845
    %v1928 = vunpack.c.h.b16 %v1845
    %v1929 = vunpack.c.l.b16 %v1846
    %v1930 = vunpack.c.h.b16 %v1846
    %v1931 = vunpack.c.l.b16 %v1847
    %v1932 = vunpack.c.h.b16 %v1847
    %v1933 = vunpack.c.l.b16 %v1848
    %v1934 = vunpack.c.h.b16 %v1848
    %v1935 = vunpack.c.l.b16 %v1849
    %v1936 = vunpack.c.h.b16 %v1849
    %v1937 = vunpack.c.l.b16 %v1850
    %v1938 = vunpack.c.h.b16 %v1850
    %v1939 = vunpack.c.l.b16 %v1851
    %v1940 = vunpack.c.h.b16 %v1851
    %v1941 = vunpack.c.l.b16 %v1852
    %v1942 = vunpack.c.h.b16 %v1852
    %v1943 = vunpack.c.l.b16 %v1853
    %v1944 = vunpack.c.h.b16 %v1853
    %v1945 = vunpack.c.l.b16 %v1854
    %v1946 = vunpack.c.h.b16 %v1854
    %v1947 = vunpack.c.l.b16 %v1855
    %v1948 = vunpack.c.h.b16 %v1855
    %v1949 = vunpack.c.l.b16 %v1856
    %v1950 = vunpack.c.h.b16 %v1856
    %v1951 = vunpack.c.l.b16 %v1857
    %v1952 = vunpack.c.h.b16 %v1857
    %v1953 = vunpack.c.l.b16 %v1858
    %v1954 = vunpack.c.h.b16 %v1858
    %v1955 = vpack.c.b16 %v1895, %v1891
    %v1956 = vpack.c.b16 %v1896, %v1892
    %v1957 = vpack.c.b16 %v1897, %v1893
    %v1958 = vpack.c.b16 %v1898, %v1894
    %v1959 = vpack.c.b16 %v1903, %v1899
    %v1960 = vpack.c.b16 %v1904, %v1900
    %v1961 = vpack.c.b16 %v1905, %v1901
    %v1962 = vpack.c.b16 %v1906, %v1902
    %v1963 = vpack.c.b16 %v1911, %v1907
    %v1964 = vpack.c.b16 %v1912, %v1908
    %v1965 = vpack.c.b16 %v1913, %v1909
    %v1966 = vpack.c.b16 %v1914, %v1910
    %v1967 = vpack.c.b16 %v1919, %v1915
    %v1968 = vpack.c.b16 %v1920, %v1916
    %v1969 = vpack.c.b16 %v1921, %v1917
    %v1970 = vpack.c.b16 %v1922, %v1918
    %v1971 = vpack.c.b16 %v1927, %v1923
    %v1972 = vpack.c.b16 %v1928, %v1924
    %v1973 = vpack.c.b16 %v1929, %v1925
    %v1974 = vpack.c.b16 %v1930, %v1926
    %v1975 = vpack.c.b16 %v1935, %v1931
    %v1976 = vpack.c.b16 %v1936, %v1932
    %v1977 = vpack.c.b16 %v1937, %v1933
    %v1978 = vpack.c.b16 %v1938, %v1934
    %v1979 = vpack.c.b16 %v1943, %v1939
    %v1980 = vpack.c.b16 %v1944, %v1940
    %v1981 = vpack.c.b16 %v1945, %v1941
    %v1982 = vpack.c.b16 %v1946, %v1942
    %v1983 = vpack.c.b16 %v1951, %v1947
    %v1984 = vpack.c.b16 %v1952, %v1948
    %v1985 = vpack.c.b16 %v1953, %v1949
    %v1986 = vpack.c.b16 %v1954, %v1950
    %2019 = vmatprep.subr.bf16.mxu0 %v1956
    %2020 = vmatpush1.bf16.msra.mxu0 %v1955
    %2021 = vmatprep.subr.bf16.mxu0 %v1960
    %2022 = vmatpush1.bf16.msra.mxu0 %v1959
    %2023 = vmatprep.subr.bf16.mxu0 %v1964
    %2024 = vmatpush1.bf16.msra.mxu0 %v1963
    %2025 = vmatprep.subr.bf16.mxu0 %v1968
    %2026 = vmatpush1.bf16.msra.mxu0 %v1967
    %2027 = vmatprep.subr.bf16.mxu0 %v1972
    %2028 = vmatpush1.bf16.msra.mxu0 %v1971
    %2029 = vmatprep.subr.bf16.mxu0 %v1976
    %2030 = vmatpush1.bf16.msra.mxu0 %v1975
    %2031 = vmatprep.subr.bf16.mxu0 %v1980
    %2032 = vmatpush1.bf16.msra.mxu0 %v1979
    %2033 = vmatprep.subr.bf16.mxu0 %v1984
    %2034 = vmatpush1.bf16.msra.mxu0 %v1983
    %2035 = vmatprep.subr.bf16.mxu0 0
    %2036 = vmatpush1.bf16.msra.mxu0 0
    %2037 = vmatprep.subr.bf16.mxu0 0
    %2038 = vmatpush1.bf16.msra.mxu0 0
    %2039 = vmatprep.subr.bf16.mxu0 0
    %2040 = vmatpush1.bf16.msra.mxu0 0
    %2041 = vmatprep.subr.bf16.mxu0 0
    %2042 = vmatpush1.bf16.msra.mxu0 0
    %2043 = vmatprep.subr.bf16.mxu0 0
    %2044 = vmatpush1.bf16.msra.mxu0 0
    %2045 = vmatprep.subr.bf16.mxu0 0
    %2046 = vmatpush1.bf16.msra.mxu0 0
    %2047 = vmatprep.subr.bf16.mxu0 0
    %2048 = vmatpush1.bf16.msra.mxu0 0
    %2049 = vmatprep.subr.bf16.mxu0 0
    %2050 = vmatpush1.bf16.msra.mxu0 0
    %2051 = vmatprep.mubr.bf16.mxu0 0
    %2052 = vmatmul.mubr.bf16.gmra.mrb[0].mxu0 %v1826
    %v2053 = vpop.f32.mrb[0].mxu0
    %v2054 = vadd.f32 0.0, %v2053
    %v2055 = vpop.f32.mrb[0].mxu0
    %v2056 = vadd.f32 0.0, %v2055
    %v2057 = vpop.f32.mrb[0].mxu0
    %v2058 = vpop.f32.mrb[0].mxu0
    %2059 = vdwg.mxu0
    %2060 = vmatprep.subr.bf16.mxu0 %v1958
    %2061 = vmatpush1.bf16.msra.mxu0 %v1957
    %2062 = vmatprep.subr.bf16.mxu0 %v1962
    %2063 = vmatpush1.bf16.msra.mxu0 %v1961
    %2064 = vmatprep.subr.bf16.mxu0 %v1966
    %2065 = vmatpush1.bf16.msra.mxu0 %v1965
    %2066 = vmatprep.subr.bf16.mxu0 %v1970
    %2067 = vmatpush1.bf16.msra.mxu0 %v1969
    %2068 = vmatprep.subr.bf16.mxu0 %v1974
    %2069 = vmatpush1.bf16.msra.mxu0 %v1973
    %2070 = vmatprep.subr.bf16.mxu0 %v1978
    %2071 = vmatpush1.bf16.msra.mxu0 %v1977
    %2072 = vmatprep.subr.bf16.mxu0 %v1982
    %2073 = vmatpush1.bf16.msra.mxu0 %v1981
    %2074 = vmatprep.subr.bf16.mxu0 %v1986
    %2075 = vmatpush1.bf16.msra.mxu0 %v1985
    %2076 = vmatprep.subr.bf16.mxu0 0
    %2077 = vmatpush1.bf16.msra.mxu0 0
    %2078 = vmatprep.subr.bf16.mxu0 0
    %2079 = vmatpush1.bf16.msra.mxu0 0
    %2080 = vmatprep.subr.bf16.mxu0 0
    %2081 = vmatpush1.bf16.msra.mxu0 0
    %2082 = vmatprep.subr.bf16.mxu0 0
    %2083 = vmatpush1.bf16.msra.mxu0 0
    %2084 = vmatprep.subr.bf16.mxu0 0
    %2085 = vmatpush1.bf16.msra.mxu0 0
    %2086 = vmatprep.subr.bf16.mxu0 0
    %2087 = vmatpush1.bf16.msra.mxu0 0
    %2088 = vmatprep.subr.bf16.mxu0 0
    %2089 = vmatpush1.bf16.msra.mxu0 0
    %2090 = vmatprep.subr.bf16.mxu0 0
    %2091 = vmatpush1.bf16.msra.mxu0 0
    %2092 = vmatprep.mubr.bf16.mxu0 0
    %2093 = vmatmul.mubr.bf16.gmra.mrb[0].mxu0 %v1826
    %v2094 = vpop.f32.mrb[0].mxu0
    %v2095 = vadd.f32 0.0, %v2094
    %v2096 = vpop.f32.mrb[0].mxu0
    %v2097 = vadd.f32 0.0, %v2096
    %v2098 = vpop.f32.mrb[0].mxu0
    %v2099 = vpop.f32.mrb[0].mxu0
    %2100 = vdwg.mxu0
    %v2101 = vadd.f32 %v1822, %v2054
    %v2102 = vadd.f32 %v1823, %v2056
    %v2103 = vadd.f32 %v1824, %v2095
    %v2104 = vadd.f32 %v1825, %v2097
    %v2105 = vmul.f32 %v2101, 0.5
    %v2106 = vtanh.pop %v2105
    %v2107 = vmul.f32 %v2106, 0.5
    %v2108 = vadd.f32 %v2107, 0.5
    %v2109 = vmul.f32 %v2102, 0.5
    %v2110 = vtanh.pop %v2109
    %v2111 = vmul.f32 %v2110, 0.5
    %v2112 = vadd.f32 %v2111, 0.5
    %v2113 = vtanh.pop %v2103
    %v2114 = vmul.f32 %v2104, 0.5
    %v2115 = vtanh.pop %v2114
    %v2116 = vmul.f32 %v2115, 0.5
    %v2117 = vadd.f32 %v2116, 0.5
    %v2118 = vmul.f32 %v2112, %v1818
    %v2119 = vmul.f32 %v2108, %v2113
    %v2120 = vadd.f32 %v2118, %v2119
    %v2121 = vtanh.pop %v2120
    %v2122 = vmul.f32 %v2117, %v2121
    %2123 = vst [vmem:[#allocation3 + $0x10] sm:$0xff] %v2122
    %v2124 = vld [vmem:[#allocation2 + $0x120] sm:$0xff]
    %v2125 = vld [vmem:[#allocation2 + $0x128] sm:$0xff]
    %v2126 = vld [vmem:[#allocation2 + $0x130] sm:$0xff]
    %v2127 = vld [vmem:[#allocation2 + $0x138] sm:$0xff]
    %v2128 = vpack.c.bf16 %v2122, %v2122
    %v2129 = vld [vmem:[#allocation7] sm:$0xff]
    %v2130 = vld [vmem:[#allocation7 + $0x8] sm:$0xff]
    %v2131 = vld [vmem:[#allocation7 + $0x10] sm:$0xff]
    %v2132 = vld [vmem:[#allocation7 + $0x18] sm:$0xff]
    %v2133 = vld [vmem:[#allocation7 + $0x20] sm:$0xff]
    %v2134 = vld [vmem:[#allocation7 + $0x28] sm:$0xff]
    %v2135 = vld [vmem:[#allocation7 + $0x30] sm:$0xff]
    %v2136 = vld [vmem:[#allocation7 + $0x38] sm:$0xff]
    %v2137 = vld [vmem:[#allocation7 + $0x40] sm:$0xff]
    %v2138 = vld [vmem:[#allocation7 + $0x48] sm:$0xff]
    %v2139 = vld [vmem:[#allocation7 + $0x50] sm:$0xff]
    %v2140 = vld [vmem:[#allocation7 + $0x58] sm:$0xff]
    %v2141 = vld [vmem:[#allocation7 + $0x60] sm:$0xff]
    %v2142 = vld [vmem:[#allocation7 + $0x68] sm:$0xff]
    %v2143 = vld [vmem:[#allocation7 + $0x70] sm:$0xff]
    %v2144 = vld [vmem:[#allocation7 + $0x78] sm:$0xff]
    %v2145 = vld [vmem:[#allocation7 + $0x80] sm:$0xff]
    %v2146 = vld [vmem:[#allocation7 + $0x88] sm:$0xff]
    %v2147 = vld [vmem:[#allocation7 + $0x90] sm:$0xff]
    %v2148 = vld [vmem:[#allocation7 + $0x98] sm:$0xff]
    %v2149 = vld [vmem:[#allocation7 + $0xa0] sm:$0xff]
    %v2150 = vld [vmem:[#allocation7 + $0xa8] sm:$0xff]
    %v2151 = vld [vmem:[#allocation7 + $0xb0] sm:$0xff]
    %v2152 = vld [vmem:[#allocation7 + $0xb8] sm:$0xff]
    %v2153 = vld [vmem:[#allocation7 + $0xc0] sm:$0xff]
    %v2154 = vld [vmem:[#allocation7 + $0xc8] sm:$0xff]
    %v2155 = vld [vmem:[#allocation7 + $0xd0] sm:$0xff]
    %v2156 = vld [vmem:[#allocation7 + $0xd8] sm:$0xff]
    %v2157 = vld [vmem:[#allocation7 + $0xe0] sm:$0xff]
    %v2158 = vld [vmem:[#allocation7 + $0xe8] sm:$0xff]
    %v2159 = vld [vmem:[#allocation7 + $0xf0] sm:$0xff]
    %v2160 = vld [vmem:[#allocation7 + $0xf8] sm:$0xff]
    %v2193 = vunpack.c.l.b16 %v2129
    %v2194 = vunpack.c.h.b16 %v2129
    %v2195 = vunpack.c.l.b16 %v2130
    %v2196 = vunpack.c.h.b16 %v2130
    %v2197 = vunpack.c.l.b16 %v2131
    %v2198 = vunpack.c.h.b16 %v2131
    %v2199 = vunpack.c.l.b16 %v2132
    %v2200 = vunpack.c.h.b16 %v2132
    %v2201 = vunpack.c.l.b16 %v2133
    %v2202 = vunpack.c.h.b16 %v2133
    %v2203 = vunpack.c.l.b16 %v2134
    %v2204 = vunpack.c.h.b16 %v2134
    %v2205 = vunpack.c.l.b16 %v2135
    %v2206 = vunpack.c.h.b16 %v2135
    %v2207 = vunpack.c.l.b16 %v2136
    %v2208 = vunpack.c.h.b16 %v2136
    %v2209 = vunpack.c.l.b16 %v2137
    %v2210 = vunpack.c.h.b16 %v2137
    %v2211 = vunpack.c.l.b16 %v2138
    %v2212 = vunpack.c.h.b16 %v2138
    %v2213 = vunpack.c.l.b16 %v2139
    %v2214 = vunpack.c.h.b16 %v2139
    %v2215 = vunpack.c.l.b16 %v2140
    %v2216 = vunpack.c.h.b16 %v2140
    %v2217 = vunpack.c.l.b16 %v2141
    %v2218 = vunpack.c.h.b16 %v2141
    %v2219 = vunpack.c.l.b16 %v2142
    %v2220 = vunpack.c.h.b16 %v2142
    %v2221 = vunpack.c.l.b16 %v2143
    %v2222 = vunpack.c.h.b16 %v2143
    %v2223 = vunpack.c.l.b16 %v2144
    %v2224 = vunpack.c.h.b16 %v2144
    %v2225 = vunpack.c.l.b16 %v2145
    %v2226 = vunpack.c.h.b16 %v2145
    %v2227 = vunpack.c.l.b16 %v2146
    %v2228 = vunpack.c.h.b16 %v2146
    %v2229 = vunpack.c.l.b16 %v2147
    %v2230 = vunpack.c.h.b16 %v2147
    %v2231 = vunpack.c.l.b16 %v2148
    %v2232 = vunpack.c.h.b16 %v2148
    %v2233 = vunpack.c.l.b16 %v2149
    %v2234 = vunpack.c.h.b16 %v2149
    %v2235 = vunpack.c.l.b16 %v2150
    %v2236 = vunpack.c.h.b16 %v2150
    %v2237 = vunpack.c.l.b16 %v2151
    %v2238 = vunpack.c.h.b16 %v2151
    %v2239 = vunpack.c.l.b16 %v2152
    %v2240 = vunpack.c.h.b16 %v2152
    %v2241 = vunpack.c.l.b16 %v2153
    %v2242 = vunpack.c.h.b16 %v2153
    %v2243 = vunpack.c.l.b16 %v2154
    %v2244 = vunpack.c.h.b16 %v2154
    %v2245 = vunpack.c.l.b16 %v2155
    %v2246 = vunpack.c.h.b16 %v2155
    %v2247 = vunpack.c.l.b16 %v2156
    %v2248 = vunpack.c.h.b16 %v2156
    %v2249 = vunpack.c.l.b16 %v2157
    %v2250 = vunpack.c.h.b16 %v2157
    %v2251 = vunpack.c.l.b16 %v2158
    %v2252 = vunpack.c.h.b16 %v2158
    %v2253 = vunpack.c.l.b16 %v2159
    %v2254 = vunpack.c.h.b16 %v2159
    %v2255 = vunpack.c.l.b16 %v2160
    %v2256 = vunpack.c.h.b16 %v2160
    %v2257 = vpack.c.b16 %v2197, %v2193
    %v2258 = vpack.c.b16 %v2198, %v2194
    %v2259 = vpack.c.b16 %v2199, %v2195
    %v2260 = vpack.c.b16 %v2200, %v2196
    %v2261 = vpack.c.b16 %v2205, %v2201
    %v2262 = vpack.c.b16 %v2206, %v2202
    %v2263 = vpack.c.b16 %v2207, %v2203
    %v2264 = vpack.c.b16 %v2208, %v2204
    %v2265 = vpack.c.b16 %v2213, %v2209
    %v2266 = vpack.c.b16 %v2214, %v2210
    %v2267 = vpack.c.b16 %v2215, %v2211
    %v2268 = vpack.c.b16 %v2216, %v2212
    %v2269 = vpack.c.b16 %v2221, %v2217
    %v2270 = vpack.c.b16 %v2222, %v2218
    %v2271 = vpack.c.b16 %v2223, %v2219
    %v2272 = vpack.c.b16 %v2224, %v2220
    %v2273 = vpack.c.b16 %v2229, %v2225
    %v2274 = vpack.c.b16 %v2230, %v2226
    %v2275 = vpack.c.b16 %v2231, %v2227
    %v2276 = vpack.c.b16 %v2232, %v2228
    %v2277 = vpack.c.b16 %v2237, %v2233
    %v2278 = vpack.c.b16 %v2238, %v2234
    %v2279 = vpack.c.b16 %v2239, %v2235
    %v2280 = vpack.c.b16 %v2240, %v2236
    %v2281 = vpack.c.b16 %v2245, %v2241
    %v2282 = vpack.c.b16 %v2246, %v2242
    %v2283 = vpack.c.b16 %v2247, %v2243
    %v2284 = vpack.c.b16 %v2248, %v2244
    %v2285 = vpack.c.b16 %v2253, %v2249
    %v2286 = vpack.c.b16 %v2254, %v2250
    %v2287 = vpack.c.b16 %v2255, %v2251
    %v2288 = vpack.c.b16 %v2256, %v2252
    %2321 = vmatprep.subr.bf16.mxu0 %v2258
    %2322 = vmatpush1.bf16.msra.mxu0 %v2257
    %2323 = vmatprep.subr.bf16.mxu0 %v2262
    %2324 = vmatpush1.bf16.msra.mxu0 %v2261
    %2325 = vmatprep.subr.bf16.mxu0 %v2266
    %2326 = vmatpush1.bf16.msra.mxu0 %v2265
    %2327 = vmatprep.subr.bf16.mxu0 %v2270
    %2328 = vmatpush1.bf16.msra.mxu0 %v2269
    %2329 = vmatprep.subr.bf16.mxu0 %v2274
    %2330 = vmatpush1.bf16.msra.mxu0 %v2273
    %2331 = vmatprep.subr.bf16.mxu0 %v2278
    %2332 = vmatpush1.bf16.msra.mxu0 %v2277
    %2333 = vmatprep.subr.bf16.mxu0 %v2282
    %2334 = vmatpush1.bf16.msra.mxu0 %v2281
    %2335 = vmatprep.subr.bf16.mxu0 %v2286
    %2336 = vmatpush1.bf16.msra.mxu0 %v2285
    %2337 = vmatprep.subr.bf16.mxu0 0
    %2338 = vmatpush1.bf16.msra.mxu0 0
    %2339 = vmatprep.subr.bf16.mxu0 0
    %2340 = vmatpush1.bf16.msra.mxu0 0
    %2341 = vmatprep.subr.bf16.mxu0 0
    %2342 = vmatpush1.bf16.msra.mxu0 0
    %2343 = vmatprep.subr.bf16.mxu0 0
    %2344 = vmatpush1.bf16.msra.mxu0 0
    %2345 = vmatprep.subr.bf16.mxu0 0
    %2346 = vmatpush1.bf16.msra.mxu0 0
    %2347 = vmatprep.subr.bf16.mxu0 0
    %2348 = vmatpush1.bf16.msra.mxu0 0
    %2349 = vmatprep.subr.bf16.mxu0 0
    %2350 = vmatpush1.bf16.msra.mxu0 0
    %2351 = vmatprep.subr.bf16.mxu0 0
    %2352 = vmatpush1.bf16.msra.mxu0 0
    %2353 = vmatprep.mubr.bf16.mxu0 0
    %2354 = vmatmul.mubr.bf16.gmra.mrb[0].mxu0 %v2128
    %v2355 = vpop.f32.mrb[0].mxu0
    %v2356 = vadd.f32 0.0, %v2355
    %v2357 = vpop.f32.mrb[0].mxu0
    %v2358 = vadd.f32 0.0, %v2357
    %v2359 = vpop.f32.mrb[0].mxu0
    %v2360 = vpop.f32.mrb[0].mxu0
    %2361 = vdwg.mxu0
    %2362 = vmatprep.subr.bf16.mxu0 %v2260
    %2363 = vmatpush1.bf16.msra.mxu0 %v2259
    %2364 = vmatprep.subr.bf16.mxu0 %v2264
    %2365 = vmatpush1.bf16.msra.mxu0 %v2263
    %2366 = vmatprep.subr.bf16.mxu0 %v2268
    %2367 = vmatpush1.bf16.msra.mxu0 %v2267
    %2368 = vmatprep.subr.bf16.mxu0 %v2272
    %2369 = vmatpush1.bf16.msra.mxu0 %v2271
    %2370 = vmatprep.subr.bf16.mxu0 %v2276
    %2371 = vmatpush1.bf16.msra.mxu0 %v2275
    %2372 = vmatprep.subr.bf16.mxu0 %v2280
    %2373 = vmatpush1.bf16.msra.mxu0 %v2279
    %2374 = vmatprep.subr.bf16.mxu0 %v2284
    %2375 = vmatpush1.bf16.msra.mxu0 %v2283
    %2376 = vmatprep.subr.bf16.mxu0 %v2288
    %2377 = vmatpush1.bf16.msra.mxu0 %v2287
    %2378 = vmatprep.subr.bf16.mxu0 0
    %2379 = vmatpush1.bf16.msra.mxu0 0
    %2380 = vmatprep.subr.bf16.mxu0 0
    %2381 = vmatpush1.bf16.msra.mxu0 0
    %2382 = vmatprep.subr.bf16.mxu0 0
    %2383 = vmatpush1.bf16.msra.mxu0 0
    %2384 = vmatprep.subr.bf16.mxu0 0
    %2385 = vmatpush1.bf16.msra.mxu0 0
    %2386 = vmatprep.subr.bf16.mxu0 0
    %2387 = vmatpush1.bf16.msra.mxu0 0
    %2388 = vmatprep.subr.bf16.mxu0 0
    %2389 = vmatpush1.bf16.msra.mxu0 0
    %2390 = vmatprep.subr.bf16.mxu0 0
    %2391 = vmatpush1.bf16.msra.mxu0 0
    %2392 = vmatprep.subr.bf16.mxu0 0
    %2393 = vmatpush1.bf16.msra.mxu0 0
    %2394 = vmatprep.mubr.bf16.mxu0 0
    %2395 = vmatmul.mubr.bf16.gmra.mrb[0].mxu0 %v2128
    %v2396 = vpop.f32.mrb[0].mxu0
    %v2397 = vadd.f32 0.0, %v2396
    %v2398 = vpop.f32.mrb[0].mxu0
    %v2399 = vadd.f32 0.0, %v2398
    %v2400 = vpop.f32.mrb[0].mxu0
    %v2401 = vpop.f32.mrb[0].mxu0
    %2402 = vdwg.mxu0
    %v2403 = vadd.f32 %v2124, %v2356
    %v2404 = vadd.f32 %v2125, %v2358
    %v2405 = vadd.f32 %v2126, %v2397
    %v2406 = vadd.f32 %v2127, %v2399
    %v2407 = vmul.f32 %v2403, 0.5
    %v2408 = vtanh.pop %v2407
    %v2409 = vmul.f32 %v2408, 0.5
    %v2410 = vadd.f32 %v2409, 0.5
    %v2411 = vmul.f32 %v2404, 0.5
    %v2412 = vtanh.pop %v2411
    %v2413 = vmul.f32 %v2412, 0.5
    %v2414 = vadd.f32 %v2413, 0.5
    %v2415 = vtanh.pop %v2405
    %v2416 = vmul.f32 %v2406, 0.5
    %v2417 = vtanh.pop %v2416
    %v2418 = vmul.f32 %v2417, 0.5
    %v2419 = vadd.f32 %v2418, 0.5
    %v2420 = vmul.f32 %v2414, %v2120
    %v2421 = vmul.f32 %v2410, %v2415
    %v2422 = vadd.f32 %v2420, %v2421
    %v2423 = vtanh.pop %v2422
    %v2424 = vmul.f32 %v2419, %v2423
    %2425 = vst [vmem:[#allocation3 + $0x18] sm:$0xff] %v2424
    %v2426 = vld [vmem:[#allocation2 + $0x140] sm:$0xff]
    %v2427 = vld [vmem:[#allocation2 + $0x148] sm:$0xff]
    %v2428 = vld [vmem:[#allocation2 + $0x150] sm:$0xff]
    %v2429 = vld [vmem:[#allocation2 + $0x158] sm:$0xff]
    %v2430 = vpack.c.bf16 %v2424, %v2424
    %v2431 = vld [vmem:[#allocation7] sm:$0xff]
    %v2432 = vld [vmem:[#allocation7 + $0x8] sm:$0xff]
    %v2433 = vld [vmem:[#allocation7 + $0x10] sm:$0xff]
    %v2434 = vld [vmem:[#allocation7 + $0x18] sm:$0xff]
    %v2435 = vld [vmem:[#allocation7 + $0x20] sm:$0xff]
    %v2436 = vld [vmem:[#allocation7 + $0x28] sm:$0xff]
    %v2437 = vld [vmem:[#allocation7 + $0x30] sm:$0xff]
    %v2438 = vld [vmem:[#allocation7 + $0x38] sm:$0xff]
    %v2439 = vld [vmem:[#allocation7 + $0x40] sm:$0xff]
    %v2440 = vld [vmem:[#allocation7 + $0x48] sm:$0xff]
    %v2441 = vld [vmem:[#allocation7 + $0x50] sm:$0xff]
    %v2442 = vld [vmem:[#allocation7 + $0x58] sm:$0xff]
    %v2443 = vld [vmem:[#allocation7 + $0x60] sm:$0xff]
    %v2444 = vld [vmem:[#allocation7 + $0x68] sm:$0xff]
    %v2445 = vld [vmem:[#allocation7 + $0x70] sm:$0xff]
    %v2446 = vld [vmem:[#allocation7 + $0x78] sm:$0xff]
    %v2447 = vld [vmem:[#allocation7 + $0x80] sm:$0xff]
    %v2448 = vld [vmem:[#allocation7 + $0x88] sm:$0xff]
    %v2449 = vld [vmem:[#allocation7 + $0x90] sm:$0xff]
    %v2450 = vld [vmem:[#allocation7 + $0x98] sm:$0xff]
    %v2451 = vld [vmem:[#allocation7 + $0xa0] sm:$0xff]
    %v2452 = vld [vmem:[#allocation7 + $0xa8] sm:$0xff]
    %v2453 = vld [vmem:[#allocation7 + $0xb0] sm:$0xff]
    %v2454 = vld [vmem:[#allocation7 + $0xb8] sm:$0xff]
    %v2455 = vld [vmem:[#allocation7 + $0xc0] sm:$0xff]
    %v2456 = vld [vmem:[#allocation7 + $0xc8] sm:$0xff]
    %v2457 = vld [vmem:[#allocation7 + $0xd0] sm:$0xff]
    %v2458 = vld [vmem:[#allocation7 + $0xd8] sm:$0xff]
    %v2459 = vld [vmem:[#allocation7 + $0xe0] sm:$0xff]
    %v2460 = vld [vmem:[#allocation7 + $0xe8] sm:$0xff]
    %v2461 = vld [vmem:[#allocation7 + $0xf0] sm:$0xff]
    %v2462 = vld [vmem:[#allocation7 + $0xf8] sm:$0xff]
    %v2495 = vunpack.c.l.b16 %v2431
    %v2496 = vunpack.c.h.b16 %v2431
    %v2497 = vunpack.c.l.b16 %v2432
    %v2498 = vunpack.c.h.b16 %v2432
    %v2499 = vunpack.c.l.b16 %v2433
    %v2500 = vunpack.c.h.b16 %v2433
    %v2501 = vunpack.c.l.b16 %v2434
    %v2502 = vunpack.c.h.b16 %v2434
    %v2503 = vunpack.c.l.b16 %v2435
    %v2504 = vunpack.c.h.b16 %v2435
    %v2505 = vunpack.c.l.b16 %v2436
    %v2506 = vunpack.c.h.b16 %v2436
    %v2507 = vunpack.c.l.b16 %v2437
    %v2508 = vunpack.c.h.b16 %v2437
    %v2509 = vunpack.c.l.b16 %v2438
    %v2510 = vunpack.c.h.b16 %v2438
    %v2511 = vunpack.c.l.b16 %v2439
    %v2512 = vunpack.c.h.b16 %v2439
    %v2513 = vunpack.c.l.b16 %v2440
    %v2514 = vunpack.c.h.b16 %v2440
    %v2515 = vunpack.c.l.b16 %v2441
    %v2516 = vunpack.c.h.b16 %v2441
    %v2517 = vunpack.c.l.b16 %v2442
    %v2518 = vunpack.c.h.b16 %v2442
    %v2519 = vunpack.c.l.b16 %v2443
    %v2520 = vunpack.c.h.b16 %v2443
    %v2521 = vunpack.c.l.b16 %v2444
    %v2522 = vunpack.c.h.b16 %v2444
    %v2523 = vunpack.c.l.b16 %v2445
    %v2524 = vunpack.c.h.b16 %v2445
    %v2525 = vunpack.c.l.b16 %v2446
    %v2526 = vunpack.c.h.b16 %v2446
    %v2527 = vunpack.c.l.b16 %v2447
    %v2528 = vunpack.c.h.b16 %v2447
    %v2529 = vunpack.c.l.b16 %v2448
    %v2530 = vunpack.c.h.b16 %v2448
    %v2531 = vunpack.c.l.b16 %v2449
    %v2532 = vunpack.c.h.b16 %v2449
    %v2533 = vunpack.c.l.b16 %v2450
    %v2534 = vunpack.c.h.b16 %v2450
    %v2535 = vunpack.c.l.b16 %v2451
    %v2536 = vunpack.c.h.b16 %v2451
    %v2537 = vunpack.c.l.b16 %v2452
    %v2538 = vunpack.c.h.b16 %v2452
    %v2539 = vunpack.c.l.b16 %v2453
    %v2540 = vunpack.c.h.b16 %v2453
    %v2541 = vunpack.c.l.b16 %v2454
    %v2542 = vunpack.c.h.b16 %v2454
    %v2543 = vunpack.c.l.b16 %v2455
    %v2544 = vunpack.c.h.b16 %v2455
    %v2545 = vunpack.c.l.b16 %v2456
    %v2546 = vunpack.c.h.b16 %v2456
    %v2547 = vunpack.c.l.b16 %v2457
    %v2548 = vunpack.c.h.b16 %v2457
    %v2549 = vunpack.c.l.b16 %v2458
    %v2550 = vunpack.c.h.b16 %v2458
    %v2551 = vunpack.c.l.b16 %v2459
    %v2552 = vunpack.c.h.b16 %v2459
    %v2553 = vunpack.c.l.b16 %v2460
    %v2554 = vunpack.c.h.b16 %v2460
    %v2555 = vunpack.c.l.b16 %v2461
    %v2556 = vunpack.c.h.b16 %v2461
    %v2557 = vunpack.c.l.b16 %v2462
    %v2558 = vunpack.c.h.b16 %v2462
    %v2559 = vpack.c.b16 %v2499, %v2495
    %v2560 = vpack.c.b16 %v2500, %v2496
    %v2561 = vpack.c.b16 %v2501, %v2497
    %v2562 = vpack.c.b16 %v2502, %v2498
    %v2563 = vpack.c.b16 %v2507, %v2503
    %v2564 = vpack.c.b16 %v2508, %v2504
    %v2565 = vpack.c.b16 %v2509, %v2505
    %v2566 = vpack.c.b16 %v2510, %v2506
    %v2567 = vpack.c.b16 %v2515, %v2511
    %v2568 = vpack.c.b16 %v2516, %v2512
    %v2569 = vpack.c.b16 %v2517, %v2513
    %v2570 = vpack.c.b16 %v2518, %v2514
    %v2571 = vpack.c.b16 %v2523, %v2519
    %v2572 = vpack.c.b16 %v2524, %v2520
    %v2573 = vpack.c.b16 %v2525, %v2521
    %v2574 = vpack.c.b16 %v2526, %v2522
    %v2575 = vpack.c.b16 %v2531, %v2527
    %v2576 = vpack.c.b16 %v2532, %v2528
    %v2577 = vpack.c.b16 %v2533, %v2529
    %v2578 = vpack.c.b16 %v2534, %v2530
    %v2579 = vpack.c.b16 %v2539, %v2535
    %v2580 = vpack.c.b16 %v2540, %v2536
    %v2581 = vpack.c.b16 %v2541, %v2537
    %v2582 = vpack.c.b16 %v2542, %v2538
    %v2583 = vpack.c.b16 %v2547, %v2543
    %v2584 = vpack.c.b16 %v2548, %v2544
    %v2585 = vpack.c.b16 %v2549, %v2545
    %v2586 = vpack.c.b16 %v2550, %v2546
    %v2587 = vpack.c.b16 %v2555, %v2551
    %v2588 = vpack.c.b16 %v2556, %v2552
    %v2589 = vpack.c.b16 %v2557, %v2553
    %v2590 = vpack.c.b16 %v2558, %v2554
    %2623 = vmatprep.subr.bf16.mxu0 %v2560
    %2624 = vmatpush1.bf16.msra.mxu0 %v2559
    %2625 = vmatprep.subr.bf16.mxu0 %v2564
    %2626 = vmatpush1.bf16.msra.mxu0 %v2563
    %2627 = vmatprep.subr.bf16.mxu0 %v2568
    %2628 = vmatpush1.bf16.msra.mxu0 %v2567
    %2629 = vmatprep.subr.bf16.mxu0 %v2572
    %2630 = vmatpush1.bf16.msra.mxu0 %v2571
    %2631 = vmatprep.subr.bf16.mxu0 %v2576
    %2632 = vmatpush1.bf16.msra.mxu0 %v2575
    %2633 = vmatprep.subr.bf16.mxu0 %v2580
    %2634 = vmatpush1.bf16.msra.mxu0 %v2579
    %2635 = vmatprep.subr.bf16.mxu0 %v2584
    %2636 = vmatpush1.bf16.msra.mxu0 %v2583
    %2637 = vmatprep.subr.bf16.mxu0 %v2588
    %2638 = vmatpush1.bf16.msra.mxu0 %v2587
    %2639 = vmatprep.subr.bf16.mxu0 0
    %2640 = vmatpush1.bf16.msra.mxu0 0
    %2641 = vmatprep.subr.bf16.mxu0 0
    %2642 = vmatpush1.bf16.msra.mxu0 0
    %2643 = vmatprep.subr.bf16.mxu0 0
    %2644 = vmatpush1.bf16.msra.mxu0 0
    %2645 = vmatprep.subr.bf16.mxu0 0
    %2646 = vmatpush1.bf16.msra.mxu0 0
    %2647 = vmatprep.subr.bf16.mxu0 0
    %2648 = vmatpush1.bf16.msra.mxu0 0
    %2649 = vmatprep.subr.bf16.mxu0 0
    %2650 = vmatpush1.bf16.msra.mxu0 0
    %2651 = vmatprep.subr.bf16.mxu0 0
    %2652 = vmatpush1.bf16.msra.mxu0 0
    %2653 = vmatprep.subr.bf16.mxu0 0
    %2654 = vmatpush1.bf16.msra.mxu0 0
    %2655 = vmatprep.mubr.bf16.mxu0 0
    %2656 = vmatmul.mubr.bf16.gmra.mrb[0].mxu0 %v2430
    %v2657 = vpop.f32.mrb[0].mxu0
    %v2658 = vadd.f32 0.0, %v2657
    %v2659 = vpop.f32.mrb[0].mxu0
    %v2660 = vadd.f32 0.0, %v2659
    %v2661 = vpop.f32.mrb[0].mxu0
    %v2662 = vpop.f32.mrb[0].mxu0
    %2663 = vdwg.mxu0
    %2664 = vmatprep.subr.bf16.mxu0 %v2562
    %2665 = vmatpush1.bf16.msra.mxu0 %v2561
    %2666 = vmatprep.subr.bf16.mxu0 %v2566
    %2667 = vmatpush1.bf16.msra.mxu0 %v2565
    %2668 = vmatprep.subr.bf16.mxu0 %v2570
    %2669 = vmatpush1.bf16.msra.mxu0 %v2569
    %2670 = vmatprep.subr.bf16.mxu0 %v2574
    %2671 = vmatpush1.bf16.msra.mxu0 %v2573
    %2672 = vmatprep.subr.bf16.mxu0 %v2578
    %2673 = vmatpush1.bf16.msra.mxu0 %v2577
    %2674 = vmatprep.subr.bf16.mxu0 %v2582
    %2675 = vmatpush1.bf16.msra.mxu0 %v2581
    %2676 = vmatprep.subr.bf16.mxu0 %v2586
    %2677 = vmatpush1.bf16.msra.mxu0 %v2585
    %2678 = vmatprep.subr.bf16.mxu0 %v2590
    %2679 = vmatpush1.bf16.msra.mxu0 %v2589
    %2680 = vmatprep.subr.bf16.mxu0 0
    %2681 = vmatpush1.bf16.msra.mxu0 0
    %2682 = vmatprep.subr.bf16.mxu0 0
    %2683 = vmatpush1.bf16.msra.mxu0 0
    %2684 = vmatprep.subr.bf16.mxu0 0
    %2685 = vmatpush1.bf16.msra.mxu0 0
    %2686 = vmatprep.subr.bf16.mxu0 0
    %2687 = vmatpush1.bf16.msra.mxu0 0
    %2688 = vmatprep.subr.bf16.mxu0 0
    %2689 = vmatpush1.bf16.msra.mxu0 0
    %2690 = vmatprep.subr.bf16.mxu0 0
    %2691 = vmatpush1.bf16.msra.mxu0 0
    %2692 = vmatprep.subr.bf16.mxu0 0
    %2693 = vmatpush1.bf16.msra.mxu0 0
    %2694 = vmatprep.subr.bf16.mxu0 0
    %2695 = vmatpush1.bf16.msra.mxu0 0
    %2696 = vmatprep.mubr.bf16.mxu0 0
    %2697 = vmatmul.mubr.bf16.gmra.mrb[0].mxu0 %v2430
    %v2698 = vpop.f32.mrb[0].mxu0
    %v2699 = vadd.f32 0.0, %v2698
    %v2700 = vpop.f32.mrb[0].mxu0
    %v2701 = vadd.f32 0.0, %v2700
    %v2702 = vpop.f32.mrb[0].mxu0
    %v2703 = vpop.f32.mrb[0].mxu0
    %2704 = vdwg.mxu0
    %v2705 = vadd.f32 %v2426, %v2658
    %v2706 = vadd.f32 %v2427, %v2660
    %v2707 = vadd.f32 %v2428, %v2699
    %v2708 = vadd.f32 %v2429, %v2701
    %v2709 = vmul.f32 %v2705, 0.5
    %v2710 = vtanh.pop %v2709
    %v2711 = vmul.f32 %v2710, 0.5
    %v2712 = vadd.f32 %v2711, 0.5
    %v2713 = vmul.f32 %v2706, 0.5
    %v2714 = vtanh.pop %v2713
    %v2715 = vmul.f32 %v2714, 0.5
    %v2716 = vadd.f32 %v2715, 0.5
    %v2717 = vtanh.pop %v2707
    %v2718 = vmul.f32 %v2708, 0.5
    %v2719 = vtanh.pop %v2718
    %v2720 = vmul.f32 %v2719, 0.5
    %v2721 = vadd.f32 %v2720, 0.5
    %v2722 = vmul.f32 %v2716, %v2422
    %v2723 = vmul.f32 %v2712, %v2717
    %v2724 = vadd.f32 %v2722, %v2723
    %v2725 = vtanh.pop %v2724
    %v2726 = vmul.f32 %v2721, %v2725
    %2727 = vst [vmem:[#allocation3 + $0x20] sm:$0xff] %v2726
    %v2728 = vld [vmem:[#allocation2 + $0x160] sm:$0xff]
    %v2729 = vld [vmem:[#allocation2 + $0x168] sm:$0xff]
    %v2730 = vld [vmem:[#allocation2 + $0x170] sm:$0xff]
    %v2731 = vld [vmem:[#allocation2 + $0x178] sm:$0xff]
    %v2732 = vpack.c.bf16 %v2726, %v2726
    %v2733 = vld [vmem:[#allocation7] sm:$0xff]
    %v2734 = vld [vmem:[#allocation7 + $0x8] sm:$0xff]
    %v2735 = vld [vmem:[#allocation7 + $0x10] sm:$0xff]
    %v2736 = vld [vmem:[#allocation7 + $0x18] sm:$0xff]
    %v2737 = vld [vmem:[#allocation7 + $0x20] sm:$0xff]
    %v2738 = vld [vmem:[#allocation7 + $0x28] sm:$0xff]
    %v2739 = vld [vmem:[#allocation7 + $0x30] sm:$0xff]
    %v2740 = vld [vmem:[#allocation7 + $0x38] sm:$0xff]
    %v2741 = vld [vmem:[#allocation7 + $0x40] sm:$0xff]
    %v2742 = vld [vmem:[#allocation7 + $0x48] sm:$0xff]
    %v2743 = vld [vmem:[#allocation7 + $0x50] sm:$0xff]
    %v2744 = vld [vmem:[#allocation7 + $0x58] sm:$0xff]
    %v2745 = vld [vmem:[#allocation7 + $0x60] sm:$0xff]
    %v2746 = vld [vmem:[#allocation7 + $0x68] sm:$0xff]
    %v2747 = vld [vmem:[#allocation7 + $0x70] sm:$0xff]
    %v2748 = vld [vmem:[#allocation7 + $0x78] sm:$0xff]
    %v2749 = vld [vmem:[#allocation7 + $0x80] sm:$0xff]
    %v2750 = vld [vmem:[#allocation7 + $0x88] sm:$0xff]
    %v2751 = vld [vmem:[#allocation7 + $0x90] sm:$0xff]
    %v2752 = vld [vmem:[#allocation7 + $0x98] sm:$0xff]
    %v2753 = vld [vmem:[#allocation7 + $0xa0] sm:$0xff]
    %v2754 = vld [vmem:[#allocation7 + $0xa8] sm:$0xff]
    %v2755 = vld [vmem:[#allocation7 + $0xb0] sm:$0xff]
    %v2756 = vld [vmem:[#allocation7 + $0xb8] sm:$0xff]
    %v2757 = vld [vmem:[#allocation7 + $0xc0] sm:$0xff]
    %v2758 = vld [vmem:[#allocation7 + $0xc8] sm:$0xff]
    %v2759 = vld [vmem:[#allocation7 + $0xd0] sm:$0xff]
    %v2760 = vld [vmem:[#allocation7 + $0xd8] sm:$0xff]
    %v2761 = vld [vmem:[#allocation7 + $0xe0] sm:$0xff]
    %v2762 = vld [vmem:[#allocation7 + $0xe8] sm:$0xff]
    %v2763 = vld [vmem:[#allocation7 + $0xf0] sm:$0xff]
    %v2764 = vld [vmem:[#allocation7 + $0xf8] sm:$0xff]
    %v2797 = vunpack.c.l.b16 %v2733
    %v2798 = vunpack.c.h.b16 %v2733
    %v2799 = vunpack.c.l.b16 %v2734
    %v2800 = vunpack.c.h.b16 %v2734
    %v2801 = vunpack.c.l.b16 %v2735
    %v2802 = vunpack.c.h.b16 %v2735
    %v2803 = vunpack.c.l.b16 %v2736
    %v2804 = vunpack.c.h.b16 %v2736
    %v2805 = vunpack.c.l.b16 %v2737
    %v2806 = vunpack.c.h.b16 %v2737
    %v2807 = vunpack.c.l.b16 %v2738
    %v2808 = vunpack.c.h.b16 %v2738
    %v2809 = vunpack.c.l.b16 %v2739
    %v2810 = vunpack.c.h.b16 %v2739
    %v2811 = vunpack.c.l.b16 %v2740
    %v2812 = vunpack.c.h.b16 %v2740
    %v2813 = vunpack.c.l.b16 %v2741
    %v2814 = vunpack.c.h.b16 %v2741
    %v2815 = vunpack.c.l.b16 %v2742
    %v2816 = vunpack.c.h.b16 %v2742
    %v2817 = vunpack.c.l.b16 %v2743
    %v2818 = vunpack.c.h.b16 %v2743
    %v2819 = vunpack.c.l.b16 %v2744
    %v2820 = vunpack.c.h.b16 %v2744
    %v2821 = vunpack.c.l.b16 %v2745
    %v2822 = vunpack.c.h.b16 %v2745
    %v2823 = vunpack.c.l.b16 %v2746
    %v2824 = vunpack.c.h.b16 %v2746
    %v2825 = vunpack.c.l.b16 %v2747
    %v2826 = vunpack.c.h.b16 %v2747
    %v2827 = vunpack.c.l.b16 %v2748
    %v2828 = vunpack.c.h.b16 %v2748
    %v2829 = vunpack.c.l.b16 %v2749
    %v2830 = vunpack.c.h.b16 %v2749
    %v2831 = vunpack.c.l.b16 %v2750
    %v2832 = vunpack.c.h.b16 %v2750
    %v2833 = vunpack.c.l.b16 %v2751
    %v2834 = vunpack.c.h.b16 %v2751
    %v2835 = vunpack.c.l.b16 %v2752
    %v2836 = vunpack.c.h.b16 %v2752
    %v2837 = vunpack.c.l.b16 %v2753
    %v2838 = vunpack.c.h.b16 %v2753
    %v2839 = vunpack.c.l.b16 %v2754
    %v2840 = vunpack.c.h.b16 %v2754
    %v2841 = vunpack.c.l.b16 %v2755
    %v2842 = vunpack.c.h.b16 %v2755
    %v2843 = vunpack.c.l.b16 %v2756
    %v2844 = vunpack.c.h.b16 %v2756
    %v2845 = vunpack.c.l.b16 %v2757
    %v2846 = vunpack.c.h.b16 %v2757
    %v2847 = vunpack.c.l.b16 %v2758
    %v2848 = vunpack.c.h.b16 %v2758
    %v2849 = vunpack.c.l.b16 %v2759
    %v2850 = vunpack.c.h.b16 %v2759
    %v2851 = vunpack.c.l.b16 %v2760
    %v2852 = vunpack.c.h.b16 %v2760
    %v2853 = vunpack.c.l.b16 %v2761
    %v2854 = vunpack.c.h.b16 %v2761
    %v2855 = vunpack.c.l.b16 %v2762
    %v2856 = vunpack.c.h.b16 %v2762
    %v2857 = vunpack.c.l.b16 %v2763
    %v2858 = vunpack.c.h.b16 %v2763
    %v2859 = vunpack.c.l.b16 %v2764
    %v2860 = vunpack.c.h.b16 %v2764
    %v2861 = vpack.c.b16 %v2801, %v2797
    %v2862 = vpack.c.b16 %v2802, %v2798
    %v2863 = vpack.c.b16 %v2803, %v2799
    %v2864 = vpack.c.b16 %v2804, %v2800
    %v2865 = vpack.c.b16 %v2809, %v2805
    %v2866 = vpack.c.b16 %v2810, %v2806
    %v2867 = vpack.c.b16 %v2811, %v2807
    %v2868 = vpack.c.b16 %v2812, %v2808
    %v2869 = vpack.c.b16 %v2817, %v2813
    %v2870 = vpack.c.b16 %v2818, %v2814
    %v2871 = vpack.c.b16 %v2819, %v2815
    %v2872 = vpack.c.b16 %v2820, %v2816
    %v2873 = vpack.c.b16 %v2825, %v2821
    %v2874 = vpack.c.b16 %v2826, %v2822
    %v2875 = vpack.c.b16 %v2827, %v2823
    %v2876 = vpack.c.b16 %v2828, %v2824
    %v2877 = vpack.c.b16 %v2833, %v2829
    %v2878 = vpack.c.b16 %v2834, %v2830
    %v2879 = vpack.c.b16 %v2835, %v2831
    %v2880 = vpack.c.b16 %v2836, %v2832
    %v2881 = vpack.c.b16 %v2841, %v2837
    %v2882 = vpack.c.b16 %v2842, %v2838
    %v2883 = vpack.c.b16 %v2843, %v2839
    %v2884 = vpack.c.b16 %v2844, %v2840
    %v2885 = vpack.c.b16 %v2849, %v2845
    %v2886 = vpack.c.b16 %v2850, %v2846
    %v2887 = vpack.c.b16 %v2851, %v2847
    %v2888 = vpack.c.b16 %v2852, %v2848
    %v2889 = vpack.c.b16 %v2857, %v2853
    %v2890 = vpack.c.b16 %v2858, %v2854
    %v2891 = vpack.c.b16 %v2859, %v2855
    %v2892 = vpack.c.b16 %v2860, %v2856
    %2925 = vmatprep.subr.bf16.mxu0 %v2862
    %2926 = vmatpush1.bf16.msra.mxu0 %v2861
    %2927 = vmatprep.subr.bf16.mxu0 %v2866
    %2928 = vmatpush1.bf16.msra.mxu0 %v2865
    %2929 = vmatprep.subr.bf16.mxu0 %v2870
    %2930 = vmatpush1.bf16.msra.mxu0 %v2869
    %2931 = vmatprep.subr.bf16.mxu0 %v2874
    %2932 = vmatpush1.bf16.msra.mxu0 %v2873
    %2933 = vmatprep.subr.bf16.mxu0 %v2878
    %2934 = vmatpush1.bf16.msra.mxu0 %v2877
    %2935 = vmatprep.subr.bf16.mxu0 %v2882
    %2936 = vmatpush1.bf16.msra.mxu0 %v2881
    %2937 = vmatprep.subr.bf16.mxu0 %v2886
    %2938 = vmatpush1.bf16.msra.mxu0 %v2885
    %2939 = vmatprep.subr.bf16.mxu0 %v2890
    %2940 = vmatpush1.bf16.msra.mxu0 %v2889
    %2941 = vmatprep.subr.bf16.mxu0 0
    %2942 = vmatpush1.bf16.msra.mxu0 0
    %2943 = vmatprep.subr.bf16.mxu0 0
    %2944 = vmatpush1.bf16.msra.mxu0 0
    %2945 = vmatprep.subr.bf16.mxu0 0
    %2946 = vmatpush1.bf16.msra.mxu0 0
    %2947 = vmatprep.subr.bf16.mxu0 0
    %2948 = vmatpush1.bf16.msra.mxu0 0
    %2949 = vmatprep.subr.bf16.mxu0 0
    %2950 = vmatpush1.bf16.msra.mxu0 0
    %2951 = vmatprep.subr.bf16.mxu0 0
    %2952 = vmatpush1.bf16.msra.mxu0 0
    %2953 = vmatprep.subr.bf16.mxu0 0
    %2954 = vmatpush1.bf16.msra.mxu0 0
    %2955 = vmatprep.subr.bf16.mxu0 0
    %2956 = vmatpush1.bf16.msra.mxu0 0
    %2957 = vmatprep.mubr.bf16.mxu0 0
    %2958 = vmatmul.mubr.bf16.gmra.mrb[0].mxu0 %v2732
    %v2959 = vpop.f32.mrb[0].mxu0
    %v2960 = vadd.f32 0.0, %v2959
    %v2961 = vpop.f32.mrb[0].mxu0
    %v2962 = vadd.f32 0.0, %v2961
    %v2963 = vpop.f32.mrb[0].mxu0
    %v2964 = vpop.f32.mrb[0].mxu0
    %2965 = vdwg.mxu0
    %2966 = vmatprep.subr.bf16.mxu0 %v2864
    %2967 = vmatpush1.bf16.msra.mxu0 %v2863
    %2968 = vmatprep.subr.bf16.mxu0 %v2868
    %2969 = vmatpush1.bf16.msra.mxu0 %v2867
    %2970 = vmatprep.subr.bf16.mxu0 %v2872
    %2971 = vmatpush1.bf16.msra.mxu0 %v2871
    %2972 = vmatprep.subr.bf16.mxu0 %v2876
    %2973 = vmatpush1.bf16.msra.mxu0 %v2875
    %2974 = vmatprep.subr.bf16.mxu0 %v2880
    %2975 = vmatpush1.bf16.msra.mxu0 %v2879
    %2976 = vmatprep.subr.bf16.mxu0 %v2884
    %2977 = vmatpush1.bf16.msra.mxu0 %v2883
    %2978 = vmatprep.subr.bf16.mxu0 %v2888
    %2979 = vmatpush1.bf16.msra.mxu0 %v2887
    %2980 = vmatprep.subr.bf16.mxu0 %v2892
    %2981 = vmatpush1.bf16.msra.mxu0 %v2891
    %2982 = vmatprep.subr.bf16.mxu0 0
    %2983 = vmatpush1.bf16.msra.mxu0 0
    %2984 = vmatprep.subr.bf16.mxu0 0
    %2985 = vmatpush1.bf16.msra.mxu0 0
    %2986 = vmatprep.subr.bf16.mxu0 0
    %2987 = vmatpush1.bf16.msra.mxu0 0
    %2988 = vmatprep.subr.bf16.mxu0 0
    %2989 = vmatpush1.bf16.msra.mxu0 0
    %2990 = vmatprep.subr.bf16.mxu0 0
    %2991 = vmatpush1.bf16.msra.mxu0 0
    %2992 = vmatprep.subr.bf16.mxu0 0
    %2993 = vmatpush1.bf16.msra.mxu0 0
    %2994 = vmatprep.subr.bf16.mxu0 0
    %2995 = vmatpush1.bf16.msra.mxu0 0
    %2996 = vmatprep.subr.bf16.mxu0 0
    %2997 = vmatpush1.bf16.msra.mxu0 0
    %2998 = vmatprep.mubr.bf16.mxu0 0
    %2999 = vmatmul.mubr.bf16.gmra.mrb[0].mxu0 %v2732
    %v3000 = vpop.f32.mrb[0].mxu0
    %v3001 = vadd.f32 0.0, %v3000
    %v3002 = vpop.f32.mrb[0].mxu0
    %v3003 = vadd.f32 0.0, %v3002
    %v3004 = vpop.f32.mrb[0].mxu0
    %v3005 = vpop.f32.mrb[0].mxu0
    %3006 = vdwg.mxu0
    %v3007 = vadd.f32 %v2728, %v2960
    %v3008 = vadd.f32 %v2729, %v2962
    %v3009 = vadd.f32 %v2730, %v3001
    %v3010 = vadd.f32 %v2731, %v3003
    %v3011 = vmul.f32 %v3007, 0.5
    %v3012 = vtanh.pop %v3011
    %v3013 = vmul.f32 %v3012, 0.5
    %v3014 = vadd.f32 %v3013, 0.5
    %v3015 = vmul.f32 %v3008, 0.5
    %v3016 = vtanh.pop %v3015
    %v3017 = vmul.f32 %v3016, 0.5
    %v3018 = vadd.f32 %v3017, 0.5
    %v3019 = vtanh.pop %v3009
    %v3020 = vmul.f32 %v3010, 0.5
    %v3021 = vtanh.pop %v3020
    %v3022 = vmul.f32 %v3021, 0.5
    %v3023 = vadd.f32 %v3022, 0.5
    %v3024 = vmul.f32 %v3018, %v2724
    %v3025 = vmul.f32 %v3014, %v3019
    %v3026 = vadd.f32 %v3024, %v3025
    %v3027 = vtanh.pop %v3026
    %v3028 = vmul.f32 %v3023, %v3027
    %3029 = vst [vmem:[#allocation3 + $0x28] sm:$0xff] %v3028
    %v3030 = vld [vmem:[#allocation2 + $0x180] sm:$0xff]
    %v3031 = vld [vmem:[#allocation2 + $0x188] sm:$0xff]
    %v3032 = vld [vmem:[#allocation2 + $0x190] sm:$0xff]
    %v3033 = vld [vmem:[#allocation2 + $0x198] sm:$0xff]
    %v3034 = vpack.c.bf16 %v3028, %v3028
    %v3035 = vld [vmem:[#allocation7] sm:$0xff]
    %v3036 = vld [vmem:[#allocation7 + $0x8] sm:$0xff]
    %v3037 = vld [vmem:[#allocation7 + $0x10] sm:$0xff]
    %v3038 = vld [vmem:[#allocation7 + $0x18] sm:$0xff]
    %v3039 = vld [vmem:[#allocation7 + $0x20] sm:$0xff]
    %v3040 = vld [vmem:[#allocation7 + $0x28] sm:$0xff]
    %v3041 = vld [vmem:[#allocation7 + $0x30] sm:$0xff]
    %v3042 = vld [vmem:[#allocation7 + $0x38] sm:$0xff]
    %v3043 = vld [vmem:[#allocation7 + $0x40] sm:$0xff]
    %v3044 = vld [vmem:[#allocation7 + $0x48] sm:$0xff]
    %v3045 = vld [vmem:[#allocation7 + $0x50] sm:$0xff]
    %v3046 = vld [vmem:[#allocation7 + $0x58] sm:$0xff]
    %v3047 = vld [vmem:[#allocation7 + $0x60] sm:$0xff]
    %v3048 = vld [vmem:[#allocation7 + $0x68] sm:$0xff]
    %v3049 = vld [vmem:[#allocation7 + $0x70] sm:$0xff]
    %v3050 = vld [vmem:[#allocation7 + $0x78] sm:$0xff]
    %v3051 = vld [vmem:[#allocation7 + $0x80] sm:$0xff]
    %v3052 = vld [vmem:[#allocation7 + $0x88] sm:$0xff]
    %v3053 = vld [vmem:[#allocation7 + $0x90] sm:$0xff]
    %v3054 = vld [vmem:[#allocation7 + $0x98] sm:$0xff]
    %v3055 = vld [vmem:[#allocation7 + $0xa0] sm:$0xff]
    %v3056 = vld [vmem:[#allocation7 + $0xa8] sm:$0xff]
    %v3057 = vld [vmem:[#allocation7 + $0xb0] sm:$0xff]
    %v3058 = vld [vmem:[#allocation7 + $0xb8] sm:$0xff]
    %v3059 = vld [vmem:[#allocation7 + $0xc0] sm:$0xff]
    %v3060 = vld [vmem:[#allocation7 + $0xc8] sm:$0xff]
    %v3061 = vld [vmem:[#allocation7 + $0xd0] sm:$0xff]
    %v3062 = vld [vmem:[#allocation7 + $0xd8] sm:$0xff]
    %v3063 = vld [vmem:[#allocation7 + $0xe0] sm:$0xff]
    %v3064 = vld [vmem:[#allocation7 + $0xe8] sm:$0xff]
    %v3065 = vld [vmem:[#allocation7 + $0xf0] sm:$0xff]
    %v3066 = vld [vmem:[#allocation7 + $0xf8] sm:$0xff]
    %v3099 = vunpack.c.l.b16 %v3035
    %v3100 = vunpack.c.h.b16 %v3035
    %v3101 = vunpack.c.l.b16 %v3036
    %v3102 = vunpack.c.h.b16 %v3036
    %v3103 = vunpack.c.l.b16 %v3037
    %v3104 = vunpack.c.h.b16 %v3037
    %v3105 = vunpack.c.l.b16 %v3038
    %v3106 = vunpack.c.h.b16 %v3038
    %v3107 = vunpack.c.l.b16 %v3039
    %v3108 = vunpack.c.h.b16 %v3039
    %v3109 = vunpack.c.l.b16 %v3040
    %v3110 = vunpack.c.h.b16 %v3040
    %v3111 = vunpack.c.l.b16 %v3041
    %v3112 = vunpack.c.h.b16 %v3041
    %v3113 = vunpack.c.l.b16 %v3042
    %v3114 = vunpack.c.h.b16 %v3042
    %v3115 = vunpack.c.l.b16 %v3043
    %v3116 = vunpack.c.h.b16 %v3043
    %v3117 = vunpack.c.l.b16 %v3044
    %v3118 = vunpack.c.h.b16 %v3044
    %v3119 = vunpack.c.l.b16 %v3045
    %v3120 = vunpack.c.h.b16 %v3045
    %v3121 = vunpack.c.l.b16 %v3046
    %v3122 = vunpack.c.h.b16 %v3046
    %v3123 = vunpack.c.l.b16 %v3047
    %v3124 = vunpack.c.h.b16 %v3047
    %v3125 = vunpack.c.l.b16 %v3048
    %v3126 = vunpack.c.h.b16 %v3048
    %v3127 = vunpack.c.l.b16 %v3049
    %v3128 = vunpack.c.h.b16 %v3049
    %v3129 = vunpack.c.l.b16 %v3050
    %v3130 = vunpack.c.h.b16 %v3050
    %v3131 = vunpack.c.l.b16 %v3051
    %v3132 = vunpack.c.h.b16 %v3051
    %v3133 = vunpack.c.l.b16 %v3052
    %v3134 = vunpack.c.h.b16 %v3052
    %v3135 = vunpack.c.l.b16 %v3053
    %v3136 = vunpack.c.h.b16 %v3053
    %v3137 = vunpack.c.l.b16 %v3054
    %v3138 = vunpack.c.h.b16 %v3054
    %v3139 = vunpack.c.l.b16 %v3055
    %v3140 = vunpack.c.h.b16 %v3055
    %v3141 = vunpack.c.l.b16 %v3056
    %v3142 = vunpack.c.h.b16 %v3056
    %v3143 = vunpack.c.l.b16 %v3057
    %v3144 = vunpack.c.h.b16 %v3057
    %v3145 = vunpack.c.l.b16 %v3058
    %v3146 = vunpack.c.h.b16 %v3058
    %v3147 = vunpack.c.l.b16 %v3059
    %v3148 = vunpack.c.h.b16 %v3059
    %v3149 = vunpack.c.l.b16 %v3060
    %v3150 = vunpack.c.h.b16 %v3060
    %v3151 = vunpack.c.l.b16 %v3061
    %v3152 = vunpack.c.h.b16 %v3061
    %v3153 = vunpack.c.l.b16 %v3062
    %v3154 = vunpack.c.h.b16 %v3062
    %v3155 = vunpack.c.l.b16 %v3063
    %v3156 = vunpack.c.h.b16 %v3063
    %v3157 = vunpack.c.l.b16 %v3064
    %v3158 = vunpack.c.h.b16 %v3064
    %v3159 = vunpack.c.l.b16 %v3065
    %v3160 = vunpack.c.h.b16 %v3065
    %v3161 = vunpack.c.l.b16 %v3066
    %v3162 = vunpack.c.h.b16 %v3066
    %v3163 = vpack.c.b16 %v3103, %v3099
    %v3164 = vpack.c.b16 %v3104, %v3100
    %v3165 = vpack.c.b16 %v3105, %v3101
    %v3166 = vpack.c.b16 %v3106, %v3102
    %v3167 = vpack.c.b16 %v3111, %v3107
    %v3168 = vpack.c.b16 %v3112, %v3108
    %v3169 = vpack.c.b16 %v3113, %v3109
    %v3170 = vpack.c.b16 %v3114, %v3110
    %v3171 = vpack.c.b16 %v3119, %v3115
    %v3172 = vpack.c.b16 %v3120, %v3116
    %v3173 = vpack.c.b16 %v3121, %v3117
    %v3174 = vpack.c.b16 %v3122, %v3118
    %v3175 = vpack.c.b16 %v3127, %v3123
    %v3176 = vpack.c.b16 %v3128, %v3124
    %v3177 = vpack.c.b16 %v3129, %v3125
    %v3178 = vpack.c.b16 %v3130, %v3126
    %v3179 = vpack.c.b16 %v3135, %v3131
    %v3180 = vpack.c.b16 %v3136, %v3132
    %v3181 = vpack.c.b16 %v3137, %v3133
    %v3182 = vpack.c.b16 %v3138, %v3134
    %v3183 = vpack.c.b16 %v3143, %v3139
    %v3184 = vpack.c.b16 %v3144, %v3140
    %v3185 = vpack.c.b16 %v3145, %v3141
    %v3186 = vpack.c.b16 %v3146, %v3142
    %v3187 = vpack.c.b16 %v3151, %v3147
    %v3188 = vpack.c.b16 %v3152, %v3148
    %v3189 = vpack.c.b16 %v3153, %v3149
    %v3190 = vpack.c.b16 %v3154, %v3150
    %v3191 = vpack.c.b16 %v3159, %v3155
    %v3192 = vpack.c.b16 %v3160, %v3156
    %v3193 = vpack.c.b16 %v3161, %v3157
    %v3194 = vpack.c.b16 %v3162, %v3158
    %3227 = vmatprep.subr.bf16.mxu0 %v3164
    %3228 = vmatpush1.bf16.msra.mxu0 %v3163
    %3229 = vmatprep.subr.bf16.mxu0 %v3168
    %3230 = vmatpush1.bf16.msra.mxu0 %v3167
    %3231 = vmatprep.subr.bf16.mxu0 %v3172
    %3232 = vmatpush1.bf16.msra.mxu0 %v3171
    %3233 = vmatprep.subr.bf16.mxu0 %v3176
    %3234 = vmatpush1.bf16.msra.mxu0 %v3175
    %3235 = vmatprep.subr.bf16.mxu0 %v3180
    %3236 = vmatpush1.bf16.msra.mxu0 %v3179
    %3237 = vmatprep.subr.bf16.mxu0 %v3184
    %3238 = vmatpush1.bf16.msra.mxu0 %v3183
    %3239 = vmatprep.subr.bf16.mxu0 %v3188
    %3240 = vmatpush1.bf16.msra.mxu0 %v3187
    %3241 = vmatprep.subr.bf16.mxu0 %v3192
    %3242 = vmatpush1.bf16.msra.mxu0 %v3191
    %3243 = vmatprep.subr.bf16.mxu0 0
    %3244 = vmatpush1.bf16.msra.mxu0 0
    %3245 = vmatprep.subr.bf16.mxu0 0
    %3246 = vmatpush1.bf16.msra.mxu0 0
    %3247 = vmatprep.subr.bf16.mxu0 0
    %3248 = vmatpush1.bf16.msra.mxu0 0
    %3249 = vmatprep.subr.bf16.mxu0 0
    %3250 = vmatpush1.bf16.msra.mxu0 0
    %3251 = vmatprep.subr.bf16.mxu0 0
    %3252 = vmatpush1.bf16.msra.mxu0 0
    %3253 = vmatprep.subr.bf16.mxu0 0
    %3254 = vmatpush1.bf16.msra.mxu0 0
    %3255 = vmatprep.subr.bf16.mxu0 0
    %3256 = vmatpush1.bf16.msra.mxu0 0
    %3257 = vmatprep.subr.bf16.mxu0 0
    %3258 = vmatpush1.bf16.msra.mxu0 0
    %3259 = vmatprep.mubr.bf16.mxu0 0
    %3260 = vmatmul.mubr.bf16.gmra.mrb[0].mxu0 %v3034
    %v3261 = vpop.f32.mrb[0].mxu0
    %v3262 = vadd.f32 0.0, %v3261
    %v3263 = vpop.f32.mrb[0].mxu0
    %v3264 = vadd.f32 0.0, %v3263
    %v3265 = vpop.f32.mrb[0].mxu0
    %v3266 = vpop.f32.mrb[0].mxu0
    %3267 = vdwg.mxu0
    %3268 = vmatprep.subr.bf16.mxu0 %v3166
    %3269 = vmatpush1.bf16.msra.mxu0 %v3165
    %3270 = vmatprep.subr.bf16.mxu0 %v3170
    %3271 = vmatpush1.bf16.msra.mxu0 %v3169
    %3272 = vmatprep.subr.bf16.mxu0 %v3174
    %3273 = vmatpush1.bf16.msra.mxu0 %v3173
    %3274 = vmatprep.subr.bf16.mxu0 %v3178
    %3275 = vmatpush1.bf16.msra.mxu0 %v3177
    %3276 = vmatprep.subr.bf16.mxu0 %v3182
    %3277 = vmatpush1.bf16.msra.mxu0 %v3181
    %3278 = vmatprep.subr.bf16.mxu0 %v3186
    %3279 = vmatpush1.bf16.msra.mxu0 %v3185
    %3280 = vmatprep.subr.bf16.mxu0 %v3190
    %3281 = vmatpush1.bf16.msra.mxu0 %v3189
    %3282 = vmatprep.subr.bf16.mxu0 %v3194
    %3283 = vmatpush1.bf16.msra.mxu0 %v3193
    %3284 = vmatprep.subr.bf16.mxu0 0
    %3285 = vmatpush1.bf16.msra.mxu0 0
    %3286 = vmatprep.subr.bf16.mxu0 0
    %3287 = vmatpush1.bf16.msra.mxu0 0
    %3288 = vmatprep.subr.bf16.mxu0 0
    %3289 = vmatpush1.bf16.msra.mxu0 0
    %3290 = vmatprep.subr.bf16.mxu0 0
    %3291 = vmatpush1.bf16.msra.mxu0 0
    %3292 = vmatprep.subr.bf16.mxu0 0
    %3293 = vmatpush1.bf16.msra.mxu0 0
    %3294 = vmatprep.subr.bf16.mxu0 0
    %3295 = vmatpush1.bf16.msra.mxu0 0
    %3296 = vmatprep.subr.bf16.mxu0 0
    %3297 = vmatpush1.bf16.msra.mxu0 0
    %3298 = vmatprep.subr.bf16.mxu0 0
    %3299 = vmatpush1.bf16.msra.mxu0 0
    %3300 = vmatprep.mubr.bf16.mxu0 0
    %3301 = vmatmul.mubr.bf16.gmra.mrb[0].mxu0 %v3034
    %v3302 = vpop.f32.mrb[0].mxu0
    %v3303 = vadd.f32 0.0, %v3302
    %v3304 = vpop.f32.mrb[0].mxu0
    %v3305 = vadd.f32 0.0, %v3304
    %v3306 = vpop.f32.mrb[0].mxu0
    %v3307 = vpop.f32.mrb[0].mxu0
    %3308 = vdwg.mxu0
    %v3309 = vadd.f32 %v3030, %v3262
    %v3310 = vadd.f32 %v3031, %v3264
    %v3311 = vadd.f32 %v3032, %v3303
    %v3312 = vadd.f32 %v3033, %v3305
    %v3313 = vmul.f32 %v3309, 0.5
    %v3314 = vtanh.pop %v3313
    %v3315 = vmul.f32 %v3314, 0.5
    %v3316 = vadd.f32 %v3315, 0.5
    %v3317 = vmul.f32 %v3310, 0.5
    %v3318 = vtanh.pop %v3317
    %v3319 = vmul.f32 %v3318, 0.5
    %v3320 = vadd.f32 %v3319, 0.5
    %v3321 = vtanh.pop %v3311
    %v3322 = vmul.f32 %v3312, 0.5
    %v3323 = vtanh.pop %v3322
    %v3324 = vmul.f32 %v3323, 0.5
    %v3325 = vadd.f32 %v3324, 0.5
    %v3326 = vmul.f32 %v3320, %v3026
    %v3327 = vmul.f32 %v3316, %v3321
    %v3328 = vadd.f32 %v3326, %v3327
    %v3329 = vtanh.pop %v3328
    %v3330 = vmul.f32 %v3325, %v3329
    %3331 = vst [vmem:[#allocation3 + $0x30] sm:$0xff] %v3330
    %v3332 = vld [vmem:[#allocation2 + $0x1a0] sm:$0xff]
    %v3333 = vld [vmem:[#allocation2 + $0x1a8] sm:$0xff]
    %v3334 = vld [vmem:[#allocation2 + $0x1b0] sm:$0xff]
    %v3335 = vld [vmem:[#allocation2 + $0x1b8] sm:$0xff]
    %v3336 = vpack.c.bf16 %v3330, %v3330
    %v3337 = vld [vmem:[#allocation7] sm:$0xff]
    %v3338 = vld [vmem:[#allocation7 + $0x8] sm:$0xff]
    %v3339 = vld [vmem:[#allocation7 + $0x10] sm:$0xff]
    %v3340 = vld [vmem:[#allocation7 + $0x18] sm:$0xff]
    %v3341 = vld [vmem:[#allocation7 + $0x20] sm:$0xff]
    %v3342 = vld [vmem:[#allocation7 + $0x28] sm:$0xff]
    %v3343 = vld [vmem:[#allocation7 + $0x30] sm:$0xff]
    %v3344 = vld [vmem:[#allocation7 + $0x38] sm:$0xff]
    %v3345 = vld [vmem:[#allocation7 + $0x40] sm:$0xff]
    %v3346 = vld [vmem:[#allocation7 + $0x48] sm:$0xff]
    %v3347 = vld [vmem:[#allocation7 + $0x50] sm:$0xff]
    %v3348 = vld [vmem:[#allocation7 + $0x58] sm:$0xff]
    %v3349 = vld [vmem:[#allocation7 + $0x60] sm:$0xff]
    %v3350 = vld [vmem:[#allocation7 + $0x68] sm:$0xff]
    %v3351 = vld [vmem:[#allocation7 + $0x70] sm:$0xff]
    %v3352 = vld [vmem:[#allocation7 + $0x78] sm:$0xff]
    %v3353 = vld [vmem:[#allocation7 + $0x80] sm:$0xff]
    %v3354 = vld [vmem:[#allocation7 + $0x88] sm:$0xff]
    %v3355 = vld [vmem:[#allocation7 + $0x90] sm:$0xff]
    %v3356 = vld [vmem:[#allocation7 + $0x98] sm:$0xff]
    %v3357 = vld [vmem:[#allocation7 + $0xa0] sm:$0xff]
    %v3358 = vld [vmem:[#allocation7 + $0xa8] sm:$0xff]
    %v3359 = vld [vmem:[#allocation7 + $0xb0] sm:$0xff]
    %v3360 = vld [vmem:[#allocation7 + $0xb8] sm:$0xff]
    %v3361 = vld [vmem:[#allocation7 + $0xc0] sm:$0xff]
    %v3362 = vld [vmem:[#allocation7 + $0xc8] sm:$0xff]
    %v3363 = vld [vmem:[#allocation7 + $0xd0] sm:$0xff]
    %v3364 = vld [vmem:[#allocation7 + $0xd8] sm:$0xff]
    %v3365 = vld [vmem:[#allocation7 + $0xe0] sm:$0xff]
    %v3366 = vld [vmem:[#allocation7 + $0xe8] sm:$0xff]
    %v3367 = vld [vmem:[#allocation7 + $0xf0] sm:$0xff]
    %v3368 = vld [vmem:[#allocation7 + $0xf8] sm:$0xff]
    %v3401 = vunpack.c.l.b16 %v3337
    %v3402 = vunpack.c.h.b16 %v3337
    %v3403 = vunpack.c.l.b16 %v3338
    %v3404 = vunpack.c.h.b16 %v3338
    %v3405 = vunpack.c.l.b16 %v3339
    %v3406 = vunpack.c.h.b16 %v3339
    %v3407 = vunpack.c.l.b16 %v3340
    %v3408 = vunpack.c.h.b16 %v3340
    %v3409 = vunpack.c.l.b16 %v3341
    %v3410 = vunpack.c.h.b16 %v3341
    %v3411 = vunpack.c.l.b16 %v3342
    %v3412 = vunpack.c.h.b16 %v3342
    %v3413 = vunpack.c.l.b16 %v3343
    %v3414 = vunpack.c.h.b16 %v3343
    %v3415 = vunpack.c.l.b16 %v3344
    %v3416 = vunpack.c.h.b16 %v3344
    %v3417 = vunpack.c.l.b16 %v3345
    %v3418 = vunpack.c.h.b16 %v3345
    %v3419 = vunpack.c.l.b16 %v3346
    %v3420 = vunpack.c.h.b16 %v3346
    %v3421 = vunpack.c.l.b16 %v3347
    %v3422 = vunpack.c.h.b16 %v3347
    %v3423 = vunpack.c.l.b16 %v3348
    %v3424 = vunpack.c.h.b16 %v3348
    %v3425 = vunpack.c.l.b16 %v3349
    %v3426 = vunpack.c.h.b16 %v3349
    %v3427 = vunpack.c.l.b16 %v3350
    %v3428 = vunpack.c.h.b16 %v3350
    %v3429 = vunpack.c.l.b16 %v3351
    %v3430 = vunpack.c.h.b16 %v3351
    %v3431 = vunpack.c.l.b16 %v3352
    %v3432 = vunpack.c.h.b16 %v3352
    %v3433 = vunpack.c.l.b16 %v3353
    %v3434 = vunpack.c.h.b16 %v3353
    %v3435 = vunpack.c.l.b16 %v3354
    %v3436 = vunpack.c.h.b16 %v3354
    %v3437 = vunpack.c.l.b16 %v3355
    %v3438 = vunpack.c.h.b16 %v3355
    %v3439 = vunpack.c.l.b16 %v3356
    %v3440 = vunpack.c.h.b16 %v3356
    %v3441 = vunpack.c.l.b16 %v3357
    %v3442 = vunpack.c.h.b16 %v3357
    %v3443 = vunpack.c.l.b16 %v3358
    %v3444 = vunpack.c.h.b16 %v3358
    %v3445 = vunpack.c.l.b16 %v3359
    %v3446 = vunpack.c.h.b16 %v3359
    %v3447 = vunpack.c.l.b16 %v3360
    %v3448 = vunpack.c.h.b16 %v3360
    %v3449 = vunpack.c.l.b16 %v3361
    %v3450 = vunpack.c.h.b16 %v3361
    %v3451 = vunpack.c.l.b16 %v3362
    %v3452 = vunpack.c.h.b16 %v3362
    %v3453 = vunpack.c.l.b16 %v3363
    %v3454 = vunpack.c.h.b16 %v3363
    %v3455 = vunpack.c.l.b16 %v3364
    %v3456 = vunpack.c.h.b16 %v3364
    %v3457 = vunpack.c.l.b16 %v3365
    %v3458 = vunpack.c.h.b16 %v3365
    %v3459 = vunpack.c.l.b16 %v3366
    %v3460 = vunpack.c.h.b16 %v3366
    %v3461 = vunpack.c.l.b16 %v3367
    %v3462 = vunpack.c.h.b16 %v3367
    %v3463 = vunpack.c.l.b16 %v3368
    %v3464 = vunpack.c.h.b16 %v3368
    %v3465 = vpack.c.b16 %v3405, %v3401
    %v3466 = vpack.c.b16 %v3406, %v3402
    %v3467 = vpack.c.b16 %v3407, %v3403
    %v3468 = vpack.c.b16 %v3408, %v3404
    %v3469 = vpack.c.b16 %v3413, %v3409
    %v3470 = vpack.c.b16 %v3414, %v3410
    %v3471 = vpack.c.b16 %v3415, %v3411
    %v3472 = vpack.c.b16 %v3416, %v3412
    %v3473 = vpack.c.b16 %v3421, %v3417
    %v3474 = vpack.c.b16 %v3422, %v3418
    %v3475 = vpack.c.b16 %v3423, %v3419
    %v3476 = vpack.c.b16 %v3424, %v3420
    %v3477 = vpack.c.b16 %v3429, %v3425
    %v3478 = vpack.c.b16 %v3430, %v3426
    %v3479 = vpack.c.b16 %v3431, %v3427
    %v3480 = vpack.c.b16 %v3432, %v3428
    %v3481 = vpack.c.b16 %v3437, %v3433
    %v3482 = vpack.c.b16 %v3438, %v3434
    %v3483 = vpack.c.b16 %v3439, %v3435
    %v3484 = vpack.c.b16 %v3440, %v3436
    %v3485 = vpack.c.b16 %v3445, %v3441
    %v3486 = vpack.c.b16 %v3446, %v3442
    %v3487 = vpack.c.b16 %v3447, %v3443
    %v3488 = vpack.c.b16 %v3448, %v3444
    %v3489 = vpack.c.b16 %v3453, %v3449
    %v3490 = vpack.c.b16 %v3454, %v3450
    %v3491 = vpack.c.b16 %v3455, %v3451
    %v3492 = vpack.c.b16 %v3456, %v3452
    %v3493 = vpack.c.b16 %v3461, %v3457
    %v3494 = vpack.c.b16 %v3462, %v3458
    %v3495 = vpack.c.b16 %v3463, %v3459
    %v3496 = vpack.c.b16 %v3464, %v3460
    %3529 = vmatprep.subr.bf16.mxu0 %v3466
    %3530 = vmatpush1.bf16.msra.mxu0 %v3465
    %3531 = vmatprep.subr.bf16.mxu0 %v3470
    %3532 = vmatpush1.bf16.msra.mxu0 %v3469
    %3533 = vmatprep.subr.bf16.mxu0 %v3474
    %3534 = vmatpush1.bf16.msra.mxu0 %v3473
    %3535 = vmatprep.subr.bf16.mxu0 %v3478
    %3536 = vmatpush1.bf16.msra.mxu0 %v3477
    %3537 = vmatprep.subr.bf16.mxu0 %v3482
    %3538 = vmatpush1.bf16.msra.mxu0 %v3481
    %3539 = vmatprep.subr.bf16.mxu0 %v3486
    %3540 = vmatpush1.bf16.msra.mxu0 %v3485
    %3541 = vmatprep.subr.bf16.mxu0 %v3490
    %3542 = vmatpush1.bf16.msra.mxu0 %v3489
    %3543 = vmatprep.subr.bf16.mxu0 %v3494
    %3544 = vmatpush1.bf16.msra.mxu0 %v3493
    %3545 = vmatprep.subr.bf16.mxu0 0
    %3546 = vmatpush1.bf16.msra.mxu0 0
    %3547 = vmatprep.subr.bf16.mxu0 0
    %3548 = vmatpush1.bf16.msra.mxu0 0
    %3549 = vmatprep.subr.bf16.mxu0 0
    %3550 = vmatpush1.bf16.msra.mxu0 0
    %3551 = vmatprep.subr.bf16.mxu0 0
    %3552 = vmatpush1.bf16.msra.mxu0 0
    %3553 = vmatprep.subr.bf16.mxu0 0
    %3554 = vmatpush1.bf16.msra.mxu0 0
    %3555 = vmatprep.subr.bf16.mxu0 0
    %3556 = vmatpush1.bf16.msra.mxu0 0
    %3557 = vmatprep.subr.bf16.mxu0 0
    %3558 = vmatpush1.bf16.msra.mxu0 0
    %3559 = vmatprep.subr.bf16.mxu0 0
    %3560 = vmatpush1.bf16.msra.mxu0 0
    %3561 = vmatprep.mubr.bf16.mxu0 0
    %3562 = vmatmul.mubr.bf16.gmra.mrb[0].mxu0 %v3336
    %v3563 = vpop.f32.mrb[0].mxu0
    %v3564 = vadd.f32 0.0, %v3563
    %v3565 = vpop.f32.mrb[0].mxu0
    %v3566 = vadd.f32 0.0, %v3565
    %v3567 = vpop.f32.mrb[0].mxu0
    %v3568 = vpop.f32.mrb[0].mxu0
    %3569 = vdwg.mxu0
    %3570 = vmatprep.subr.bf16.mxu0 %v3468
    %3571 = vmatpush1.bf16.msra.mxu0 %v3467
    %3572 = vmatprep.subr.bf16.mxu0 %v3472
    %3573 = vmatpush1.bf16.msra.mxu0 %v3471
    %3574 = vmatprep.subr.bf16.mxu0 %v3476
    %3575 = vmatpush1.bf16.msra.mxu0 %v3475
    %3576 = vmatprep.subr.bf16.mxu0 %v3480
    %3577 = vmatpush1.bf16.msra.mxu0 %v3479
    %3578 = vmatprep.subr.bf16.mxu0 %v3484
    %3579 = vmatpush1.bf16.msra.mxu0 %v3483
    %3580 = vmatprep.subr.bf16.mxu0 %v3488
    %3581 = vmatpush1.bf16.msra.mxu0 %v3487
    %3582 = vmatprep.subr.bf16.mxu0 %v3492
    %3583 = vmatpush1.bf16.msra.mxu0 %v3491
    %3584 = vmatprep.subr.bf16.mxu0 %v3496
    %3585 = vmatpush1.bf16.msra.mxu0 %v3495
    %3586 = vmatprep.subr.bf16.mxu0 0
    %3587 = vmatpush1.bf16.msra.mxu0 0
    %3588 = vmatprep.subr.bf16.mxu0 0
    %3589 = vmatpush1.bf16.msra.mxu0 0
    %3590 = vmatprep.subr.bf16.mxu0 0
    %3591 = vmatpush1.bf16.msra.mxu0 0
    %3592 = vmatprep.subr.bf16.mxu0 0
    %3593 = vmatpush1.bf16.msra.mxu0 0
    %3594 = vmatprep.subr.bf16.mxu0 0
    %3595 = vmatpush1.bf16.msra.mxu0 0
    %3596 = vmatprep.subr.bf16.mxu0 0
    %3597 = vmatpush1.bf16.msra.mxu0 0
    %3598 = vmatprep.subr.bf16.mxu0 0
    %3599 = vmatpush1.bf16.msra.mxu0 0
    %3600 = vmatprep.subr.bf16.mxu0 0
    %3601 = vmatpush1.bf16.msra.mxu0 0
    %3602 = vmatprep.mubr.bf16.mxu0 0
    %3603 = vmatmul.mubr.bf16.gmra.mrb[0].mxu0 %v3336
    %v3604 = vpop.f32.mrb[0].mxu0
    %v3605 = vadd.f32 0.0, %v3604
    %v3606 = vpop.f32.mrb[0].mxu0
    %v3607 = vadd.f32 0.0, %v3606
    %v3608 = vpop.f32.mrb[0].mxu0
    %v3609 = vpop.f32.mrb[0].mxu0
    %3610 = vdwg.mxu0
    %v3611 = vadd.f32 %v3332, %v3564
    %v3612 = vadd.f32 %v3333, %v3566
    %v3613 = vadd.f32 %v3334, %v3605
    %v3614 = vadd.f32 %v3335, %v3607
    %v3615 = vmul.f32 %v3611, 0.5
    %v3616 = vtanh.pop %v3615
    %v3617 = vmul.f32 %v3616, 0.5
    %v3618 = vadd.f32 %v3617, 0.5
    %v3619 = vmul.f32 %v3612, 0.5
    %v3620 = vtanh.pop %v3619
    %v3621 = vmul.f32 %v3620, 0.5
    %v3622 = vadd.f32 %v3621, 0.5
    %v3623 = vtanh.pop %v3613
    %v3624 = vmul.f32 %v3614, 0.5
    %v3625 = vtanh.pop %v3624
    %v3626 = vmul.f32 %v3625, 0.5
    %v3627 = vadd.f32 %v3626, 0.5
    %v3628 = vmul.f32 %v3622, %v3328
    %v3629 = vmul.f32 %v3618, %v3623
    %v3630 = vadd.f32 %v3628, %v3629
    %v3631 = vtanh.pop %v3630
    %v3632 = vmul.f32 %v3627, %v3631
    %3633 = vst [vmem:[#allocation3 + $0x38] sm:$0xff] %v3632
    %v3634 = vld [vmem:[#allocation2 + $0x1c0] sm:$0xff]
    %v3635 = vld [vmem:[#allocation2 + $0x1c8] sm:$0xff]
    %v3636 = vld [vmem:[#allocation2 + $0x1d0] sm:$0xff]
    %v3637 = vld [vmem:[#allocation2 + $0x1d8] sm:$0xff]
    %v3638 = vpack.c.bf16 %v3632, %v3632
    %v3639 = vld [vmem:[#allocation7] sm:$0xff]
    %v3640 = vld [vmem:[#allocation7 + $0x8] sm:$0xff]
    %v3641 = vld [vmem:[#allocation7 + $0x10] sm:$0xff]
    %v3642 = vld [vmem:[#allocation7 + $0x18] sm:$0xff]
    %v3643 = vld [vmem:[#allocation7 + $0x20] sm:$0xff]
    %v3644 = vld [vmem:[#allocation7 + $0x28] sm:$0xff]
    %v3645 = vld [vmem:[#allocation7 + $0x30] sm:$0xff]
    %v3646 = vld [vmem:[#allocation7 + $0x38] sm:$0xff]
    %v3647 = vld [vmem:[#allocation7 + $0x40] sm:$0xff]
    %v3648 = vld [vmem:[#allocation7 + $0x48] sm:$0xff]
    %v3649 = vld [vmem:[#allocation7 + $0x50] sm:$0xff]
    %v3650 = vld [vmem:[#allocation7 + $0x58] sm:$0xff]
    %v3651 = vld [vmem:[#allocation7 + $0x60] sm:$0xff]
    %v3652 = vld [vmem:[#allocation7 + $0x68] sm:$0xff]
    %v3653 = vld [vmem:[#allocation7 + $0x70] sm:$0xff]
    %v3654 = vld [vmem:[#allocation7 + $0x78] sm:$0xff]
    %v3655 = vld [vmem:[#allocation7 + $0x80] sm:$0xff]
    %v3656 = vld [vmem:[#allocation7 + $0x88] sm:$0xff]
    %v3657 = vld [vmem:[#allocation7 + $0x90] sm:$0xff]
    %v3658 = vld [vmem:[#allocation7 + $0x98] sm:$0xff]
    %v3659 = vld [vmem:[#allocation7 + $0xa0] sm:$0xff]
    %v3660 = vld [vmem:[#allocation7 + $0xa8] sm:$0xff]
    %v3661 = vld [vmem:[#allocation7 + $0xb0] sm:$0xff]
    %v3662 = vld [vmem:[#allocation7 + $0xb8] sm:$0xff]
    %v3663 = vld [vmem:[#allocation7 + $0xc0] sm:$0xff]
    %v3664 = vld [vmem:[#allocation7 + $0xc8] sm:$0xff]
    %v3665 = vld [vmem:[#allocation7 + $0xd0] sm:$0xff]
    %v3666 = vld [vmem:[#allocation7 + $0xd8] sm:$0xff]
    %v3667 = vld [vmem:[#allocation7 + $0xe0] sm:$0xff]
    %v3668 = vld [vmem:[#allocation7 + $0xe8] sm:$0xff]
    %v3669 = vld [vmem:[#allocation7 + $0xf0] sm:$0xff]
    %v3670 = vld [vmem:[#allocation7 + $0xf8] sm:$0xff]
    %v3703 = vunpack.c.l.b16 %v3639
    %v3704 = vunpack.c.h.b16 %v3639
    %v3705 = vunpack.c.l.b16 %v3640
    %v3706 = vunpack.c.h.b16 %v3640
    %v3707 = vunpack.c.l.b16 %v3641
    %v3708 = vunpack.c.h.b16 %v3641
    %v3709 = vunpack.c.l.b16 %v3642
    %v3710 = vunpack.c.h.b16 %v3642
    %v3711 = vunpack.c.l.b16 %v3643
    %v3712 = vunpack.c.h.b16 %v3643
    %v3713 = vunpack.c.l.b16 %v3644
    %v3714 = vunpack.c.h.b16 %v3644
    %v3715 = vunpack.c.l.b16 %v3645
    %v3716 = vunpack.c.h.b16 %v3645
    %v3717 = vunpack.c.l.b16 %v3646
    %v3718 = vunpack.c.h.b16 %v3646
    %v3719 = vunpack.c.l.b16 %v3647
    %v3720 = vunpack.c.h.b16 %v3647
    %v3721 = vunpack.c.l.b16 %v3648
    %v3722 = vunpack.c.h.b16 %v3648
    %v3723 = vunpack.c.l.b16 %v3649
    %v3724 = vunpack.c.h.b16 %v3649
    %v3725 = vunpack.c.l.b16 %v3650
    %v3726 = vunpack.c.h.b16 %v3650
    %v3727 = vunpack.c.l.b16 %v3651
    %v3728 = vunpack.c.h.b16 %v3651
    %v3729 = vunpack.c.l.b16 %v3652
    %v3730 = vunpack.c.h.b16 %v3652
    %v3731 = vunpack.c.l.b16 %v3653
    %v3732 = vunpack.c.h.b16 %v3653
    %v3733 = vunpack.c.l.b16 %v3654
    %v3734 = vunpack.c.h.b16 %v3654
    %v3735 = vunpack.c.l.b16 %v3655
    %v3736 = vunpack.c.h.b16 %v3655
    %v3737 = vunpack.c.l.b16 %v3656
    %v3738 = vunpack.c.h.b16 %v3656
    %v3739 = vunpack.c.l.b16 %v3657
    %v3740 = vunpack.c.h.b16 %v3657
    %v3741 = vunpack.c.l.b16 %v3658
    %v3742 = vunpack.c.h.b16 %v3658
    %v3743 = vunpack.c.l.b16 %v3659
    %v3744 = vunpack.c.h.b16 %v3659
    %v3745 = vunpack.c.l.b16 %v3660
    %v3746 = vunpack.c.h.b16 %v3660
    %v3747 = vunpack.c.l.b16 %v3661
    %v3748 = vunpack.c.h.b16 %v3661
    %v3749 = vunpack.c.l.b16 %v3662
    %v3750 = vunpack.c.h.b16 %v3662
    %v3751 = vunpack.c.l.b16 %v3663
    %v3752 = vunpack.c.h.b16 %v3663
    %v3753 = vunpack.c.l.b16 %v3664
    %v3754 = vunpack.c.h.b16 %v3664
    %v3755 = vunpack.c.l.b16 %v3665
    %v3756 = vunpack.c.h.b16 %v3665
    %v3757 = vunpack.c.l.b16 %v3666
    %v3758 = vunpack.c.h.b16 %v3666
    %v3759 = vunpack.c.l.b16 %v3667
    %v3760 = vunpack.c.h.b16 %v3667
    %v3761 = vunpack.c.l.b16 %v3668
    %v3762 = vunpack.c.h.b16 %v3668
    %v3763 = vunpack.c.l.b16 %v3669
    %v3764 = vunpack.c.h.b16 %v3669
    %v3765 = vunpack.c.l.b16 %v3670
    %v3766 = vunpack.c.h.b16 %v3670
    %v3767 = vpack.c.b16 %v3707, %v3703
    %v3768 = vpack.c.b16 %v3708, %v3704
    %v3769 = vpack.c.b16 %v3709, %v3705
    %v3770 = vpack.c.b16 %v3710, %v3706
    %v3771 = vpack.c.b16 %v3715, %v3711
    %v3772 = vpack.c.b16 %v3716, %v3712
    %v3773 = vpack.c.b16 %v3717, %v3713
    %v3774 = vpack.c.b16 %v3718, %v3714
    %v3775 = vpack.c.b16 %v3723, %v3719
    %v3776 = vpack.c.b16 %v3724, %v3720
    %v3777 = vpack.c.b16 %v3725, %v3721
    %v3778 = vpack.c.b16 %v3726, %v3722
    %v3779 = vpack.c.b16 %v3731, %v3727
    %v3780 = vpack.c.b16 %v3732, %v3728
    %v3781 = vpack.c.b16 %v3733, %v3729
    %v3782 = vpack.c.b16 %v3734, %v3730
    %v3783 = vpack.c.b16 %v3739, %v3735
    %v3784 = vpack.c.b16 %v3740, %v3736
    %v3785 = vpack.c.b16 %v3741, %v3737
    %v3786 = vpack.c.b16 %v3742, %v3738
    %v3787 = vpack.c.b16 %v3747, %v3743
    %v3788 = vpack.c.b16 %v3748, %v3744
    %v3789 = vpack.c.b16 %v3749, %v3745
    %v3790 = vpack.c.b16 %v3750, %v3746
    %v3791 = vpack.c.b16 %v3755, %v3751
    %v3792 = vpack.c.b16 %v3756, %v3752
    %v3793 = vpack.c.b16 %v3757, %v3753
    %v3794 = vpack.c.b16 %v3758, %v3754
    %v3795 = vpack.c.b16 %v3763, %v3759
    %v3796 = vpack.c.b16 %v3764, %v3760
    %v3797 = vpack.c.b16 %v3765, %v3761
    %v3798 = vpack.c.b16 %v3766, %v3762
    %3831 = vmatprep.subr.bf16.mxu0 %v3768
    %3832 = vmatpush1.bf16.msra.mxu0 %v3767
    %3833 = vmatprep.subr.bf16.mxu0 %v3772
    %3834 = vmatpush1.bf16.msra.mxu0 %v3771
    %3835 = vmatprep.subr.bf16.mxu0 %v3776
    %3836 = vmatpush1.bf16.msra.mxu0 %v3775
    %3837 = vmatprep.subr.bf16.mxu0 %v3780
    %3838 = vmatpush1.bf16.msra.mxu0 %v3779
    %3839 = vmatprep.subr.bf16.mxu0 %v3784
    %3840 = vmatpush1.bf16.msra.mxu0 %v3783
    %3841 = vmatprep.subr.bf16.mxu0 %v3788
    %3842 = vmatpush1.bf16.msra.mxu0 %v3787
    %3843 = vmatprep.subr.bf16.mxu0 %v3792
    %3844 = vmatpush1.bf16.msra.mxu0 %v3791
    %3845 = vmatprep.subr.bf16.mxu0 %v3796
    %3846 = vmatpush1.bf16.msra.mxu0 %v3795
    %3847 = vmatprep.subr.bf16.mxu0 0
    %3848 = vmatpush1.bf16.msra.mxu0 0
    %3849 = vmatprep.subr.bf16.mxu0 0
    %3850 = vmatpush1.bf16.msra.mxu0 0
    %3851 = vmatprep.subr.bf16.mxu0 0
    %3852 = vmatpush1.bf16.msra.mxu0 0
    %3853 = vmatprep.subr.bf16.mxu0 0
    %3854 = vmatpush1.bf16.msra.mxu0 0
    %3855 = vmatprep.subr.bf16.mxu0 0
    %3856 = vmatpush1.bf16.msra.mxu0 0
    %3857 = vmatprep.subr.bf16.mxu0 0
    %3858 = vmatpush1.bf16.msra.mxu0 0
    %3859 = vmatprep.subr.bf16.mxu0 0
    %3860 = vmatpush1.bf16.msra.mxu0 0
    %3861 = vmatprep.subr.bf16.mxu0 0
    %3862 = vmatpush1.bf16.msra.mxu0 0
    %3863 = vmatprep.mubr.bf16.mxu0 0
    %3864 = vmatmul.mubr.bf16.gmra.mrb[0].mxu0 %v3638
    %v3865 = vpop.f32.mrb[0].mxu0
    %v3866 = vadd.f32 0.0, %v3865
    %v3867 = vpop.f32.mrb[0].mxu0
    %v3868 = vadd.f32 0.0, %v3867
    %v3869 = vpop.f32.mrb[0].mxu0
    %v3870 = vpop.f32.mrb[0].mxu0
    %3871 = vdwg.mxu0
    %3872 = vmatprep.subr.bf16.mxu0 %v3770
    %3873 = vmatpush1.bf16.msra.mxu0 %v3769
    %3874 = vmatprep.subr.bf16.mxu0 %v3774
    %3875 = vmatpush1.bf16.msra.mxu0 %v3773
    %3876 = vmatprep.subr.bf16.mxu0 %v3778
    %3877 = vmatpush1.bf16.msra.mxu0 %v3777
    %3878 = vmatprep.subr.bf16.mxu0 %v3782
    %3879 = vmatpush1.bf16.msra.mxu0 %v3781
    %3880 = vmatprep.subr.bf16.mxu0 %v3786
    %3881 = vmatpush1.bf16.msra.mxu0 %v3785
    %3882 = vmatprep.subr.bf16.mxu0 %v3790
    %3883 = vmatpush1.bf16.msra.mxu0 %v3789
    %3884 = vmatprep.subr.bf16.mxu0 %v3794
    %3885 = vmatpush1.bf16.msra.mxu0 %v3793
    %3886 = vmatprep.subr.bf16.mxu0 %v3798
    %3887 = vmatpush1.bf16.msra.mxu0 %v3797
    %3888 = vmatprep.subr.bf16.mxu0 0
    %3889 = vmatpush1.bf16.msra.mxu0 0
    %3890 = vmatprep.subr.bf16.mxu0 0
    %3891 = vmatpush1.bf16.msra.mxu0 0
    %3892 = vmatprep.subr.bf16.mxu0 0
    %3893 = vmatpush1.bf16.msra.mxu0 0
    %3894 = vmatprep.subr.bf16.mxu0 0
    %3895 = vmatpush1.bf16.msra.mxu0 0
    %3896 = vmatprep.subr.bf16.mxu0 0
    %3897 = vmatpush1.bf16.msra.mxu0 0
    %3898 = vmatprep.subr.bf16.mxu0 0
    %3899 = vmatpush1.bf16.msra.mxu0 0
    %3900 = vmatprep.subr.bf16.mxu0 0
    %3901 = vmatpush1.bf16.msra.mxu0 0
    %3902 = vmatprep.subr.bf16.mxu0 0
    %3903 = vmatpush1.bf16.msra.mxu0 0
    %3904 = vmatprep.mubr.bf16.mxu0 0
    %3905 = vmatmul.mubr.bf16.gmra.mrb[0].mxu0 %v3638
    %v3906 = vpop.f32.mrb[0].mxu0
    %v3907 = vadd.f32 0.0, %v3906
    %v3908 = vpop.f32.mrb[0].mxu0
    %v3909 = vadd.f32 0.0, %v3908
    %v3910 = vpop.f32.mrb[0].mxu0
    %v3911 = vpop.f32.mrb[0].mxu0
    %3912 = vdwg.mxu0
    %v3913 = vadd.f32 %v3634, %v3866
    %v3914 = vadd.f32 %v3635, %v3868
    %v3915 = vadd.f32 %v3636, %v3907
    %v3916 = vadd.f32 %v3637, %v3909
    %v3917 = vmul.f32 %v3913, 0.5
    %v3918 = vtanh.pop %v3917
    %v3919 = vmul.f32 %v3918, 0.5
    %v3920 = vadd.f32 %v3919, 0.5
    %v3921 = vmul.f32 %v3914, 0.5
    %v3922 = vtanh.pop %v3921
    %v3923 = vmul.f32 %v3922, 0.5
    %v3924 = vadd.f32 %v3923, 0.5
    %v3925 = vtanh.pop %v3915
    %v3926 = vmul.f32 %v3916, 0.5
    %v3927 = vtanh.pop %v3926
    %v3928 = vmul.f32 %v3927, 0.5
    %v3929 = vadd.f32 %v3928, 0.5
    %v3930 = vmul.f32 %v3924, %v3630
    %v3931 = vmul.f32 %v3920, %v3925
    %v3932 = vadd.f32 %v3930, %v3931
    %v3933 = vtanh.pop %v3932
    %v3934 = vmul.f32 %v3929, %v3933
    %3935 = vst [vmem:[#allocation3 + $0x40] sm:$0xff] %v3934
    %v3936 = vld [vmem:[#allocation2 + $0x1e0] sm:$0xff]
    %v3937 = vld [vmem:[#allocation2 + $0x1e8] sm:$0xff]
    %v3938 = vld [vmem:[#allocation2 + $0x1f0] sm:$0xff]
    %v3939 = vld [vmem:[#allocation2 + $0x1f8] sm:$0xff]
    %v3940 = vpack.c.bf16 %v3934, %v3934
    %v3941 = vld [vmem:[#allocation7] sm:$0xff]
    %v3942 = vld [vmem:[#allocation7 + $0x8] sm:$0xff]
    %v3943 = vld [vmem:[#allocation7 + $0x10] sm:$0xff]
    %v3944 = vld [vmem:[#allocation7 + $0x18] sm:$0xff]
    %v3945 = vld [vmem:[#allocation7 + $0x20] sm:$0xff]
    %v3946 = vld [vmem:[#allocation7 + $0x28] sm:$0xff]
    %v3947 = vld [vmem:[#allocation7 + $0x30] sm:$0xff]
    %v3948 = vld [vmem:[#allocation7 + $0x38] sm:$0xff]
    %v3949 = vld [vmem:[#allocation7 + $0x40] sm:$0xff]
    %v3950 = vld [vmem:[#allocation7 + $0x48] sm:$0xff]
    %v3951 = vld [vmem:[#allocation7 + $0x50] sm:$0xff]
    %v3952 = vld [vmem:[#allocation7 + $0x58] sm:$0xff]
    %v3953 = vld [vmem:[#allocation7 + $0x60] sm:$0xff]
    %v3954 = vld [vmem:[#allocation7 + $0x68] sm:$0xff]
    %v3955 = vld [vmem:[#allocation7 + $0x70] sm:$0xff]
    %v3956 = vld [vmem:[#allocation7 + $0x78] sm:$0xff]
    %v3957 = vld [vmem:[#allocation7 + $0x80] sm:$0xff]
    %v3958 = vld [vmem:[#allocation7 + $0x88] sm:$0xff]
    %v3959 = vld [vmem:[#allocation7 + $0x90] sm:$0xff]
    %v3960 = vld [vmem:[#allocation7 + $0x98] sm:$0xff]
    %v3961 = vld [vmem:[#allocation7 + $0xa0] sm:$0xff]
    %v3962 = vld [vmem:[#allocation7 + $0xa8] sm:$0xff]
    %v3963 = vld [vmem:[#allocation7 + $0xb0] sm:$0xff]
    %v3964 = vld [vmem:[#allocation7 + $0xb8] sm:$0xff]
    %v3965 = vld [vmem:[#allocation7 + $0xc0] sm:$0xff]
    %v3966 = vld [vmem:[#allocation7 + $0xc8] sm:$0xff]
    %v3967 = vld [vmem:[#allocation7 + $0xd0] sm:$0xff]
    %v3968 = vld [vmem:[#allocation7 + $0xd8] sm:$0xff]
    %v3969 = vld [vmem:[#allocation7 + $0xe0] sm:$0xff]
    %v3970 = vld [vmem:[#allocation7 + $0xe8] sm:$0xff]
    %v3971 = vld [vmem:[#allocation7 + $0xf0] sm:$0xff]
    %v3972 = vld [vmem:[#allocation7 + $0xf8] sm:$0xff]
    %v4005 = vunpack.c.l.b16 %v3941
    %v4006 = vunpack.c.h.b16 %v3941
    %v4007 = vunpack.c.l.b16 %v3942
    %v4008 = vunpack.c.h.b16 %v3942
    %v4009 = vunpack.c.l.b16 %v3943
    %v4010 = vunpack.c.h.b16 %v3943
    %v4011 = vunpack.c.l.b16 %v3944
    %v4012 = vunpack.c.h.b16 %v3944
    %v4013 = vunpack.c.l.b16 %v3945
    %v4014 = vunpack.c.h.b16 %v3945
    %v4015 = vunpack.c.l.b16 %v3946
    %v4016 = vunpack.c.h.b16 %v3946
    %v4017 = vunpack.c.l.b16 %v3947
    %v4018 = vunpack.c.h.b16 %v3947
    %v4019 = vunpack.c.l.b16 %v3948
    %v4020 = vunpack.c.h.b16 %v3948
    %v4021 = vunpack.c.l.b16 %v3949
    %v4022 = vunpack.c.h.b16 %v3949
    %v4023 = vunpack.c.l.b16 %v3950
    %v4024 = vunpack.c.h.b16 %v3950
    %v4025 = vunpack.c.l.b16 %v3951
    %v4026 = vunpack.c.h.b16 %v3951
    %v4027 = vunpack.c.l.b16 %v3952
    %v4028 = vunpack.c.h.b16 %v3952
    %v4029 = vunpack.c.l.b16 %v3953
    %v4030 = vunpack.c.h.b16 %v3953
    %v4031 = vunpack.c.l.b16 %v3954
    %v4032 = vunpack.c.h.b16 %v3954
    %v4033 = vunpack.c.l.b16 %v3955
    %v4034 = vunpack.c.h.b16 %v3955
    %v4035 = vunpack.c.l.b16 %v3956
    %v4036 = vunpack.c.h.b16 %v3956
    %v4037 = vunpack.c.l.b16 %v3957
    %v4038 = vunpack.c.h.b16 %v3957
    %v4039 = vunpack.c.l.b16 %v3958
    %v4040 = vunpack.c.h.b16 %v3958
    %v4041 = vunpack.c.l.b16 %v3959
    %v4042 = vunpack.c.h.b16 %v3959
    %v4043 = vunpack.c.l.b16 %v3960
    %v4044 = vunpack.c.h.b16 %v3960
    %v4045 = vunpack.c.l.b16 %v3961
    %v4046 = vunpack.c.h.b16 %v3961
    %v4047 = vunpack.c.l.b16 %v3962
    %v4048 = vunpack.c.h.b16 %v3962
    %v4049 = vunpack.c.l.b16 %v3963
    %v4050 = vunpack.c.h.b16 %v3963
    %v4051 = vunpack.c.l.b16 %v3964
    %v4052 = vunpack.c.h.b16 %v3964
    %v4053 = vunpack.c.l.b16 %v3965
    %v4054 = vunpack.c.h.b16 %v3965
    %v4055 = vunpack.c.l.b16 %v3966
    %v4056 = vunpack.c.h.b16 %v3966
    %v4057 = vunpack.c.l.b16 %v3967
    %v4058 = vunpack.c.h.b16 %v3967
    %v4059 = vunpack.c.l.b16 %v3968
    %v4060 = vunpack.c.h.b16 %v3968
    %v4061 = vunpack.c.l.b16 %v3969
    %v4062 = vunpack.c.h.b16 %v3969
    %v4063 = vunpack.c.l.b16 %v3970
    %v4064 = vunpack.c.h.b16 %v3970
    %v4065 = vunpack.c.l.b16 %v3971
    %v4066 = vunpack.c.h.b16 %v3971
    %v4067 = vunpack.c.l.b16 %v3972
    %v4068 = vunpack.c.h.b16 %v3972
    %v4069 = vpack.c.b16 %v4009, %v4005
    %v4070 = vpack.c.b16 %v4010, %v4006
    %v4071 = vpack.c.b16 %v4011, %v4007
    %v4072 = vpack.c.b16 %v4012, %v4008
    %v4073 = vpack.c.b16 %v4017, %v4013
    %v4074 = vpack.c.b16 %v4018, %v4014
    %v4075 = vpack.c.b16 %v4019, %v4015
    %v4076 = vpack.c.b16 %v4020, %v4016
    %v4077 = vpack.c.b16 %v4025, %v4021
    %v4078 = vpack.c.b16 %v4026, %v4022
    %v4079 = vpack.c.b16 %v4027, %v4023
    %v4080 = vpack.c.b16 %v4028, %v4024
    %v4081 = vpack.c.b16 %v4033, %v4029
    %v4082 = vpack.c.b16 %v4034, %v4030
    %v4083 = vpack.c.b16 %v4035, %v4031
    %v4084 = vpack.c.b16 %v4036, %v4032
    %v4085 = vpack.c.b16 %v4041, %v4037
    %v4086 = vpack.c.b16 %v4042, %v4038
    %v4087 = vpack.c.b16 %v4043, %v4039
    %v4088 = vpack.c.b16 %v4044, %v4040
    %v4089 = vpack.c.b16 %v4049, %v4045
    %v4090 = vpack.c.b16 %v4050, %v4046
    %v4091 = vpack.c.b16 %v4051, %v4047
    %v4092 = vpack.c.b16 %v4052, %v4048
    %v4093 = vpack.c.b16 %v4057, %v4053
    %v4094 = vpack.c.b16 %v4058, %v4054
    %v4095 = vpack.c.b16 %v4059, %v4055
    %v4096 = vpack.c.b16 %v4060, %v4056
    %v4097 = vpack.c.b16 %v4065, %v4061
    %v4098 = vpack.c.b16 %v4066, %v4062
    %v4099 = vpack.c.b16 %v4067, %v4063
    %v4100 = vpack.c.b16 %v4068, %v4064
    %4133 = vmatprep.subr.bf16.mxu0 %v4070
    %4134 = vmatpush1.bf16.msra.mxu0 %v4069
    %4135 = vmatprep.subr.bf16.mxu0 %v4074
    %4136 = vmatpush1.bf16.msra.mxu0 %v4073
    %4137 = vmatprep.subr.bf16.mxu0 %v4078
    %4138 = vmatpush1.bf16.msra.mxu0 %v4077
    %4139 = vmatprep.subr.bf16.mxu0 %v4082
    %4140 = vmatpush1.bf16.msra.mxu0 %v4081
    %4141 = vmatprep.subr.bf16.mxu0 %v4086
    %4142 = vmatpush1.bf16.msra.mxu0 %v4085
    %4143 = vmatprep.subr.bf16.mxu0 %v4090
    %4144 = vmatpush1.bf16.msra.mxu0 %v4089
    %4145 = vmatprep.subr.bf16.mxu0 %v4094
    %4146 = vmatpush1.bf16.msra.mxu0 %v4093
    %4147 = vmatprep.subr.bf16.mxu0 %v4098
    %4148 = vmatpush1.bf16.msra.mxu0 %v4097
    %4149 = vmatprep.subr.bf16.mxu0 0
    %4150 = vmatpush1.bf16.msra.mxu0 0
    %4151 = vmatprep.subr.bf16.mxu0 0
    %4152 = vmatpush1.bf16.msra.mxu0 0
    %4153 = vmatprep.subr.bf16.mxu0 0
    %4154 = vmatpush1.bf16.msra.mxu0 0
    %4155 = vmatprep.subr.bf16.mxu0 0
    %4156 = vmatpush1.bf16.msra.mxu0 0
    %4157 = vmatprep.subr.bf16.mxu0 0
    %4158 = vmatpush1.bf16.msra.mxu0 0
    %4159 = vmatprep.subr.bf16.mxu0 0
    %4160 = vmatpush1.bf16.msra.mxu0 0
    %4161 = vmatprep.subr.bf16.mxu0 0
    %4162 = vmatpush1.bf16.msra.mxu0 0
    %4163 = vmatprep.subr.bf16.mxu0 0
    %4164 = vmatpush1.bf16.msra.mxu0 0
    %4165 = vmatprep.mubr.bf16.mxu0 0
    %4166 = vmatmul.mubr.bf16.gmra.mrb[0].mxu0 %v3940
    %v4167 = vpop.f32.mrb[0].mxu0
    %v4168 = vadd.f32 0.0, %v4167
    %v4169 = vpop.f32.mrb[0].mxu0
    %v4170 = vadd.f32 0.0, %v4169
    %v4171 = vpop.f32.mrb[0].mxu0
    %v4172 = vpop.f32.mrb[0].mxu0
    %4173 = vdwg.mxu0
    %4174 = vmatprep.subr.bf16.mxu0 %v4072
    %4175 = vmatpush1.bf16.msra.mxu0 %v4071
    %4176 = vmatprep.subr.bf16.mxu0 %v4076
    %4177 = vmatpush1.bf16.msra.mxu0 %v4075
    %4178 = vmatprep.subr.bf16.mxu0 %v4080
    %4179 = vmatpush1.bf16.msra.mxu0 %v4079
    %4180 = vmatprep.subr.bf16.mxu0 %v4084
    %4181 = vmatpush1.bf16.msra.mxu0 %v4083
    %4182 = vmatprep.subr.bf16.mxu0 %v4088
    %4183 = vmatpush1.bf16.msra.mxu0 %v4087
    %4184 = vmatprep.subr.bf16.mxu0 %v4092
    %4185 = vmatpush1.bf16.msra.mxu0 %v4091
    %4186 = vmatprep.subr.bf16.mxu0 %v4096
    %4187 = vmatpush1.bf16.msra.mxu0 %v4095
    %4188 = vmatprep.subr.bf16.mxu0 %v4100
    %4189 = vmatpush1.bf16.msra.mxu0 %v4099
    %4190 = vmatprep.subr.bf16.mxu0 0
    %4191 = vmatpush1.bf16.msra.mxu0 0
    %4192 = vmatprep.subr.bf16.mxu0 0
    %4193 = vmatpush1.bf16.msra.mxu0 0
    %4194 = vmatprep.subr.bf16.mxu0 0
    %4195 = vmatpush1.bf16.msra.mxu0 0
    %4196 = vmatprep.subr.bf16.mxu0 0
    %4197 = vmatpush1.bf16.msra.mxu0 0
    %4198 = vmatprep.subr.bf16.mxu0 0
    %4199 = vmatpush1.bf16.msra.mxu0 0
    %4200 = vmatprep.subr.bf16.mxu0 0
    %4201 = vmatpush1.bf16.msra.mxu0 0
    %4202 = vmatprep.subr.bf16.mxu0 0
    %4203 = vmatpush1.bf16.msra.mxu0 0
    %4204 = vmatprep.subr.bf16.mxu0 0
    %4205 = vmatpush1.bf16.msra.mxu0 0
    %4206 = vmatprep.mubr.bf16.mxu0 0
    %4207 = vmatmul.mubr.bf16.gmra.mrb[0].mxu0 %v3940
    %v4208 = vpop.f32.mrb[0].mxu0
    %v4209 = vadd.f32 0.0, %v4208
    %v4210 = vpop.f32.mrb[0].mxu0
    %v4211 = vadd.f32 0.0, %v4210
    %v4212 = vpop.f32.mrb[0].mxu0
    %v4213 = vpop.f32.mrb[0].mxu0
    %4214 = vdwg.mxu0
    %v4215 = vadd.f32 %v3936, %v4168
    %v4216 = vadd.f32 %v3937, %v4170
    %v4217 = vadd.f32 %v3938, %v4209
    %v4218 = vadd.f32 %v3939, %v4211
    %v4219 = vmul.f32 %v4215, 0.5
    %v4220 = vtanh.pop %v4219
    %v4221 = vmul.f32 %v4220, 0.5
    %v4222 = vadd.f32 %v4221, 0.5
    %v4223 = vmul.f32 %v4216, 0.5
    %v4224 = vtanh.pop %v4223
    %v4225 = vmul.f32 %v4224, 0.5
    %v4226 = vadd.f32 %v4225, 0.5
    %v4227 = vtanh.pop %v4217
    %v4228 = vmul.f32 %v4218, 0.5
    %v4229 = vtanh.pop %v4228
    %v4230 = vmul.f32 %v4229, 0.5
    %v4231 = vadd.f32 %v4230, 0.5
    %v4232 = vmul.f32 %v4226, %v3932
    %v4233 = vmul.f32 %v4222, %v4227
    %v4234 = vadd.f32 %v4232, %v4233
    %v4235 = vtanh.pop %v4234
    %v4236 = vmul.f32 %v4231, %v4235
    %4237 = vst [vmem:[#allocation3 + $0x48] sm:$0xff] %v4236
    %4238 = vst [vmem:[%s9] sm:$0xff] %v4236
    %4239 = vst [vmem:[%s10] sm:$0xff] %v4234
    %s4240 = smul.u32 4, 16
    %s4241 = smul.u32 %s4240, 1
    %s4242 = sshll.u32 %s4241, 4
    %4243 = dma.done [#allocation6], %s4242
    %s4244 = smul.u32 1, 1
    %s4245 = sshll.u32 %s4244, 4
    %4246 = dma.done %s99, %s4245
    %v4247 = vld [vmem:[#allocation3] sm:$0xff]
    %v4248 = vld [vmem:[#allocation3 + $0x8] sm:$0xff]
    %v4249 = vld [vmem:[#allocation3 + $0x10] sm:$0xff]
    %v4250 = vld [vmem:[#allocation3 + $0x18] sm:$0xff]
    %v4251 = vld [vmem:[#allocation3 + $0x20] sm:$0xff]
    %v4252 = vld [vmem:[#allocation3 + $0x28] sm:$0xff]
    %v4253 = vld [vmem:[#allocation3 + $0x30] sm:$0xff]
    %v4254 = vld [vmem:[#allocation3 + $0x38] sm:$0xff]
    %v4255 = vld [vmem:[#allocation3 + $0x40] sm:$0xff]
    %v4256 = vld [vmem:[#allocation3 + $0x48] sm:$0xff]
    %v4257 = vpack.c.bf16 %v4248, %v4247
    %v4258 = vpack.c.bf16 %v4250, %v4249
    %v4259 = vpack.c.bf16 %v4252, %v4251
    %v4260 = vpack.c.bf16 %v4254, %v4253
    %v4261 = vpack.c.bf16 %v4256, %v4255
    %v4262 = vld [vmem:[#allocation4] sm:$0xff]
    %v4263 = vld [vmem:[#allocation4 + $0x8] sm:$0xff]
    %v4264 = vld [vmem:[#allocation4 + $0x10] sm:$0xff]
    %v4265 = vld [vmem:[#allocation4 + $0x18] sm:$0xff]
    %v4266 = vld [vmem:[#allocation4 + $0x20] sm:$0xff]
    %v4267 = vld [vmem:[#allocation4 + $0x28] sm:$0xff]
    %v4268 = vld [vmem:[#allocation4 + $0x30] sm:$0xff]
    %v4269 = vld [vmem:[#allocation4 + $0x38] sm:$0xff]
    %v4270 = vld [vmem:[#allocation5] sm:$0x1]
    %v4272 = vlaneseq
    %v4273 = vshrl.u32 %v4272, 7
    %v4274 = vsub.s32 0, %v4273
    %v4275 = vrot.slane %v4270, %v4274
    %4277 = vmatprep.subr.bf16.mxu0 0
    %4278 = vmatpush1.bf16.msra.mxu0 %v4262
    %4279 = vmatprep.subr.bf16.mxu0 0
    %4280 = vmatpush1.bf16.msra.mxu0 %v4263
    %4281 = vmatprep.subr.bf16.mxu0 0
    %4282 = vmatpush1.bf16.msra.mxu0 %v4264
    %4283 = vmatprep.subr.bf16.mxu0 0
    %4284 = vmatpush1.bf16.msra.mxu0 %v4265
    %4285 = vmatprep.subr.bf16.mxu0 0
    %4286 = vmatpush1.bf16.msra.mxu0 %v4266
    %4287 = vmatprep.subr.bf16.mxu0 0
    %4288 = vmatpush1.bf16.msra.mxu0 %v4267
    %4289 = vmatprep.subr.bf16.mxu0 0
    %4290 = vmatpush1.bf16.msra.mxu0 %v4268
    %4291 = vmatprep.subr.bf16.mxu0 0
    %4292 = vmatpush1.bf16.msra.mxu0 %v4269
    %4293 = vmatprep.subr.bf16.mxu0 0
    %4294 = vmatpush1.bf16.msra.mxu0 0
    %4295 = vmatprep.subr.bf16.mxu0 0
    %4296 = vmatpush1.bf16.msra.mxu0 0
    %4297 = vmatprep.subr.bf16.mxu0 0
    %4298 = vmatpush1.bf16.msra.mxu0 0
    %4299 = vmatprep.subr.bf16.mxu0 0
    %4300 = vmatpush1.bf16.msra.mxu0 0
    %4301 = vmatprep.subr.bf16.mxu0 0
    %4302 = vmatpush1.bf16.msra.mxu0 0
    %4303 = vmatprep.subr.bf16.mxu0 0
    %4304 = vmatpush1.bf16.msra.mxu0 0
    %4305 = vmatprep.subr.bf16.mxu0 0
    %4306 = vmatpush1.bf16.msra.mxu0 0
    %4307 = vmatprep.subr.bf16.mxu0 0
    %4308 = vmatpush1.bf16.msra.mxu0 0
    %4309 = vmatprep.mubr.bf16.mxu0 0
    %4310 = vmatmul.mubr.bf16.gmra.mrb[0].mxu0 %v4257
    %v4311 = vpop.f32.mrb[0].mxu0
    %v4312 = vadd.f32 %v4275, %v4311
    %v4313 = vpop.f32.mrb[0].mxu0
    %v4314 = vpop.f32.mrb[0].mxu0
    %v4315 = vadd.f32 %v4275, %v4314
    %v4316 = vpop.f32.mrb[0].mxu0
    %4317 = vmatprep.mubr.bf16.mxu0 0
    %4318 = vmatmul.mubr.bf16.gmra.mrb[0].mxu0 %v4258
    %v4319 = vpop.f32.mrb[0].mxu0
    %v4320 = vadd.f32 %v4275, %v4319
    %v4321 = vpop.f32.mrb[0].mxu0
    %v4322 = vpop.f32.mrb[0].mxu0
    %v4323 = vadd.f32 %v4275, %v4322
    %v4324 = vpop.f32.mrb[0].mxu0
    %4325 = vmatprep.mubr.bf16.mxu0 0
    %4326 = vmatmul.mubr.bf16.gmra.mrb[0].mxu0 %v4259
    %v4327 = vpop.f32.mrb[0].mxu0
    %v4328 = vadd.f32 %v4275, %v4327
    %v4329 = vpop.f32.mrb[0].mxu0
    %v4330 = vpop.f32.mrb[0].mxu0
    %v4331 = vadd.f32 %v4275, %v4330
    %v4332 = vpop.f32.mrb[0].mxu0
    %4333 = vmatprep.mubr.bf16.mxu0 0
    %4334 = vmatmul.mubr.bf16.gmra.mrb[0].mxu0 %v4260
    %v4335 = vpop.f32.mrb[0].mxu0
    %v4336 = vadd.f32 %v4275, %v4335
    %v4337 = vpop.f32.mrb[0].mxu0
    %v4338 = vpop.f32.mrb[0].mxu0
    %v4339 = vadd.f32 %v4275, %v4338
    %v4340 = vpop.f32.mrb[0].mxu0
    %4341 = vmatprep.mubr.bf16.mxu0 0
    %4342 = vmatmul.mubr.bf16.gmra.mrb[0].mxu0 %v4261
    %v4343 = vpop.f32.mrb[0].mxu0
    %v4344 = vadd.f32 %v4275, %v4343
    %v4345 = vpop.f32.mrb[0].mxu0
    %v4346 = vpop.f32.mrb[0].mxu0
    %v4347 = vadd.f32 %v4275, %v4346
    %v4348 = vpop.f32.mrb[0].mxu0
    %4349 = vdwg.mxu0
    %4350 = vst [vmem:[%s8] sm:$0xff] %v4312
    %4351 = vst [vmem:[%s8 + $0x8] sm:$0xff] %v4315
    %4352 = vst [vmem:[%s8 + $0x10] sm:$0xff] %v4320
    %4353 = vst [vmem:[%s8 + $0x18] sm:$0xff] %v4323
    %4354 = vst [vmem:[%s8 + $0x20] sm:$0xff] %v4328
    %4355 = vst [vmem:[%s8 + $0x28] sm:$0xff] %v4331
    %4356 = vst [vmem:[%s8 + $0x30] sm:$0xff] %v4336
    %4357 = vst [vmem:[%s8 + $0x38] sm:$0xff] %v4339
    %4358 = vst [vmem:[%s8 + $0x40] sm:$0xff] %v4344
    %4359 = vst [vmem:[%s8 + $0x48] sm:$0xff] %v4347
    // Predicated region
    $region94: #{lstm_model_forward.1} parent=1 // pred_check
      _
    $region95: #{lstm_model_forward.1} parent=1 // pred_check_branch
      %4361 = sbr.rel (0) target = $region97
    $region96: #{lstm_model_forward.1} parent=1 // pred_region
      _
    $region97: #{lstm_model_forward.1} parent=1 // pred_fallthru
      _
    // Predicated region
    $region98: #{lstm_model_forward.1} parent=1 // pred_check
      _
    $region99: #{lstm_model_forward.1} parent=1 // pred_check_branch
      %4363 = sbr.rel (0) target = $region101
    $region100: #{lstm_model_forward.1} parent=1 // pred_region
      _
    $region101: #{lstm_model_forward.1} parent=1 // pred_fallthru
      _
    // Predicated region
    $region102: #{lstm_model_forward.1} parent=1 // pred_check
      _
    $region103: #{lstm_model_forward.1} parent=1 // pred_check_branch
      %4365 = sbr.rel (0) target = $region105
    $region104: #{lstm_model_forward.1} parent=1 // pred_region
      _
    $region105: #{lstm_model_forward.1} parent=1 // pred_fallthru
      _
    // Predicated region
    $region106: #{lstm_model_forward.1} parent=1 // pred_check
      _
    $region107: #{lstm_model_forward.1} parent=1 // pred_check_branch
      %4367 = sbr.rel (0) target = $region109
    $region108: #{lstm_model_forward.1} parent=1 // pred_region
      _
    $region109: #{lstm_model_forward.1} parent=1 // pred_fallthru
      _
    // Predicated region
    $region110: #{lstm_model_forward.1} parent=1 // pred_check
      _
    $region111: #{lstm_model_forward.1} parent=1 // pred_check_branch
      %4369 = sbr.rel (0) target = $region113
    $region112: #{lstm_model_forward.1} parent=1 // pred_region
      _
    $region113: #{lstm_model_forward.1} parent=1 // pred_fallthru
      _
    // Predicated region
    $region114: #{lstm_model_forward.1} parent=1 // pred_check
      _
    $region115: #{lstm_model_forward.1} parent=1 // pred_check_branch
      %4371 = sbr.rel (0) target = $region117
    $region116: #{lstm_model_forward.1} parent=1 // pred_region
      _
    $region117: #{lstm_model_forward.1} parent=1 // pred_fallthru
      _
    %4372 = vsyncpa [#allocation8], 1
  %4373 = vsyncmov [#allocation6]
  %s4374 = vpop.sfrf %4373
  %p4375 = scmp.eq.s32.totalorder %s4374, 0
  %p4376 = pneg %p4375
  %4378 = shalt.err (%p4376)
  %s4379 = scalar_lea.sflag [#allocation6], 1
  %4380 = vsyncmov %s4379
  %s4381 = vpop.sfrf %4380
  %p4382 = scmp.eq.s32.totalorder %s4381, 0
  %p4383 = pneg %p4382
  %4385 = shalt.err (%p4383)

</llo_original>
